<compile_context>
chip_gen: v7x
topology: tpu7x:2x2x1
jax: 0.10.0
libtpu: 0.0.40
codegen_flags: <defaults>
</compile_context>

<pallas_src>
import math
import functools

import jax
import jax.numpy as jnp
from jax.experimental import pallas as pl
from jax.experimental.pallas import tpu as pltpu

EPS = 1e-5                      # nn.LayerNorm / TransformerEncoderLayer default
BF16 = jnp.bfloat16
F32 = jnp.float32

# Name hedge for older jax versions (reference name is pltpu.CompilerParams).
_CompilerParams = getattr(pltpu, "CompilerParams", None) or getattr(
    pltpu, "TPUCompilerParams")


def _layernorm(x, g, b):
    mu = jnp.mean(x, axis=-1, keepdims=True)
    var = jnp.mean(jnp.square(x - mu), axis=-1, keepdims=True)
    return (x - mu) * jax.lax.rsqrt(var + EPS) * g + b


# ----------------------------------------------------------------------------
# Single fused kernel: embed -> num_layers x TransformerEncoderLayer -> head
# ----------------------------------------------------------------------------
def fused_transformer_kernel(
        x_ref, g_in_ref, b_in_ref, w1_ref, b1_ref, w2_ref, b2_ref,
        g_c_ref, b_c_ref, pe_ref,
        wqkv_ref, bqkv_ref, wo_ref, bo_ref, g1_ref, b1n_ref,
        wf1_ref, bf1_ref, wf2_ref, bf2_ref, g2_ref, b2n_ref,
        g_f_ref, b_f_ref, wf_ref, bf_ref, o_ref, *,
        num_layers, nhead, head_dim, d):
    nb, t, in_c = x_ref.shape
    rows = nb * t

    # ---- in_layer_norm -> NConvBlock (2 x pointwise conv + ReLU) -----------
    x = x_ref[...].reshape(rows, in_c)
    x = _layernorm(x, g_in_ref[...], b_in_ref[...])
    h = jnp.dot(x.astype(BF16), w1_ref[...],
                preferred_element_type=F32) + b1_ref[...]
    h = jnp.maximum(h, 0.0)
    h = jnp.dot(h.astype(BF16), w2_ref[...],
                preferred_element_type=F32) + b2_ref[...]
    h = jnp.maximum(h, 0.0)

    # ---- conv_layer_norm -> + positional encoding (broadcast over batch) ---
    h = _layernorm(h, g_c_ref[...], b_c_ref[...])
    h = (h.reshape(nb, t, d) + pe_ref[...][None, :, :]).reshape(rows, d)

    scale = 1.0 / math.sqrt(head_dim)
    for l in range(num_layers):            # layer weights stacked on axis 0
        # -------------------- multi-head self-attention ---------------------
        # Fused QKV: one wide (d, 3d) MXU matmul instead of 3*nhead slivers.
        qkv = jnp.dot(h.astype(BF16), wqkv_ref[l],
                      preferred_element_type=F32) + bqkv_ref[l]
        heads = []
        for hh in range(nhead):            # static unroll (nhead is tiny)
            lo = hh * head_dim
            q3 = qkv[:, lo:lo + head_dim].reshape(nb, t, head_dim)
            k3 = qkv[:, d + lo:d + lo + head_dim].reshape(nb, t, head_dim)
            v3 = qkv[:, 2 * d + lo:2 * d + lo + head_dim].reshape(nb, t, head_dim)
            s = jnp.einsum('nqe,nke->nqk', q3.astype(BF16), k3.astype(BF16),
                           preferred_element_type=F32) * scale
            s = s - jnp.max(s, axis=-1, keepdims=True)
            p = jnp.exp(s)
            # divide -> multiply by EUP approximate reciprocal (free slot)
            p = p * pl.reciprocal(jnp.sum(p, axis=-1, keepdims=True),
                                  approx=True)
            oh = jnp.einsum('nqk,nke->nqe', p.astype(BF16), v3.astype(BF16),
                            preferred_element_type=F32)
            heads.append(oh.reshape(rows, head_dim))
        cat = jnp.concatenate(heads, axis=-1)                     # (rows, d)
        # Single out-projection on the concatenated heads (K = d, not hd).
        attn = jnp.dot(cat.astype(BF16), wo_ref[l],
                       preferred_element_type=F32) + bo_ref[l]

        # -------- residual + norm1 + FFN + residual + norm2 (post-norm) -----
        y = _layernorm(h + attn, g1_ref[l], b1n_ref[l])
        ff = jnp.dot(y.astype(BF16), wf1_ref[l],
                     preferred_element_type=F32) + bf1_ref[l]
        ff = jnp.maximum(ff, 0.0)
        ff = jnp.dot(ff.astype(BF16), wf2_ref[l],
                     preferred_element_type=F32) + bf2_ref[l]
        h = _layernorm(y + ff, g2_ref[l], b2n_ref[l])

    # ---- transformer_layer_norm -> max_pool1d over time -> final 1x1 conv --
    h = _layernorm(h, g_f_ref[...], b_f_ref[...])
    m = jnp.max(h.reshape(nb, t, d), axis=1)                      # (nb, d)
    # lane-dense padded classifier slab (sliced to num_classes outside)
    o_ref[...] = jnp.dot(m.astype(BF16), wf_ref[...],
                         preferred_element_type=F32) + bf_ref[...]


# ----------------------------------------------------------------------------
# Parameters / positional encoding
# ----------------------------------------------------------------------------
def _positional_encoding(t, d):
    position = jnp.arange(t, dtype=jnp.float32)[:, None]
    div_term = jnp.exp(jnp.arange(0, d, 2, dtype=jnp.float32)
                       * (-math.log(10000.0) / d))
    pe = jnp.zeros((t, d), dtype=jnp.float32)
    pe = pe.at[:, 0::2].set(jnp.sin(position * div_term))
    pe = pe.at[:, 1::2].set(jnp.cos(position * div_term))
    return pe


def init_params(key, *, num_classes, in_c, d, dff, nhead, num_layers,
                lane_pad=128):
    it = iter(jax.random.split(key, 256))

    def nrm(shape, fan_in):
        return jax.random.normal(next(it), shape, dtype=jnp.float32) / math.sqrt(fan_in)

    def vec(shape, scale=0.05):
        return scale * jax.random.normal(next(it), shape, dtype=jnp.float32)

    # classifier, zero-padded to a lane-dense multiple-of-128 slab
    c_pad = ((num_classes + lane_pad - 1) // lane_pad) * lane_pad
    wf = nrm((d, num_classes), d)
    bf = vec((1, num_classes))
    wf_pad = jnp.zeros((d, c_pad), jnp.float32).at[:, :num_classes].set(wf).astype(BF16)
    bf_pad = jnp.zeros((1, c_pad), jnp.float32).at[:, :num_classes].set(bf)

    params = {
        'g_in': 1.0 + vec((1, in_c)), 'b_in': vec((1, in_c)),
        'w1': nrm((in_c, d), in_c).astype(BF16), 'b1': vec((1, d)),
        'w2': nrm((d, d), d).astype(BF16), 'b2': vec((1, d)),
        'g_c': 1.0 + vec((1, d)), 'b_c': vec((1, d)),
        'g_f': 1.0 + vec((1, d)), 'b_f': vec((1, d)),
        'wf_pad': wf_pad, 'bf_pad': bf_pad,
    }

    # stacked encoder-layer weights, "x @ W" orientation (PyTorch W^T);
    # QKV packed as concat([Wq, Wk, Wv], axis=1), heads contiguous inside each.
    def stack(fn):
        return jnp.stack([fn() for _ in range(num_layers)], axis=0)

    params.update(
        wqkv=stack(lambda: nrm((d, 3 * d), d)).astype(BF16),
        bqkv=stack(lambda: vec((1, 3 * d))),
        wo=stack(lambda: nrm((d, d), d)).astype(BF16),
        bo=stack(lambda: vec((1, d))),
        g1=stack(lambda: 1.0 + vec((1, d))),
        b1n=stack(lambda: vec((1, d))),
        wf1=stack(lambda: nrm((d, dff), d)).astype(BF16),
        bf1=stack(lambda: vec((1, dff))),
        wf2=stack(lambda: nrm((dff, d), dff)).astype(BF16),
        bf2=stack(lambda: vec((1, d))),
        g2=stack(lambda: 1.0 + vec((1, d))),
        b2n=stack(lambda: vec((1, d))),
    )
    return params


# ----------------------------------------------------------------------------
# Wrapper: single pallas_call, batch-blocked grid
# ----------------------------------------------------------------------------
def transformer_forward(x, params, pe, *, in_c, d, nhead, num_classes):
    N, time_channel = x.shape
    t = time_channel // in_c
    x3 = x.reshape(N, t, in_c)                     # x.view(N, -1, in_c)
    num_layers = params['wqkv'].shape[0]
    head_dim = d // nhead
    c_pad = params['wf_pad'].shape[1]

    # Batch block: full batch when small (keeps the output's 2nd-to-last dim a
    # full extent, satisfying the (8,128) rule); 8-row blocks when divisible.
    nb = 8 if (N > 8 and N % 8 == 0) else N
    grid = (N // nb,)

    inputs = (
        x3,
        params['g_in'], params['b_in'], params['w1'], params['b1'],
        params['w2'], params['b2'], params['g_c'], params['b_c'], pe,
        params['wqkv'], params['bqkv'], params['wo'], params['bo'],
        params['g1'], params['b1n'], params['wf1'], params['bf1'],
        params['wf2'], params['bf2'], params['g2'], params['b2n'],
        params['g_f'], params['b_f'], params['wf_pad'], params['bf_pad'],
    )

    def _rep_spec(a):                 # whole array, constant index map
        nd = a.ndim
        return pl.BlockSpec(a.shape, lambda b, _n=nd: (0,) * _n)

    in_specs = [pl.BlockSpec((nb, t, in_c), lambda b: (b, 0, 0))]
    in_specs += [_rep_spec(a) for a in inputs[1:]]

    kernel = functools.partial(fused_transformer_kernel,
                               num_layers=num_layers, nhead=nhead,
                               head_dim=head_dim, d=d)

    out_pad = pl.pallas_call(
        kernel,
        out_shape=jax.ShapeDtypeStruct((N, c_pad), jnp.float32),
        grid=grid,
        in_specs=in_specs,
        out_specs=pl.BlockSpec((nb, c_pad), lambda b: (b, 0)),
        compiler_params=_CompilerParams(
            dimension_semantics=("parallel",),          # megacore on v7x
            vmem_limit_bytes=32 * 1024 * 1024),         # fits v5e/v6e/v7x
    )(*inputs)
    return out_pad[:, :num_classes]


# ----------------------------------------------------------------------------
# Pure-JAX reference (same math and same bf16 matmul casts, no Pallas)
# ----------------------------------------------------------------------------
def reference_forward(x, params, pe, *, in_c, d, nhead, num_classes):
    N, tc = x.shape
    t = tc // in_c
    hd = d // nhead
    num_layers = params['wqkv'].shape[0]

    def mm(a, w):
        return jnp.dot(a.astype(BF16), w, preferred_element_type=F32)

    h = x.reshape(N * t, in_c)
    h = _layernorm(h, params['g_in'], params['b_in'])
    h = jnp.maximum(mm(h, params['w1']) + params['b1'], 0.0)
    h = jnp.maximum(mm(h, params['w2']) + params['b2'], 0.0)
    h = _layernorm(h, params['g_c'], params['b_c'])
    h = (h.reshape(N, t, d) + pe[None]).reshape(N * t, d)

    scale = 1.0 / math.sqrt(hd)
    for l in range(num_layers):
        qkv = mm(h, params['wqkv'][l]) + params['bqkv'][l]
        heads = []
        for hh in range(nhead):
            lo = hh * hd
            q3 = qkv[:, lo:lo + hd].reshape(N, t, hd)
            k3 = qkv[:, d + lo:d + lo + hd].reshape(N, t, hd)
            v3 = qkv[:, 2 * d + lo:2 * d + lo + hd].reshape(N, t, hd)
            s = jnp.einsum('nqe,nke->nqk', q3.astype(BF16), k3.astype(BF16),
                           preferred_element_type=F32) * scale
            p = jax.nn.softmax(s, axis=-1)
            oh = jnp.einsum('nqk,nke->nqe', p.astype(BF16), v3.astype(BF16),
                            preferred_element_type=F32)
            heads.append(oh.reshape(N * t, hd))
        attn = mm(jnp.concatenate(heads, axis=-1), params['wo'][l]) + params['bo'][l]
        y = _layernorm(h + attn, params['g1'][l], params['b1n'][l])
        ff = jnp.maximum(mm(y, params['wf1'][l]) + params['bf1'][l], 0.0)
        ff = mm(ff, params['wf2'][l]) + params['bf2'][l]
        h = _layernorm(y + ff, params['g2'][l], params['b2n'][l])

    h = _layernorm(h, params['g_f'], params['b_f'])
    m = jnp.max(h.reshape(N, t, d), axis=1)
    out = mm(m, params['wf_pad']) + params['bf_pad']
    return out[:, :num_classes]


if __name__ == "__main__":
    # Module hyper-params (small, consistent with the PyTorch __init__)
    num_classes = 5
    in_channels = 4
    dim_feature = 32
    num_layers = 2
    dim_feedforward = 64
    nhead = 2
    N, t = 2, 8                       # batch, time steps

    key = jax.random.PRNGKey(0)
    pkey, xkey = jax.random.split(key)
    params = init_params(pkey, num_classes=num_classes, in_c=in_channels,
                         d=dim_feature, dff=dim_feedforward, nhead=nhead,
                         num_layers=num_layers)
    x = jax.random.normal(xkey, (N, t * in_channels), dtype=jnp.float32)
    pe = _positional_encoding(t, dim_feature)

    out = transformer_forward(x, params, pe, in_c=in_channels,
                              d=dim_feature, nhead=nhead,
                              num_classes=num_classes)
    out = jax.block_until_ready(out)
    assert out.shape == (N, num_classes)

    ref = reference_forward(x, params, pe, in_c=in_channels,
                            d=dim_feature, nhead=nhead,
                            num_classes=num_classes)
    # bf16 matmuls + approximate softmax reciprocal -> slightly looser check
    if not bool(jnp.allclose(out, ref, atol=2e-2, rtol=2e-2)):
        raise AssertionError("Pallas output does not match JAX reference")

    print("KERNEL_OK")
</pallas_src>

<mosaic_0001>
module attributes {stable_mosaic.version = 11 : i64} {
  func.func @fused_transformer_kernel(%arg0: i32, %arg1: memref<2x8x4xf32, #tpu.memory_space<vmem>>, %arg2: memref<1x4xf32, #tpu.memory_space<vmem>>, %arg3: memref<1x4xf32, #tpu.memory_space<vmem>>, %arg4: memref<4x32xbf16, #tpu.memory_space<vmem>>, %arg5: memref<1x32xf32, #tpu.memory_space<vmem>>, %arg6: memref<32x32xbf16, #tpu.memory_space<vmem>>, %arg7: memref<1x32xf32, #tpu.memory_space<vmem>>, %arg8: memref<1x32xf32, #tpu.memory_space<vmem>>, %arg9: memref<1x32xf32, #tpu.memory_space<vmem>>, %arg10: memref<8x32xf32, #tpu.memory_space<vmem>>, %arg11: memref<2x32x96xbf16, #tpu.memory_space<vmem>>, %arg12: memref<2x1x96xf32, #tpu.memory_space<vmem>>, %arg13: memref<2x32x32xbf16, #tpu.memory_space<vmem>>, %arg14: memref<2x1x32xf32, #tpu.memory_space<vmem>>, %arg15: memref<2x1x32xf32, #tpu.memory_space<vmem>>, %arg16: memref<2x1x32xf32, #tpu.memory_space<vmem>>, %arg17: memref<2x32x64xbf16, #tpu.memory_space<vmem>>, %arg18: memref<2x1x64xf32, #tpu.memory_space<vmem>>, %arg19: memref<2x64x32xbf16, #tpu.memory_space<vmem>>, %arg20: memref<2x1x32xf32, #tpu.memory_space<vmem>>, %arg21: memref<2x1x32xf32, #tpu.memory_space<vmem>>, %arg22: memref<2x1x32xf32, #tpu.memory_space<vmem>>, %arg23: memref<1x32xf32, #tpu.memory_space<vmem>>, %arg24: memref<1x32xf32, #tpu.memory_space<vmem>>, %arg25: memref<32x128xbf16, #tpu.memory_space<vmem>>, %arg26: memref<1x128xf32, #tpu.memory_space<vmem>>, %arg27: memref<2x128xf32, #tpu.memory_space<vmem>>) attributes {dimension_semantics = [#tpu.dimension_semantics<parallel>], iteration_bounds = array<i64: 1>, scalar_prefetch = 0 : i64, scratch_operands = 0 : i64, tpu.core_type = #tpu.core_type<tc>, window_params = [{transform_indices = @transform_0, window_bounds = array<i64: 2, 8, 4>}, {pipeline_mode = #tpu.pipeline_mode<synchronous>, transform_indices = @transform_1, window_bounds = array<i64: 1, 4>}, {pipeline_mode = #tpu.pipeline_mode<synchronous>, transform_indices = @transform_2, window_bounds = array<i64: 1, 4>}, {pipeline_mode = #tpu.pipeline_mode<synchronous>, transform_indices = @transform_3, window_bounds = array<i64: 4, 32>}, {pipeline_mode = #tpu.pipeline_mode<synchronous>, transform_indices = @transform_4, window_bounds = array<i64: 1, 32>}, {pipeline_mode = #tpu.pipeline_mode<synchronous>, transform_indices = @transform_5, window_bounds = array<i64: 32, 32>}, {pipeline_mode = #tpu.pipeline_mode<synchronous>, transform_indices = @transform_6, window_bounds = array<i64: 1, 32>}, {pipeline_mode = #tpu.pipeline_mode<synchronous>, transform_indices = @transform_7, window_bounds = array<i64: 1, 32>}, {pipeline_mode = #tpu.pipeline_mode<synchronous>, transform_indices = @transform_8, window_bounds = array<i64: 1, 32>}, {pipeline_mode = #tpu.pipeline_mode<synchronous>, transform_indices = @transform_9, window_bounds = array<i64: 8, 32>}, {pipeline_mode = #tpu.pipeline_mode<synchronous>, transform_indices = @transform_10, window_bounds = array<i64: 2, 32, 96>}, {pipeline_mode = #tpu.pipeline_mode<synchronous>, transform_indices = @transform_11, window_bounds = array<i64: 2, 1, 96>}, {pipeline_mode = #tpu.pipeline_mode<synchronous>, transform_indices = @transform_12, window_bounds = array<i64: 2, 32, 32>}, {pipeline_mode = #tpu.pipeline_mode<synchronous>, transform_indices = @transform_13, window_bounds = array<i64: 2, 1, 32>}, {pipeline_mode = #tpu.pipeline_mode<synchronous>, transform_indices = @transform_14, window_bounds = array<i64: 2, 1, 32>}, {pipeline_mode = #tpu.pipeline_mode<synchronous>, transform_indices = @transform_15, window_bounds = array<i64: 2, 1, 32>}, {pipeline_mode = #tpu.pipeline_mode<synchronous>, transform_indices = @transform_16, window_bounds = array<i64: 2, 32, 64>}, {pipeline_mode = #tpu.pipeline_mode<synchronous>, transform_indices = @transform_17, window_bounds = array<i64: 2, 1, 64>}, {pipeline_mode = #tpu.pipeline_mode<synchronous>, transform_indices = @transform_18, window_bounds = array<i64: 2, 64, 32>}, {pipeline_mode = #tpu.pipeline_mode<synchronous>, transform_indices = @transform_19, window_bounds = array<i64: 2, 1, 32>}, {pipeline_mode = #tpu.pipeline_mode<synchronous>, transform_indices = @transform_20, window_bounds = array<i64: 2, 1, 32>}, {pipeline_mode = #tpu.pipeline_mode<synchronous>, transform_indices = @transform_21, window_bounds = array<i64: 2, 1, 32>}, {pipeline_mode = #tpu.pipeline_mode<synchronous>, transform_indices = @transform_22, window_bounds = array<i64: 1, 32>}, {pipeline_mode = #tpu.pipeline_mode<synchronous>, transform_indices = @transform_23, window_bounds = array<i64: 1, 32>}, {pipeline_mode = #tpu.pipeline_mode<synchronous>, transform_indices = @transform_24, window_bounds = array<i64: 32, 128>}, {pipeline_mode = #tpu.pipeline_mode<synchronous>, transform_indices = @transform_25, window_bounds = array<i64: 1, 128>}, {transform_indices = @transform_26, window_bounds = array<i64: 2, 128>}]} {
    %c0 = arith.constant 0 : index
    %c0_0 = arith.constant 0 : index
    %c0_1 = arith.constant 0 : index
    %0 = vector.load %arg1[%c0, %c0_0, %c0_1] : memref<2x8x4xf32, #tpu.memory_space<vmem>>, vector<2x8x4xf32>
    %1 = vector.shape_cast %0 : vector<2x8x4xf32> to vector<16x4xf32>
    %c0_2 = arith.constant 0 : index
    %c0_3 = arith.constant 0 : index
    %2 = vector.load %arg2[%c0_2, %c0_3] : memref<1x4xf32, #tpu.memory_space<vmem>>, vector<1x4xf32>
    %c0_4 = arith.constant 0 : index
    %c0_5 = arith.constant 0 : index
    %3 = vector.load %arg3[%c0_4, %c0_5] : memref<1x4xf32, #tpu.memory_space<vmem>>, vector<1x4xf32>
    %cst = arith.constant dense<0.000000e+00> : vector<16xf32>
    %4 = vector.multi_reduction <add>, %1, %cst [1] : vector<16x4xf32> to vector<16xf32>
    %5 = vector.shape_cast %4 : vector<16xf32> to vector<16x1xf32>
    %cst_6 = arith.constant 4.000000e+00 : f32
    %6 = vector.broadcast %cst_6 : f32 to vector<16x1xf32>
    %7 = arith.divf %5, %6 : vector<16x1xf32>
    %8 = vector.broadcast %7 : vector<16x1xf32> to vector<16x4xf32>
    %9 = arith.subf %1, %8 : vector<16x4xf32>
    %10 = arith.mulf %9, %9 : vector<16x4xf32>
    %cst_7 = arith.constant dense<0.000000e+00> : vector<16xf32>
    %11 = vector.multi_reduction <add>, %10, %cst_7 [1] : vector<16x4xf32> to vector<16xf32>
    %12 = vector.shape_cast %11 : vector<16xf32> to vector<16x1xf32>
    %cst_8 = arith.constant 4.000000e+00 : f32
    %13 = vector.broadcast %cst_8 : f32 to vector<16x1xf32>
    %14 = arith.divf %12, %13 : vector<16x1xf32>
    %15 = vector.broadcast %7 : vector<16x1xf32> to vector<16x4xf32>
    %16 = arith.subf %1, %15 : vector<16x4xf32>
    %cst_9 = arith.constant 9.99999974E-6 : f32
    %17 = vector.broadcast %cst_9 : f32 to vector<16x1xf32>
    %18 = arith.addf %14, %17 : vector<16x1xf32>
    %19 = math.rsqrt %18 : vector<16x1xf32>
    %20 = vector.broadcast %19 : vector<16x1xf32> to vector<16x4xf32>
    %21 = arith.mulf %16, %20 : vector<16x4xf32>
    %22 = vector.broadcast %2 : vector<1x4xf32> to vector<16x4xf32>
    %23 = arith.mulf %21, %22 : vector<16x4xf32>
    %24 = vector.broadcast %3 : vector<1x4xf32> to vector<16x4xf32>
    %25 = arith.addf %23, %24 : vector<16x4xf32>
    %26 = arith.truncf %25 : vector<16x4xf32> to vector<16x4xbf16>
    %c0_10 = arith.constant 0 : index
    %c0_11 = arith.constant 0 : index
    %27 = vector.load %arg4[%c0_10, %c0_11] : memref<4x32xbf16, #tpu.memory_space<vmem>>, vector<4x32xbf16>
    %cst_12 = arith.constant dense<0.000000e+00> : vector<16x32xf32>
    %28 = tpu.matmul %26, %27, %cst_12 {dimension_numbers = #tpu.dot_dimension_numbers<[1], [0], [0], [1], [0, 0, 1, 1], [], []>} : vector<16x4xbf16>, vector<4x32xbf16>, vector<16x32xf32> -> vector<16x32xf32>
    %c0_13 = arith.constant 0 : index
    %c0_14 = arith.constant 0 : index
    %29 = vector.load %arg5[%c0_13, %c0_14] : memref<1x32xf32, #tpu.memory_space<vmem>>, vector<1x32xf32>
    %30 = vector.broadcast %29 : vector<1x32xf32> to vector<16x32xf32>
    %31 = arith.addf %28, %30 : vector<16x32xf32>
    %cst_15 = arith.constant 0.000000e+00 : f32
    %32 = vector.broadcast %cst_15 : f32 to vector<16x32xf32>
    %33 = arith.maximumf %31, %32 : vector<16x32xf32>
    %34 = arith.truncf %33 : vector<16x32xf32> to vector<16x32xbf16>
    %c0_16 = arith.constant 0 : index
    %c0_17 = arith.constant 0 : index
    %35 = vector.load %arg6[%c0_16, %c0_17] : memref<32x32xbf16, #tpu.memory_space<vmem>>, vector<32x32xbf16>
    %cst_18 = arith.constant dense<0.000000e+00> : vector<16x32xf32>
    %36 = tpu.matmul %34, %35, %cst_18 {dimension_numbers = #tpu.dot_dimension_numbers<[1], [0], [0], [1], [0, 0, 1, 1], [], []>} : vector<16x32xbf16>, vector<32x32xbf16>, vector<16x32xf32> -> vector<16x32xf32>
    %c0_19 = arith.constant 0 : index
    %c0_20 = arith.constant 0 : index
    %37 = vector.load %arg7[%c0_19, %c0_20] : memref<1x32xf32, #tpu.memory_space<vmem>>, vector<1x32xf32>
    %38 = vector.broadcast %37 : vector<1x32xf32> to vector<16x32xf32>
    %39 = arith.addf %36, %38 : vector<16x32xf32>
    %cst_21 = arith.constant 0.000000e+00 : f32
    %40 = vector.broadcast %cst_21 : f32 to vector<16x32xf32>
    %41 = arith.maximumf %39, %40 : vector<16x32xf32>
    %c0_22 = arith.constant 0 : index
    %c0_23 = arith.constant 0 : index
    %42 = vector.load %arg8[%c0_22, %c0_23] : memref<1x32xf32, #tpu.memory_space<vmem>>, vector<1x32xf32>
    %c0_24 = arith.constant 0 : index
    %c0_25 = arith.constant 0 : index
    %43 = vector.load %arg9[%c0_24, %c0_25] : memref<1x32xf32, #tpu.memory_space<vmem>>, vector<1x32xf32>
    %cst_26 = arith.constant dense<0.000000e+00> : vector<16xf32>
    %44 = vector.multi_reduction <add>, %41, %cst_26 [1] : vector<16x32xf32> to vector<16xf32>
    %45 = vector.shape_cast %44 : vector<16xf32> to vector<16x1xf32>
    %cst_27 = arith.constant 3.200000e+01 : f32
    %46 = vector.broadcast %cst_27 : f32 to vector<16x1xf32>
    %47 = arith.divf %45, %46 : vector<16x1xf32>
    %48 = vector.broadcast %47 : vector<16x1xf32> to vector<16x32xf32>
    %49 = arith.subf %41, %48 : vector<16x32xf32>
    %50 = arith.mulf %49, %49 : vector<16x32xf32>
    %cst_28 = arith.constant dense<0.000000e+00> : vector<16xf32>
    %51 = vector.multi_reduction <add>, %50, %cst_28 [1] : vector<16x32xf32> to vector<16xf32>
    %52 = vector.shape_cast %51 : vector<16xf32> to vector<16x1xf32>
    %cst_29 = arith.constant 3.200000e+01 : f32
    %53 = vector.broadcast %cst_29 : f32 to vector<16x1xf32>
    %54 = arith.divf %52, %53 : vector<16x1xf32>
    %55 = vector.broadcast %47 : vector<16x1xf32> to vector<16x32xf32>
    %56 = arith.subf %41, %55 : vector<16x32xf32>
    %cst_30 = arith.constant 9.99999974E-6 : f32
    %57 = vector.broadcast %cst_30 : f32 to vector<16x1xf32>
    %58 = arith.addf %54, %57 : vector<16x1xf32>
    %59 = math.rsqrt %58 : vector<16x1xf32>
    %60 = vector.broadcast %59 : vector<16x1xf32> to vector<16x32xf32>
    %61 = arith.mulf %56, %60 : vector<16x32xf32>
    %62 = vector.broadcast %42 : vector<1x32xf32> to vector<16x32xf32>
    %63 = arith.mulf %61, %62 : vector<16x32xf32>
    %64 = vector.broadcast %43 : vector<1x32xf32> to vector<16x32xf32>
    %65 = arith.addf %63, %64 : vector<16x32xf32>
    %66 = vector.shape_cast %65 : vector<16x32xf32> to vector<2x8x32xf32>
    %c0_31 = arith.constant 0 : index
    %c0_32 = arith.constant 0 : index
    %67 = vector.load %arg10[%c0_31, %c0_32] : memref<8x32xf32, #tpu.memory_space<vmem>>, vector<8x32xf32>
    %68 = vector.shape_cast %67 : vector<8x32xf32> to vector<1x8x32xf32>
    %69 = vector.broadcast %68 : vector<1x8x32xf32> to vector<2x8x32xf32>
    %70 = arith.addf %66, %69 : vector<2x8x32xf32>
    %71 = vector.shape_cast %70 : vector<2x8x32xf32> to vector<16x32xf32>
    %72 = arith.truncf %71 : vector<16x32xf32> to vector<16x32xbf16>
    %c0_33 = arith.constant 0 : index
    %c0_34 = arith.constant 0 : index
    %c0_35 = arith.constant 0 : index
    %73 = vector.load %arg11[%c0_33, %c0_34, %c0_35] : memref<2x32x96xbf16, #tpu.memory_space<vmem>>, vector<1x32x96xbf16>
    %74 = vector.shape_cast %73 : vector<1x32x96xbf16> to vector<32x96xbf16>
    %cst_36 = arith.constant dense<0.000000e+00> : vector<16x96xf32>
    %75 = tpu.matmul %72, %74, %cst_36 {dimension_numbers = #tpu.dot_dimension_numbers<[1], [0], [0], [1], [0, 0, 1, 1], [], []>} : vector<16x32xbf16>, vector<32x96xbf16>, vector<16x96xf32> -> vector<16x96xf32>
    %c0_37 = arith.constant 0 : index
    %c0_38 = arith.constant 0 : index
    %c0_39 = arith.constant 0 : index
    %76 = vector.load %arg12[%c0_37, %c0_38, %c0_39] : memref<2x1x96xf32, #tpu.memory_space<vmem>>, vector<1x1x96xf32>
    %77 = vector.shape_cast %76 : vector<1x1x96xf32> to vector<1x96xf32>
    %78 = vector.broadcast %77 : vector<1x96xf32> to vector<16x96xf32>
    %79 = arith.addf %75, %78 : vector<16x96xf32>
    %80 = vector.extract_strided_slice %79 {offsets = [0, 0], sizes = [16, 16], strides = [1, 1]} : vector<16x96xf32> to vector<16x16xf32>
    %81 = vector.shape_cast %80 : vector<16x16xf32> to vector<2x8x16xf32>
    %82 = vector.extract_strided_slice %79 {offsets = [0, 32], sizes = [16, 16], strides = [1, 1]} : vector<16x96xf32> to vector<16x16xf32>
    %83 = vector.shape_cast %82 : vector<16x16xf32> to vector<2x8x16xf32>
    %84 = vector.extract_strided_slice %79 {offsets = [0, 64], sizes = [16, 16], strides = [1, 1]} : vector<16x96xf32> to vector<16x16xf32>
    %85 = vector.shape_cast %84 : vector<16x16xf32> to vector<2x8x16xf32>
    %86 = arith.truncf %81 : vector<2x8x16xf32> to vector<2x8x16xbf16>
    %87 = arith.truncf %83 : vector<2x8x16xf32> to vector<2x8x16xbf16>
    "tpu.trace_start"() <{level = 10 : i32, message = "nqe,nke->nqk"}> : () -> ()
    %cst_40 = arith.constant dense<0.000000e+00> : vector<2x8x8xf32>
    %88 = tpu.matmul %86, %87, %cst_40 {dimension_numbers = #tpu.dot_dimension_numbers<[2], [2], [1], [1], [0, 0, 0, 1, 1, 1], [0], [0]>} : vector<2x8x16xbf16>, vector<2x8x16xbf16>, vector<2x8x8xf32> -> vector<2x8x8xf32>
    "tpu.trace_stop"() : () -> ()
    %cst_41 = arith.constant 2.500000e-01 : f32
    %89 = vector.broadcast %cst_41 : f32 to vector<2x8x8xf32>
    %90 = arith.mulf %88, %89 : vector<2x8x8xf32>
    %cst_42 = arith.constant dense<0xFF800000> : vector<2x8xf32>
    %91 = vector.multi_reduction <maximumf>, %90, %cst_42 [2] : vector<2x8x8xf32> to vector<2x8xf32>
    %92 = vector.shape_cast %91 : vector<2x8xf32> to vector<2x8x1xf32>
    %93 = vector.broadcast %92 : vector<2x8x1xf32> to vector<2x8x8xf32>
    %94 = arith.subf %90, %93 : vector<2x8x8xf32>
    %95 = math.exp %94 : vector<2x8x8xf32>
    %cst_43 = arith.constant dense<0.000000e+00> : vector<2x8xf32>
    %96 = vector.multi_reduction <add>, %95, %cst_43 [2] : vector<2x8x8xf32> to vector<2x8xf32>
    %97 = vector.shape_cast %96 : vector<2x8xf32> to vector<2x8x1xf32>
    %98 = tpu.reciprocal %97 {approx = true} : vector<2x8x1xf32> -> vector<2x8x1xf32>
    %99 = vector.broadcast %98 : vector<2x8x1xf32> to vector<2x8x8xf32>
    %100 = arith.mulf %95, %99 : vector<2x8x8xf32>
    %101 = arith.truncf %100 : vector<2x8x8xf32> to vector<2x8x8xbf16>
    %102 = arith.truncf %85 : vector<2x8x16xf32> to vector<2x8x16xbf16>
    "tpu.trace_start"() <{level = 10 : i32, message = "nqk,nke->nqe"}> : () -> ()
    %cst_44 = arith.constant dense<0.000000e+00> : vector<2x8x16xf32>
    %103 = tpu.matmul %101, %102, %cst_44 {dimension_numbers = #tpu.dot_dimension_numbers<[2], [1], [1], [2], [0, 0, 0, 1, 1, 2], [0], [0]>} : vector<2x8x8xbf16>, vector<2x8x16xbf16>, vector<2x8x16xf32> -> vector<2x8x16xf32>
    "tpu.trace_stop"() : () -> ()
    %104 = vector.shape_cast %103 : vector<2x8x16xf32> to vector<16x16xf32>
    %105 = vector.extract_strided_slice %79 {offsets = [0, 16], sizes = [16, 16], strides = [1, 1]} : vector<16x96xf32> to vector<16x16xf32>
    %106 = vector.shape_cast %105 : vector<16x16xf32> to vector<2x8x16xf32>
    %107 = vector.extract_strided_slice %79 {offsets = [0, 48], sizes = [16, 16], strides = [1, 1]} : vector<16x96xf32> to vector<16x16xf32>
    %108 = vector.shape_cast %107 : vector<16x16xf32> to vector<2x8x16xf32>
    %109 = vector.extract_strided_slice %79 {offsets = [0, 80], sizes = [16, 16], strides = [1, 1]} : vector<16x96xf32> to vector<16x16xf32>
    %110 = vector.shape_cast %109 : vector<16x16xf32> to vector<2x8x16xf32>
    %111 = arith.truncf %106 : vector<2x8x16xf32> to vector<2x8x16xbf16>
    %112 = arith.truncf %108 : vector<2x8x16xf32> to vector<2x8x16xbf16>
    "tpu.trace_start"() <{level = 10 : i32, message = "nqe,nke->nqk"}> : () -> ()
    %cst_45 = arith.constant dense<0.000000e+00> : vector<2x8x8xf32>
    %113 = tpu.matmul %111, %112, %cst_45 {dimension_numbers = #tpu.dot_dimension_numbers<[2], [2], [1], [1], [0, 0, 0, 1, 1, 1], [0], [0]>} : vector<2x8x16xbf16>, vector<2x8x16xbf16>, vector<2x8x8xf32> -> vector<2x8x8xf32>
    "tpu.trace_stop"() : () -> ()
    %cst_46 = arith.constant 2.500000e-01 : f32
    %114 = vector.broadcast %cst_46 : f32 to vector<2x8x8xf32>
    %115 = arith.mulf %113, %114 : vector<2x8x8xf32>
    %cst_47 = arith.constant dense<0xFF800000> : vector<2x8xf32>
    %116 = vector.multi_reduction <maximumf>, %115, %cst_47 [2] : vector<2x8x8xf32> to vector<2x8xf32>
    %117 = vector.shape_cast %116 : vector<2x8xf32> to vector<2x8x1xf32>
    %118 = vector.broadcast %117 : vector<2x8x1xf32> to vector<2x8x8xf32>
    %119 = arith.subf %115, %118 : vector<2x8x8xf32>
    %120 = math.exp %119 : vector<2x8x8xf32>
    %cst_48 = arith.constant dense<0.000000e+00> : vector<2x8xf32>
    %121 = vector.multi_reduction <add>, %120, %cst_48 [2] : vector<2x8x8xf32> to vector<2x8xf32>
    %122 = vector.shape_cast %121 : vector<2x8xf32> to vector<2x8x1xf32>
    %123 = tpu.reciprocal %122 {approx = true} : vector<2x8x1xf32> -> vector<2x8x1xf32>
    %124 = vector.broadcast %123 : vector<2x8x1xf32> to vector<2x8x8xf32>
    %125 = arith.mulf %120, %124 : vector<2x8x8xf32>
    %126 = arith.truncf %125 : vector<2x8x8xf32> to vector<2x8x8xbf16>
    %127 = arith.truncf %110 : vector<2x8x16xf32> to vector<2x8x16xbf16>
    "tpu.trace_start"() <{level = 10 : i32, message = "nqk,nke->nqe"}> : () -> ()
    %cst_49 = arith.constant dense<0.000000e+00> : vector<2x8x16xf32>
    %128 = tpu.matmul %126, %127, %cst_49 {dimension_numbers = #tpu.dot_dimension_numbers<[2], [1], [1], [2], [0, 0, 0, 1, 1, 2], [0], [0]>} : vector<2x8x8xbf16>, vector<2x8x16xbf16>, vector<2x8x16xf32> -> vector<2x8x16xf32>
    "tpu.trace_stop"() : () -> ()
    %129 = vector.shape_cast %128 : vector<2x8x16xf32> to vector<16x16xf32>
    %130 = tpu.concatenate %104, %129 in 1 : vector<16x16xf32>, vector<16x16xf32> -> vector<16x32xf32>
    %131 = arith.truncf %130 : vector<16x32xf32> to vector<16x32xbf16>
    %c0_50 = arith.constant 0 : index
    %c0_51 = arith.constant 0 : index
    %c0_52 = arith.constant 0 : index
    %132 = vector.load %arg13[%c0_50, %c0_51, %c0_52] : memref<2x32x32xbf16, #tpu.memory_space<vmem>>, vector<1x32x32xbf16>
    %133 = vector.shape_cast %132 : vector<1x32x32xbf16> to vector<32x32xbf16>
    %cst_53 = arith.constant dense<0.000000e+00> : vector<16x32xf32>
    %134 = tpu.matmul %131, %133, %cst_53 {dimension_numbers = #tpu.dot_dimension_numbers<[1], [0], [0], [1], [0, 0, 1, 1], [], []>} : vector<16x32xbf16>, vector<32x32xbf16>, vector<16x32xf32> -> vector<16x32xf32>
    %c0_54 = arith.constant 0 : index
    %c0_55 = arith.constant 0 : index
    %c0_56 = arith.constant 0 : index
    %135 = vector.load %arg14[%c0_54, %c0_55, %c0_56] : memref<2x1x32xf32, #tpu.memory_space<vmem>>, vector<1x1x32xf32>
    %136 = vector.shape_cast %135 : vector<1x1x32xf32> to vector<1x32xf32>
    %137 = vector.broadcast %136 : vector<1x32xf32> to vector<16x32xf32>
    %138 = arith.addf %134, %137 : vector<16x32xf32>
    %139 = arith.addf %71, %138 : vector<16x32xf32>
    %c0_57 = arith.constant 0 : index
    %c0_58 = arith.constant 0 : index
    %c0_59 = arith.constant 0 : index
    %140 = vector.load %arg15[%c0_57, %c0_58, %c0_59] : memref<2x1x32xf32, #tpu.memory_space<vmem>>, vector<1x1x32xf32>
    %141 = vector.shape_cast %140 : vector<1x1x32xf32> to vector<1x32xf32>
    %c0_60 = arith.constant 0 : index
    %c0_61 = arith.constant 0 : index
    %c0_62 = arith.constant 0 : index
    %142 = vector.load %arg16[%c0_60, %c0_61, %c0_62] : memref<2x1x32xf32, #tpu.memory_space<vmem>>, vector<1x1x32xf32>
    %143 = vector.shape_cast %142 : vector<1x1x32xf32> to vector<1x32xf32>
    %cst_63 = arith.constant dense<0.000000e+00> : vector<16xf32>
    %144 = vector.multi_reduction <add>, %139, %cst_63 [1] : vector<16x32xf32> to vector<16xf32>
    %145 = vector.shape_cast %144 : vector<16xf32> to vector<16x1xf32>
    %cst_64 = arith.constant 3.200000e+01 : f32
    %146 = vector.broadcast %cst_64 : f32 to vector<16x1xf32>
    %147 = arith.divf %145, %146 : vector<16x1xf32>
    %148 = vector.broadcast %147 : vector<16x1xf32> to vector<16x32xf32>
    %149 = arith.subf %139, %148 : vector<16x32xf32>
    %150 = arith.mulf %149, %149 : vector<16x32xf32>
    %cst_65 = arith.constant dense<0.000000e+00> : vector<16xf32>
    %151 = vector.multi_reduction <add>, %150, %cst_65 [1] : vector<16x32xf32> to vector<16xf32>
    %152 = vector.shape_cast %151 : vector<16xf32> to vector<16x1xf32>
    %cst_66 = arith.constant 3.200000e+01 : f32
    %153 = vector.broadcast %cst_66 : f32 to vector<16x1xf32>
    %154 = arith.divf %152, %153 : vector<16x1xf32>
    %155 = vector.broadcast %147 : vector<16x1xf32> to vector<16x32xf32>
    %156 = arith.subf %139, %155 : vector<16x32xf32>
    %cst_67 = arith.constant 9.99999974E-6 : f32
    %157 = vector.broadcast %cst_67 : f32 to vector<16x1xf32>
    %158 = arith.addf %154, %157 : vector<16x1xf32>
    %159 = math.rsqrt %158 : vector<16x1xf32>
    %160 = vector.broadcast %159 : vector<16x1xf32> to vector<16x32xf32>
    %161 = arith.mulf %156, %160 : vector<16x32xf32>
    %162 = vector.broadcast %141 : vector<1x32xf32> to vector<16x32xf32>
    %163 = arith.mulf %161, %162 : vector<16x32xf32>
    %164 = vector.broadcast %143 : vector<1x32xf32> to vector<16x32xf32>
    %165 = arith.addf %163, %164 : vector<16x32xf32>
    %166 = arith.truncf %165 : vector<16x32xf32> to vector<16x32xbf16>
    %c0_68 = arith.constant 0 : index
    %c0_69 = arith.constant 0 : index
    %c0_70 = arith.constant 0 : index
    %167 = vector.load %arg17[%c0_68, %c0_69, %c0_70] : memref<2x32x64xbf16, #tpu.memory_space<vmem>>, vector<1x32x64xbf16>
    %168 = vector.shape_cast %167 : vector<1x32x64xbf16> to vector<32x64xbf16>
    %cst_71 = arith.constant dense<0.000000e+00> : vector<16x64xf32>
    %169 = tpu.matmul %166, %168, %cst_71 {dimension_numbers = #tpu.dot_dimension_numbers<[1], [0], [0], [1], [0, 0, 1, 1], [], []>} : vector<16x32xbf16>, vector<32x64xbf16>, vector<16x64xf32> -> vector<16x64xf32>
    %c0_72 = arith.constant 0 : index
    %c0_73 = arith.constant 0 : index
    %c0_74 = arith.constant 0 : index
    %170 = vector.load %arg18[%c0_72, %c0_73, %c0_74] : memref<2x1x64xf32, #tpu.memory_space<vmem>>, vector<1x1x64xf32>
    %171 = vector.shape_cast %170 : vector<1x1x64xf32> to vector<1x64xf32>
    %172 = vector.broadcast %171 : vector<1x64xf32> to vector<16x64xf32>
    %173 = arith.addf %169, %172 : vector<16x64xf32>
    %cst_75 = arith.constant 0.000000e+00 : f32
    %174 = vector.broadcast %cst_75 : f32 to vector<16x64xf32>
    %175 = arith.maximumf %173, %174 : vector<16x64xf32>
    %176 = arith.truncf %175 : vector<16x64xf32> to vector<16x64xbf16>
    %c0_76 = arith.constant 0 : index
    %c0_77 = arith.constant 0 : index
    %c0_78 = arith.constant 0 : index
    %177 = vector.load %arg19[%c0_76, %c0_77, %c0_78] : memref<2x64x32xbf16, #tpu.memory_space<vmem>>, vector<1x64x32xbf16>
    %178 = vector.shape_cast %177 : vector<1x64x32xbf16> to vector<64x32xbf16>
    %cst_79 = arith.constant dense<0.000000e+00> : vector<16x32xf32>
    %179 = tpu.matmul %176, %178, %cst_79 {dimension_numbers = #tpu.dot_dimension_numbers<[1], [0], [0], [1], [0, 0, 1, 1], [], []>} : vector<16x64xbf16>, vector<64x32xbf16>, vector<16x32xf32> -> vector<16x32xf32>
    %c0_80 = arith.constant 0 : index
    %c0_81 = arith.constant 0 : index
    %c0_82 = arith.constant 0 : index
    %180 = vector.load %arg20[%c0_80, %c0_81, %c0_82] : memref<2x1x32xf32, #tpu.memory_space<vmem>>, vector<1x1x32xf32>
    %181 = vector.shape_cast %180 : vector<1x1x32xf32> to vector<1x32xf32>
    %182 = vector.broadcast %181 : vector<1x32xf32> to vector<16x32xf32>
    %183 = arith.addf %179, %182 : vector<16x32xf32>
    %184 = arith.addf %165, %183 : vector<16x32xf32>
    %c0_83 = arith.constant 0 : index
    %c0_84 = arith.constant 0 : index
    %c0_85 = arith.constant 0 : index
    %185 = vector.load %arg21[%c0_83, %c0_84, %c0_85] : memref<2x1x32xf32, #tpu.memory_space<vmem>>, vector<1x1x32xf32>
    %186 = vector.shape_cast %185 : vector<1x1x32xf32> to vector<1x32xf32>
    %c0_86 = arith.constant 0 : index
    %c0_87 = arith.constant 0 : index
    %c0_88 = arith.constant 0 : index
    %187 = vector.load %arg22[%c0_86, %c0_87, %c0_88] : memref<2x1x32xf32, #tpu.memory_space<vmem>>, vector<1x1x32xf32>
    %188 = vector.shape_cast %187 : vector<1x1x32xf32> to vector<1x32xf32>
    %cst_89 = arith.constant dense<0.000000e+00> : vector<16xf32>
    %189 = vector.multi_reduction <add>, %184, %cst_89 [1] : vector<16x32xf32> to vector<16xf32>
    %190 = vector.shape_cast %189 : vector<16xf32> to vector<16x1xf32>
    %cst_90 = arith.constant 3.200000e+01 : f32
    %191 = vector.broadcast %cst_90 : f32 to vector<16x1xf32>
    %192 = arith.divf %190, %191 : vector<16x1xf32>
    %193 = vector.broadcast %192 : vector<16x1xf32> to vector<16x32xf32>
    %194 = arith.subf %184, %193 : vector<16x32xf32>
    %195 = arith.mulf %194, %194 : vector<16x32xf32>
    %cst_91 = arith.constant dense<0.000000e+00> : vector<16xf32>
    %196 = vector.multi_reduction <add>, %195, %cst_91 [1] : vector<16x32xf32> to vector<16xf32>
    %197 = vector.shape_cast %196 : vector<16xf32> to vector<16x1xf32>
    %cst_92 = arith.constant 3.200000e+01 : f32
    %198 = vector.broadcast %cst_92 : f32 to vector<16x1xf32>
    %199 = arith.divf %197, %198 : vector<16x1xf32>
    %200 = vector.broadcast %192 : vector<16x1xf32> to vector<16x32xf32>
    %201 = arith.subf %184, %200 : vector<16x32xf32>
    %cst_93 = arith.constant 9.99999974E-6 : f32
    %202 = vector.broadcast %cst_93 : f32 to vector<16x1xf32>
    %203 = arith.addf %199, %202 : vector<16x1xf32>
    %204 = math.rsqrt %203 : vector<16x1xf32>
    %205 = vector.broadcast %204 : vector<16x1xf32> to vector<16x32xf32>
    %206 = arith.mulf %201, %205 : vector<16x32xf32>
    %207 = vector.broadcast %186 : vector<1x32xf32> to vector<16x32xf32>
    %208 = arith.mulf %206, %207 : vector<16x32xf32>
    %209 = vector.broadcast %188 : vector<1x32xf32> to vector<16x32xf32>
    %210 = arith.addf %208, %209 : vector<16x32xf32>
    %211 = arith.truncf %210 : vector<16x32xf32> to vector<16x32xbf16>
    %c1 = arith.constant 1 : index
    %c0_94 = arith.constant 0 : index
    %c0_95 = arith.constant 0 : index
    %212 = vector.load %arg11[%c1, %c0_94, %c0_95] : memref<2x32x96xbf16, #tpu.memory_space<vmem>>, vector<1x32x96xbf16>
    %213 = vector.shape_cast %212 : vector<1x32x96xbf16> to vector<32x96xbf16>
    %cst_96 = arith.constant dense<0.000000e+00> : vector<16x96xf32>
    %214 = tpu.matmul %211, %213, %cst_96 {dimension_numbers = #tpu.dot_dimension_numbers<[1], [0], [0], [1], [0, 0, 1, 1], [], []>} : vector<16x32xbf16>, vector<32x96xbf16>, vector<16x96xf32> -> vector<16x96xf32>
    %c1_97 = arith.constant 1 : index
    %c0_98 = arith.constant 0 : index
    %c0_99 = arith.constant 0 : index
    %215 = vector.load %arg12[%c1_97, %c0_98, %c0_99] : memref<2x1x96xf32, #tpu.memory_space<vmem>>, vector<1x1x96xf32>
    %216 = vector.shape_cast %215 : vector<1x1x96xf32> to vector<1x96xf32>
    %217 = vector.broadcast %216 : vector<1x96xf32> to vector<16x96xf32>
    %218 = arith.addf %214, %217 : vector<16x96xf32>
    %219 = vector.extract_strided_slice %218 {offsets = [0, 0], sizes = [16, 16], strides = [1, 1]} : vector<16x96xf32> to vector<16x16xf32>
    %220 = vector.shape_cast %219 : vector<16x16xf32> to vector<2x8x16xf32>
    %221 = vector.extract_strided_slice %218 {offsets = [0, 32], sizes = [16, 16], strides = [1, 1]} : vector<16x96xf32> to vector<16x16xf32>
    %222 = vector.shape_cast %221 : vector<16x16xf32> to vector<2x8x16xf32>
    %223 = vector.extract_strided_slice %218 {offsets = [0, 64], sizes = [16, 16], strides = [1, 1]} : vector<16x96xf32> to vector<16x16xf32>
    %224 = vector.shape_cast %223 : vector<16x16xf32> to vector<2x8x16xf32>
    %225 = arith.truncf %220 : vector<2x8x16xf32> to vector<2x8x16xbf16>
    %226 = arith.truncf %222 : vector<2x8x16xf32> to vector<2x8x16xbf16>
    "tpu.trace_start"() <{level = 10 : i32, message = "nqe,nke->nqk"}> : () -> ()
    %cst_100 = arith.constant dense<0.000000e+00> : vector<2x8x8xf32>
    %227 = tpu.matmul %225, %226, %cst_100 {dimension_numbers = #tpu.dot_dimension_numbers<[2], [2], [1], [1], [0, 0, 0, 1, 1, 1], [0], [0]>} : vector<2x8x16xbf16>, vector<2x8x16xbf16>, vector<2x8x8xf32> -> vector<2x8x8xf32>
    "tpu.trace_stop"() : () -> ()
    %cst_101 = arith.constant 2.500000e-01 : f32
    %228 = vector.broadcast %cst_101 : f32 to vector<2x8x8xf32>
    %229 = arith.mulf %227, %228 : vector<2x8x8xf32>
    %cst_102 = arith.constant dense<0xFF800000> : vector<2x8xf32>
    %230 = vector.multi_reduction <maximumf>, %229, %cst_102 [2] : vector<2x8x8xf32> to vector<2x8xf32>
    %231 = vector.shape_cast %230 : vector<2x8xf32> to vector<2x8x1xf32>
    %232 = vector.broadcast %231 : vector<2x8x1xf32> to vector<2x8x8xf32>
    %233 = arith.subf %229, %232 : vector<2x8x8xf32>
    %234 = math.exp %233 : vector<2x8x8xf32>
    %cst_103 = arith.constant dense<0.000000e+00> : vector<2x8xf32>
    %235 = vector.multi_reduction <add>, %234, %cst_103 [2] : vector<2x8x8xf32> to vector<2x8xf32>
    %236 = vector.shape_cast %235 : vector<2x8xf32> to vector<2x8x1xf32>
    %237 = tpu.reciprocal %236 {approx = true} : vector<2x8x1xf32> -> vector<2x8x1xf32>
    %238 = vector.broadcast %237 : vector<2x8x1xf32> to vector<2x8x8xf32>
    %239 = arith.mulf %234, %238 : vector<2x8x8xf32>
    %240 = arith.truncf %239 : vector<2x8x8xf32> to vector<2x8x8xbf16>
    %241 = arith.truncf %224 : vector<2x8x16xf32> to vector<2x8x16xbf16>
    "tpu.trace_start"() <{level = 10 : i32, message = "nqk,nke->nqe"}> : () -> ()
    %cst_104 = arith.constant dense<0.000000e+00> : vector<2x8x16xf32>
    %242 = tpu.matmul %240, %241, %cst_104 {dimension_numbers = #tpu.dot_dimension_numbers<[2], [1], [1], [2], [0, 0, 0, 1, 1, 2], [0], [0]>} : vector<2x8x8xbf16>, vector<2x8x16xbf16>, vector<2x8x16xf32> -> vector<2x8x16xf32>
    "tpu.trace_stop"() : () -> ()
    %243 = vector.shape_cast %242 : vector<2x8x16xf32> to vector<16x16xf32>
    %244 = vector.extract_strided_slice %218 {offsets = [0, 16], sizes = [16, 16], strides = [1, 1]} : vector<16x96xf32> to vector<16x16xf32>
    %245 = vector.shape_cast %244 : vector<16x16xf32> to vector<2x8x16xf32>
    %246 = vector.extract_strided_slice %218 {offsets = [0, 48], sizes = [16, 16], strides = [1, 1]} : vector<16x96xf32> to vector<16x16xf32>
    %247 = vector.shape_cast %246 : vector<16x16xf32> to vector<2x8x16xf32>
    %248 = vector.extract_strided_slice %218 {offsets = [0, 80], sizes = [16, 16], strides = [1, 1]} : vector<16x96xf32> to vector<16x16xf32>
    %249 = vector.shape_cast %248 : vector<16x16xf32> to vector<2x8x16xf32>
    %250 = arith.truncf %245 : vector<2x8x16xf32> to vector<2x8x16xbf16>
    %251 = arith.truncf %247 : vector<2x8x16xf32> to vector<2x8x16xbf16>
    "tpu.trace_start"() <{level = 10 : i32, message = "nqe,nke->nqk"}> : () -> ()
    %cst_105 = arith.constant dense<0.000000e+00> : vector<2x8x8xf32>
    %252 = tpu.matmul %250, %251, %cst_105 {dimension_numbers = #tpu.dot_dimension_numbers<[2], [2], [1], [1], [0, 0, 0, 1, 1, 1], [0], [0]>} : vector<2x8x16xbf16>, vector<2x8x16xbf16>, vector<2x8x8xf32> -> vector<2x8x8xf32>
    "tpu.trace_stop"() : () -> ()
    %cst_106 = arith.constant 2.500000e-01 : f32
    %253 = vector.broadcast %cst_106 : f32 to vector<2x8x8xf32>
    %254 = arith.mulf %252, %253 : vector<2x8x8xf32>
    %cst_107 = arith.constant dense<0xFF800000> : vector<2x8xf32>
    %255 = vector.multi_reduction <maximumf>, %254, %cst_107 [2] : vector<2x8x8xf32> to vector<2x8xf32>
    %256 = vector.shape_cast %255 : vector<2x8xf32> to vector<2x8x1xf32>
    %257 = vector.broadcast %256 : vector<2x8x1xf32> to vector<2x8x8xf32>
    %258 = arith.subf %254, %257 : vector<2x8x8xf32>
    %259 = math.exp %258 : vector<2x8x8xf32>
    %cst_108 = arith.constant dense<0.000000e+00> : vector<2x8xf32>
    %260 = vector.multi_reduction <add>, %259, %cst_108 [2] : vector<2x8x8xf32> to vector<2x8xf32>
    %261 = vector.shape_cast %260 : vector<2x8xf32> to vector<2x8x1xf32>
    %262 = tpu.reciprocal %261 {approx = true} : vector<2x8x1xf32> -> vector<2x8x1xf32>
    %263 = vector.broadcast %262 : vector<2x8x1xf32> to vector<2x8x8xf32>
    %264 = arith.mulf %259, %263 : vector<2x8x8xf32>
    %265 = arith.truncf %264 : vector<2x8x8xf32> to vector<2x8x8xbf16>
    %266 = arith.truncf %249 : vector<2x8x16xf32> to vector<2x8x16xbf16>
    "tpu.trace_start"() <{level = 10 : i32, message = "nqk,nke->nqe"}> : () -> ()
    %cst_109 = arith.constant dense<0.000000e+00> : vector<2x8x16xf32>
    %267 = tpu.matmul %265, %266, %cst_109 {dimension_numbers = #tpu.dot_dimension_numbers<[2], [1], [1], [2], [0, 0, 0, 1, 1, 2], [0], [0]>} : vector<2x8x8xbf16>, vector<2x8x16xbf16>, vector<2x8x16xf32> -> vector<2x8x16xf32>
    "tpu.trace_stop"() : () -> ()
    %268 = vector.shape_cast %267 : vector<2x8x16xf32> to vector<16x16xf32>
    %269 = tpu.concatenate %243, %268 in 1 : vector<16x16xf32>, vector<16x16xf32> -> vector<16x32xf32>
    %270 = arith.truncf %269 : vector<16x32xf32> to vector<16x32xbf16>
    %c1_110 = arith.constant 1 : index
    %c0_111 = arith.constant 0 : index
    %c0_112 = arith.constant 0 : index
    %271 = vector.load %arg13[%c1_110, %c0_111, %c0_112] : memref<2x32x32xbf16, #tpu.memory_space<vmem>>, vector<1x32x32xbf16>
    %272 = vector.shape_cast %271 : vector<1x32x32xbf16> to vector<32x32xbf16>
    %cst_113 = arith.constant dense<0.000000e+00> : vector<16x32xf32>
    %273 = tpu.matmul %270, %272, %cst_113 {dimension_numbers = #tpu.dot_dimension_numbers<[1], [0], [0], [1], [0, 0, 1, 1], [], []>} : vector<16x32xbf16>, vector<32x32xbf16>, vector<16x32xf32> -> vector<16x32xf32>
    %c1_114 = arith.constant 1 : index
    %c0_115 = arith.constant 0 : index
    %c0_116 = arith.constant 0 : index
    %274 = vector.load %arg14[%c1_114, %c0_115, %c0_116] : memref<2x1x32xf32, #tpu.memory_space<vmem>>, vector<1x1x32xf32>
    %275 = vector.shape_cast %274 : vector<1x1x32xf32> to vector<1x32xf32>
    %276 = vector.broadcast %275 : vector<1x32xf32> to vector<16x32xf32>
    %277 = arith.addf %273, %276 : vector<16x32xf32>
    %278 = arith.addf %210, %277 : vector<16x32xf32>
    %c1_117 = arith.constant 1 : index
    %c0_118 = arith.constant 0 : index
    %c0_119 = arith.constant 0 : index
    %279 = vector.load %arg15[%c1_117, %c0_118, %c0_119] : memref<2x1x32xf32, #tpu.memory_space<vmem>>, vector<1x1x32xf32>
    %280 = vector.shape_cast %279 : vector<1x1x32xf32> to vector<1x32xf32>
    %c1_120 = arith.constant 1 : index
    %c0_121 = arith.constant 0 : index
    %c0_122 = arith.constant 0 : index
    %281 = vector.load %arg16[%c1_120, %c0_121, %c0_122] : memref<2x1x32xf32, #tpu.memory_space<vmem>>, vector<1x1x32xf32>
    %282 = vector.shape_cast %281 : vector<1x1x32xf32> to vector<1x32xf32>
    %cst_123 = arith.constant dense<0.000000e+00> : vector<16xf32>
    %283 = vector.multi_reduction <add>, %278, %cst_123 [1] : vector<16x32xf32> to vector<16xf32>
    %284 = vector.shape_cast %283 : vector<16xf32> to vector<16x1xf32>
    %cst_124 = arith.constant 3.200000e+01 : f32
    %285 = vector.broadcast %cst_124 : f32 to vector<16x1xf32>
    %286 = arith.divf %284, %285 : vector<16x1xf32>
    %287 = vector.broadcast %286 : vector<16x1xf32> to vector<16x32xf32>
    %288 = arith.subf %278, %287 : vector<16x32xf32>
    %289 = arith.mulf %288, %288 : vector<16x32xf32>
    %cst_125 = arith.constant dense<0.000000e+00> : vector<16xf32>
    %290 = vector.multi_reduction <add>, %289, %cst_125 [1] : vector<16x32xf32> to vector<16xf32>
    %291 = vector.shape_cast %290 : vector<16xf32> to vector<16x1xf32>
    %cst_126 = arith.constant 3.200000e+01 : f32
    %292 = vector.broadcast %cst_126 : f32 to vector<16x1xf32>
    %293 = arith.divf %291, %292 : vector<16x1xf32>
    %294 = vector.broadcast %286 : vector<16x1xf32> to vector<16x32xf32>
    %295 = arith.subf %278, %294 : vector<16x32xf32>
    %cst_127 = arith.constant 9.99999974E-6 : f32
    %296 = vector.broadcast %cst_127 : f32 to vector<16x1xf32>
    %297 = arith.addf %293, %296 : vector<16x1xf32>
    %298 = math.rsqrt %297 : vector<16x1xf32>
    %299 = vector.broadcast %298 : vector<16x1xf32> to vector<16x32xf32>
    %300 = arith.mulf %295, %299 : vector<16x32xf32>
    %301 = vector.broadcast %280 : vector<1x32xf32> to vector<16x32xf32>
    %302 = arith.mulf %300, %301 : vector<16x32xf32>
    %303 = vector.broadcast %282 : vector<1x32xf32> to vector<16x32xf32>
    %304 = arith.addf %302, %303 : vector<16x32xf32>
    %305 = arith.truncf %304 : vector<16x32xf32> to vector<16x32xbf16>
    %c1_128 = arith.constant 1 : index
    %c0_129 = arith.constant 0 : index
    %c0_130 = arith.constant 0 : index
    %306 = vector.load %arg17[%c1_128, %c0_129, %c0_130] : memref<2x32x64xbf16, #tpu.memory_space<vmem>>, vector<1x32x64xbf16>
    %307 = vector.shape_cast %306 : vector<1x32x64xbf16> to vector<32x64xbf16>
    %cst_131 = arith.constant dense<0.000000e+00> : vector<16x64xf32>
    %308 = tpu.matmul %305, %307, %cst_131 {dimension_numbers = #tpu.dot_dimension_numbers<[1], [0], [0], [1], [0, 0, 1, 1], [], []>} : vector<16x32xbf16>, vector<32x64xbf16>, vector<16x64xf32> -> vector<16x64xf32>
    %c1_132 = arith.constant 1 : index
    %c0_133 = arith.constant 0 : index
    %c0_134 = arith.constant 0 : index
    %309 = vector.load %arg18[%c1_132, %c0_133, %c0_134] : memref<2x1x64xf32, #tpu.memory_space<vmem>>, vector<1x1x64xf32>
    %310 = vector.shape_cast %309 : vector<1x1x64xf32> to vector<1x64xf32>
    %311 = vector.broadcast %310 : vector<1x64xf32> to vector<16x64xf32>
    %312 = arith.addf %308, %311 : vector<16x64xf32>
    %cst_135 = arith.constant 0.000000e+00 : f32
    %313 = vector.broadcast %cst_135 : f32 to vector<16x64xf32>
    %314 = arith.maximumf %312, %313 : vector<16x64xf32>
    %315 = arith.truncf %314 : vector<16x64xf32> to vector<16x64xbf16>
    %c1_136 = arith.constant 1 : index
    %c0_137 = arith.constant 0 : index
    %c0_138 = arith.constant 0 : index
    %316 = vector.load %arg19[%c1_136, %c0_137, %c0_138] : memref<2x64x32xbf16, #tpu.memory_space<vmem>>, vector<1x64x32xbf16>
    %317 = vector.shape_cast %316 : vector<1x64x32xbf16> to vector<64x32xbf16>
    %cst_139 = arith.constant dense<0.000000e+00> : vector<16x32xf32>
    %318 = tpu.matmul %315, %317, %cst_139 {dimension_numbers = #tpu.dot_dimension_numbers<[1], [0], [0], [1], [0, 0, 1, 1], [], []>} : vector<16x64xbf16>, vector<64x32xbf16>, vector<16x32xf32> -> vector<16x32xf32>
    %c1_140 = arith.constant 1 : index
    %c0_141 = arith.constant 0 : index
    %c0_142 = arith.constant 0 : index
    %319 = vector.load %arg20[%c1_140, %c0_141, %c0_142] : memref<2x1x32xf32, #tpu.memory_space<vmem>>, vector<1x1x32xf32>
    %320 = vector.shape_cast %319 : vector<1x1x32xf32> to vector<1x32xf32>
    %321 = vector.broadcast %320 : vector<1x32xf32> to vector<16x32xf32>
    %322 = arith.addf %318, %321 : vector<16x32xf32>
    %323 = arith.addf %304, %322 : vector<16x32xf32>
    %c1_143 = arith.constant 1 : index
    %c0_144 = arith.constant 0 : index
    %c0_145 = arith.constant 0 : index
    %324 = vector.load %arg21[%c1_143, %c0_144, %c0_145] : memref<2x1x32xf32, #tpu.memory_space<vmem>>, vector<1x1x32xf32>
    %325 = vector.shape_cast %324 : vector<1x1x32xf32> to vector<1x32xf32>
    %c1_146 = arith.constant 1 : index
    %c0_147 = arith.constant 0 : index
    %c0_148 = arith.constant 0 : index
    %326 = vector.load %arg22[%c1_146, %c0_147, %c0_148] : memref<2x1x32xf32, #tpu.memory_space<vmem>>, vector<1x1x32xf32>
    %327 = vector.shape_cast %326 : vector<1x1x32xf32> to vector<1x32xf32>
    %cst_149 = arith.constant dense<0.000000e+00> : vector<16xf32>
    %328 = vector.multi_reduction <add>, %323, %cst_149 [1] : vector<16x32xf32> to vector<16xf32>
    %329 = vector.shape_cast %328 : vector<16xf32> to vector<16x1xf32>
    %cst_150 = arith.constant 3.200000e+01 : f32
    %330 = vector.broadcast %cst_150 : f32 to vector<16x1xf32>
    %331 = arith.divf %329, %330 : vector<16x1xf32>
    %332 = vector.broadcast %331 : vector<16x1xf32> to vector<16x32xf32>
    %333 = arith.subf %323, %332 : vector<16x32xf32>
    %334 = arith.mulf %333, %333 : vector<16x32xf32>
    %cst_151 = arith.constant dense<0.000000e+00> : vector<16xf32>
    %335 = vector.multi_reduction <add>, %334, %cst_151 [1] : vector<16x32xf32> to vector<16xf32>
    %336 = vector.shape_cast %335 : vector<16xf32> to vector<16x1xf32>
    %cst_152 = arith.constant 3.200000e+01 : f32
    %337 = vector.broadcast %cst_152 : f32 to vector<16x1xf32>
    %338 = arith.divf %336, %337 : vector<16x1xf32>
    %339 = vector.broadcast %331 : vector<16x1xf32> to vector<16x32xf32>
    %340 = arith.subf %323, %339 : vector<16x32xf32>
    %cst_153 = arith.constant 9.99999974E-6 : f32
    %341 = vector.broadcast %cst_153 : f32 to vector<16x1xf32>
    %342 = arith.addf %338, %341 : vector<16x1xf32>
    %343 = math.rsqrt %342 : vector<16x1xf32>
    %344 = vector.broadcast %343 : vector<16x1xf32> to vector<16x32xf32>
    %345 = arith.mulf %340, %344 : vector<16x32xf32>
    %346 = vector.broadcast %325 : vector<1x32xf32> to vector<16x32xf32>
    %347 = arith.mulf %345, %346 : vector<16x32xf32>
    %348 = vector.broadcast %327 : vector<1x32xf32> to vector<16x32xf32>
    %349 = arith.addf %347, %348 : vector<16x32xf32>
    %c0_154 = arith.constant 0 : index
    %c0_155 = arith.constant 0 : index
    %350 = vector.load %arg23[%c0_154, %c0_155] : memref<1x32xf32, #tpu.memory_space<vmem>>, vector<1x32xf32>
    %c0_156 = arith.constant 0 : index
    %c0_157 = arith.constant 0 : index
    %351 = vector.load %arg24[%c0_156, %c0_157] : memref<1x32xf32, #tpu.memory_space<vmem>>, vector<1x32xf32>
    %cst_158 = arith.constant dense<0.000000e+00> : vector<16xf32>
    %352 = vector.multi_reduction <add>, %349, %cst_158 [1] : vector<16x32xf32> to vector<16xf32>
    %353 = vector.shape_cast %352 : vector<16xf32> to vector<16x1xf32>
    %cst_159 = arith.constant 3.200000e+01 : f32
    %354 = vector.broadcast %cst_159 : f32 to vector<16x1xf32>
    %355 = arith.divf %353, %354 : vector<16x1xf32>
    %356 = vector.broadcast %355 : vector<16x1xf32> to vector<16x32xf32>
    %357 = arith.subf %349, %356 : vector<16x32xf32>
    %358 = arith.mulf %357, %357 : vector<16x32xf32>
    %cst_160 = arith.constant dense<0.000000e+00> : vector<16xf32>
    %359 = vector.multi_reduction <add>, %358, %cst_160 [1] : vector<16x32xf32> to vector<16xf32>
    %360 = vector.shape_cast %359 : vector<16xf32> to vector<16x1xf32>
    %cst_161 = arith.constant 3.200000e+01 : f32
    %361 = vector.broadcast %cst_161 : f32 to vector<16x1xf32>
    %362 = arith.divf %360, %361 : vector<16x1xf32>
    %363 = vector.broadcast %355 : vector<16x1xf32> to vector<16x32xf32>
    %364 = arith.subf %349, %363 : vector<16x32xf32>
    %cst_162 = arith.constant 9.99999974E-6 : f32
    %365 = vector.broadcast %cst_162 : f32 to vector<16x1xf32>
    %366 = arith.addf %362, %365 : vector<16x1xf32>
    %367 = math.rsqrt %366 : vector<16x1xf32>
    %368 = vector.broadcast %367 : vector<16x1xf32> to vector<16x32xf32>
    %369 = arith.mulf %364, %368 : vector<16x32xf32>
    %370 = vector.broadcast %350 : vector<1x32xf32> to vector<16x32xf32>
    %371 = arith.mulf %369, %370 : vector<16x32xf32>
    %372 = vector.broadcast %351 : vector<1x32xf32> to vector<16x32xf32>
    %373 = arith.addf %371, %372 : vector<16x32xf32>
    %374 = vector.shape_cast %373 : vector<16x32xf32> to vector<2x8x32xf32>
    %cst_163 = arith.constant dense<0xFF800000> : vector<2x32xf32>
    %375 = vector.multi_reduction <maximumf>, %374, %cst_163 [1] : vector<2x8x32xf32> to vector<2x32xf32>
    %376 = arith.truncf %375 : vector<2x32xf32> to vector<2x32xbf16>
    %c0_164 = arith.constant 0 : index
    %c0_165 = arith.constant 0 : index
    %377 = vector.load %arg25[%c0_164, %c0_165] : memref<32x128xbf16, #tpu.memory_space<vmem>>, vector<32x128xbf16>
    %cst_166 = arith.constant dense<0.000000e+00> : vector<2x128xf32>
    %378 = tpu.matmul %376, %377, %cst_166 {dimension_numbers = #tpu.dot_dimension_numbers<[1], [0], [0], [1], [0, 0, 1, 1], [], []>} : vector<2x32xbf16>, vector<32x128xbf16>, vector<2x128xf32> -> vector<2x128xf32>
    %c0_167 = arith.constant 0 : index
    %c0_168 = arith.constant 0 : index
    %379 = vector.load %arg26[%c0_167, %c0_168] : memref<1x128xf32, #tpu.memory_space<vmem>>, vector<1x128xf32>
    %380 = vector.broadcast %379 : vector<1x128xf32> to vector<2x128xf32>
    %381 = arith.addf %378, %380 : vector<2x128xf32>
    %c0_169 = arith.constant 0 : index
    %c0_170 = arith.constant 0 : index
    %382 = vector.load %arg27[%c0_169, %c0_170] : memref<2x128xf32, #tpu.memory_space<vmem>>, vector<2x128xf32>
    tpu.vector_store %arg27[%c0_169, %c0_170], %381 {strides = array<i32>} : memref<2x128xf32, #tpu.memory_space<vmem>>, vector<2x128xf32>,
    return
  }
  func.func @transform_0(%arg0: i32) -> (i32, i32, i32) {
    %c0_i32 = arith.constant 0 : i32
    %c0_i32_0 = arith.constant 0 : i32
    %c0_i32_1 = arith.constant 0 : i32
    return %arg0, %c0_i32, %c0_i32_0 : i32, i32, i32
  }
  func.func @transform_1(%arg0: i32) -> (i32, i32) {
    %c0_i32 = arith.constant 0 : i32
    %c0_i32_0 = arith.constant 0 : i32
    %c0_i32_1 = arith.constant 0 : i32
    return %c0_i32, %c0_i32_0 : i32, i32
  }
  func.func @transform_2(%arg0: i32) -> (i32, i32) {
    %c0_i32 = arith.constant 0 : i32
    %c0_i32_0 = arith.constant 0 : i32
    %c0_i32_1 = arith.constant 0 : i32
    return %c0_i32, %c0_i32_0 : i32, i32
  }
  func.func @transform_3(%arg0: i32) -> (i32, i32) {
    %c0_i32 = arith.constant 0 : i32
    %c0_i32_0 = arith.constant 0 : i32
    %c0_i32_1 = arith.constant 0 : i32
    return %c0_i32, %c0_i32_0 : i32, i32
  }
  func.func @transform_4(%arg0: i32) -> (i32, i32) {
    %c0_i32 = arith.constant 0 : i32
    %c0_i32_0 = arith.constant 0 : i32
    %c0_i32_1 = arith.constant 0 : i32
    return %c0_i32, %c0_i32_0 : i32, i32
  }
  func.func @transform_5(%arg0: i32) -> (i32, i32) {
    %c0_i32 = arith.constant 0 : i32
    %c0_i32_0 = arith.constant 0 : i32
    %c0_i32_1 = arith.constant 0 : i32
    return %c0_i32, %c0_i32_0 : i32, i32
  }
  func.func @transform_6(%arg0: i32) -> (i32, i32) {
    %c0_i32 = arith.constant 0 : i32
    %c0_i32_0 = arith.constant 0 : i32
    %c0_i32_1 = arith.constant 0 : i32
    return %c0_i32, %c0_i32_0 : i32, i32
  }
  func.func @transform_7(%arg0: i32) -> (i32, i32) {
    %c0_i32 = arith.constant 0 : i32
    %c0_i32_0 = arith.constant 0 : i32
    %c0_i32_1 = arith.constant 0 : i32
    return %c0_i32, %c0_i32_0 : i32, i32
  }
  func.func @transform_8(%arg0: i32) -> (i32, i32) {
    %c0_i32 = arith.constant 0 : i32
    %c0_i32_0 = arith.constant 0 : i32
    %c0_i32_1 = arith.constant 0 : i32
    return %c0_i32, %c0_i32_0 : i32, i32
  }
  func.func @transform_9(%arg0: i32) -> (i32, i32) {
    %c0_i32 = arith.constant 0 : i32
    %c0_i32_0 = arith.constant 0 : i32
    %c0_i32_1 = arith.constant 0 : i32
    return %c0_i32, %c0_i32_0 : i32, i32
  }
  func.func @transform_10(%arg0: i32) -> (i32, i32, i32) {
    %c0_i32 = arith.constant 0 : i32
    %c0_i32_0 = arith.constant 0 : i32
    %c0_i32_1 = arith.constant 0 : i32
    %c0_i32_2 = arith.constant 0 : i32
    return %c0_i32, %c0_i32_0, %c0_i32_1 : i32, i32, i32
  }
  func.func @transform_11(%arg0: i32) -> (i32, i32, i32) {
    %c0_i32 = arith.constant 0 : i32
    %c0_i32_0 = arith.constant 0 : i32
    %c0_i32_1 = arith.constant 0 : i32
    %c0_i32_2 = arith.constant 0 : i32
    return %c0_i32, %c0_i32_0, %c0_i32_1 : i32, i32, i32
  }
  func.func @transform_12(%arg0: i32) -> (i32, i32, i32) {
    %c0_i32 = arith.constant 0 : i32
    %c0_i32_0 = arith.constant 0 : i32
    %c0_i32_1 = arith.constant 0 : i32
    %c0_i32_2 = arith.constant 0 : i32
    return %c0_i32, %c0_i32_0, %c0_i32_1 : i32, i32, i32
  }
  func.func @transform_13(%arg0: i32) -> (i32, i32, i32) {
    %c0_i32 = arith.constant 0 : i32
    %c0_i32_0 = arith.constant 0 : i32
    %c0_i32_1 = arith.constant 0 : i32
    %c0_i32_2 = arith.constant 0 : i32
    return %c0_i32, %c0_i32_0, %c0_i32_1 : i32, i32, i32
  }
  func.func @transform_14(%arg0: i32) -> (i32, i32, i32) {
    %c0_i32 = arith.constant 0 : i32
    %c0_i32_0 = arith.constant 0 : i32
    %c0_i32_1 = arith.constant 0 : i32
    %c0_i32_2 = arith.constant 0 : i32
    return %c0_i32, %c0_i32_0, %c0_i32_1 : i32, i32, i32
  }
  func.func @transform_15(%arg0: i32) -> (i32, i32, i32) {
    %c0_i32 = arith.constant 0 : i32
    %c0_i32_0 = arith.constant 0 : i32
    %c0_i32_1 = arith.constant 0 : i32
    %c0_i32_2 = arith.constant 0 : i32
    return %c0_i32, %c0_i32_0, %c0_i32_1 : i32, i32, i32
  }
  func.func @transform_16(%arg0: i32) -> (i32, i32, i32) {
    %c0_i32 = arith.constant 0 : i32
    %c0_i32_0 = arith.constant 0 : i32
    %c0_i32_1 = arith.constant 0 : i32
    %c0_i32_2 = arith.constant 0 : i32
    return %c0_i32, %c0_i32_0, %c0_i32_1 : i32, i32, i32
  }
  func.func @transform_17(%arg0: i32) -> (i32, i32, i32) {
    %c0_i32 = arith.constant 0 : i32
    %c0_i32_0 = arith.constant 0 : i32
    %c0_i32_1 = arith.constant 0 : i32
    %c0_i32_2 = arith.constant 0 : i32
    return %c0_i32, %c0_i32_0, %c0_i32_1 : i32, i32, i32
  }
  func.func @transform_18(%arg0: i32) -> (i32, i32, i32) {
    %c0_i32 = arith.constant 0 : i32
    %c0_i32_0 = arith.constant 0 : i32
    %c0_i32_1 = arith.constant 0 : i32
    %c0_i32_2 = arith.constant 0 : i32
    return %c0_i32, %c0_i32_0, %c0_i32_1 : i32, i32, i32
  }
  func.func @transform_19(%arg0: i32) -> (i32, i32, i32) {
    %c0_i32 = arith.constant 0 : i32
    %c0_i32_0 = arith.constant 0 : i32
    %c0_i32_1 = arith.constant 0 : i32
    %c0_i32_2 = arith.constant 0 : i32
    return %c0_i32, %c0_i32_0, %c0_i32_1 : i32, i32, i32
  }
  func.func @transform_20(%arg0: i32) -> (i32, i32, i32) {
    %c0_i32 = arith.constant 0 : i32
    %c0_i32_0 = arith.constant 0 : i32
    %c0_i32_1 = arith.constant 0 : i32
    %c0_i32_2 = arith.constant 0 : i32
    return %c0_i32, %c0_i32_0, %c0_i32_1 : i32, i32, i32
  }
  func.func @transform_21(%arg0: i32) -> (i32, i32, i32) {
    %c0_i32 = arith.constant 0 : i32
    %c0_i32_0 = arith.constant 0 : i32
    %c0_i32_1 = arith.constant 0 : i32
    %c0_i32_2 = arith.constant 0 : i32
    return %c0_i32, %c0_i32_0, %c0_i32_1 : i32, i32, i32
  }
  func.func @transform_22(%arg0: i32) -> (i32, i32) {
    %c0_i32 = arith.constant 0 : i32
    %c0_i32_0 = arith.constant 0 : i32
    %c0_i32_1 = arith.constant 0 : i32
    return %c0_i32, %c0_i32_0 : i32, i32
  }
  func.func @transform_23(%arg0: i32) -> (i32, i32) {
    %c0_i32 = arith.constant 0 : i32
    %c0_i32_0 = arith.constant 0 : i32
    %c0_i32_1 = arith.constant 0 : i32
    return %c0_i32, %c0_i32_0 : i32, i32
  }
  func.func @transform_24(%arg0: i32) -> (i32, i32) {
    %c0_i32 = arith.constant 0 : i32
    %c0_i32_0 = arith.constant 0 : i32
    %c0_i32_1 = arith.constant 0 : i32
    return %c0_i32, %c0_i32_0 : i32, i32
  }
  func.func @transform_25(%arg0: i32) -> (i32, i32) {
    %c0_i32 = arith.constant 0 : i32
    %c0_i32_0 = arith.constant 0 : i32
    %c0_i32_1 = arith.constant 0 : i32
    return %c0_i32, %c0_i32_0 : i32, i32
  }
  func.func @transform_26(%arg0: i32) -> (i32, i32) {
    %c0_i32 = arith.constant 0 : i32
    %c0_i32_0 = arith.constant 0 : i32
    return %arg0, %c0_i32 : i32, i32
  }
}

</mosaic_0001>

<llo_original>
// kernel: tpu_custom_call.1
$region0: #{tpu_custom_call.1}
  #allocation0 [shape = 'u32[]', space=smem, size = 0x4, offset = 0x4, fixed_abs, tag = 'smem constant byte address 0x4 - core index']
  #allocation1 [shape = 'u32[144,128]{1,0:T(1,128)}', space=vmem, size = 0x12000, scoped, tag = 'internal scratch']
  %s0 = inlined_call_operand.vmem [shape: f32[2,8,4], index: 0, kind: input, shape index: {}]
  %s1 = inlined_call_operand.vmem [shape: f32[1,4], index: 1, kind: input, shape index: {}]
  %s2 = inlined_call_operand.hbm [shape: f32[1,4], index: 2, kind: input, shape index: {}]
  %s3 = inlined_call_operand.hbm [shape: bf16[4,32], index: 3, kind: input, shape index: {}]
  %s4 = inlined_call_operand.hbm [shape: f32[1,32], index: 4, kind: input, shape index: {}]
  %s5 = inlined_call_operand.vmem [shape: bf16[32,32], index: 5, kind: input, shape index: {}]
  %s6 = inlined_call_operand.hbm [shape: f32[1,32], index: 6, kind: input, shape index: {}]
  %s7 = inlined_call_operand.hbm [shape: f32[1,32], index: 7, kind: input, shape index: {}]
  %s8 = inlined_call_operand.hbm [shape: f32[1,32], index: 8, kind: input, shape index: {}]
  %s9 = inlined_call_operand.hbm [shape: f32[8,32], index: 9, kind: input, shape index: {}]
  %s10 = inlined_call_operand.vmem [shape: bf16[2,32,96], index: 10, kind: input, shape index: {}]
  %s11 = inlined_call_operand.hbm [shape: f32[2,1,96], index: 11, kind: input, shape index: {}]
  %s12 = inlined_call_operand.vmem [shape: bf16[2,32,32], index: 12, kind: input, shape index: {}]
  %s13 = inlined_call_operand.vmem [shape: f32[2,1,32], index: 13, kind: input, shape index: {}]
  %s14 = inlined_call_operand.vmem [shape: f32[2,1,32], index: 14, kind: input, shape index: {}]
  %s15 = inlined_call_operand.vmem [shape: f32[2,1,32], index: 15, kind: input, shape index: {}]
  %s16 = inlined_call_operand.vmem [shape: bf16[2,32,64], index: 16, kind: input, shape index: {}]
  %s17 = inlined_call_operand.vmem [shape: f32[2,1,64], index: 17, kind: input, shape index: {}]
  %s18 = inlined_call_operand.vmem [shape: bf16[2,64,32], index: 18, kind: input, shape index: {}]
  %s19 = inlined_call_operand.vmem [shape: f32[2,1,32], index: 19, kind: input, shape index: {}]
  %s20 = inlined_call_operand.vmem [shape: f32[2,1,32], index: 20, kind: input, shape index: {}]
  %s21 = inlined_call_operand.vmem [shape: f32[2,1,32], index: 21, kind: input, shape index: {}]
  %s22 = inlined_call_operand.vmem [shape: f32[1,32], index: 22, kind: input, shape index: {}]
  %s23 = inlined_call_operand.vmem [shape: f32[1,32], index: 23, kind: input, shape index: {}]
  %s24 = inlined_call_operand.vmem [shape: bf16[32,128], index: 24, kind: input, shape index: {}]
  %s25 = inlined_call_operand.vmem [shape: f32[1,128], index: 25, kind: input, shape index: {}]
  %s26 = inlined_call_operand.hbm [shape: f32[2,128], index: 26, kind: output, shape index: {}]
  %s27 = sld [smem:[#allocation0]]
  $region146: #{tpu_custom_call.1} parent=0
    _
  %s29 = ssub.s32 1, %s27
  %s30 = scalar_select 0, %s29, %s27
  $region1: #{tpu_custom_call.1} parent=0
    #allocation2 [shape = 'u8[512]{0}', space=vmem, size = 0x400, scoped, tag = 'input window, operand 2, single buffered']
    #allocation3 [shape = 's32[1]{0}', space=sflag, size = 0x4, scoped, tag = 'scoped memory for tpu_custom_call.1']
    #allocation4 [shape = 's32[1]{0}', space=sflag, size = 0x4, scoped, tag = 'scoped memory for tpu_custom_call.1']
    #allocation5 [shape = 'u8[1024]{0}', space=vmem, size = 0x400, scoped, tag = 'input window, operand 3, single buffered']
    #allocation6 [shape = 's32[1]{0}', space=sflag, size = 0x4, scoped, tag = 'scoped memory for tpu_custom_call.1']
    #allocation7 [shape = 'u8[512]{0}', space=vmem, size = 0x400, scoped, tag = 'input window, operand 4, single buffered']
    #allocation8 [shape = 'u8[512]{0}', space=vmem, size = 0x400, scoped, tag = 'input window, operand 6, single buffered']
    #allocation9 [shape = 's32[1]{0}', space=sflag, size = 0x4, scoped, tag = 'scoped memory for tpu_custom_call.1']
    #allocation10 [shape = 'u8[512]{0}', space=vmem, size = 0x400, scoped, tag = 'input window, operand 7, single buffered']
    #allocation11 [shape = 'u8[512]{0}', space=vmem, size = 0x400, scoped, tag = 'input window, operand 8, single buffered']
    #allocation12 [shape = 's32[1]{0}', space=sflag, size = 0x4, scoped, tag = 'scoped memory for tpu_custom_call.1']
    #allocation13 [shape = 'u8[4096]{0}', space=vmem, size = 0x1000, scoped, tag = 'input window, operand 9, single buffered']
    #allocation14 [shape = 'u8[1024]{0}', space=vmem, size = 0x400, scoped, tag = 'input window, operand 11, single buffered']
    #allocation15 [shape = 's32[1]{0}', space=sflag, size = 0x4, scoped, tag = 'scoped memory for tpu_custom_call.1']
    #allocation16 [shape = 'u8[1024]{0}', space=vmem, size = 0x400, scoped, tag = 'output window, operand 0, single buffered']
    %31 = vsyncpa [#allocation3], 0
    %32 = vsyncpa [#allocation6], 0
    %33 = vsyncpa [#allocation9], 0
    %34 = vsyncpa [#allocation12], 0
    %35 = vsyncpa [#allocation15], 0
    %36 = vsyncpa [#allocation4], 0
    // Predicated region
    $region2: #{tpu_custom_call.1} parent=1 // pred_check
      _
    $region3: #{tpu_custom_call.1} parent=1 // pred_check_branch
      %38 = sbr.rel (0) target = $region5
    $region4: #{tpu_custom_call.1} parent=1 // pred_region
      _
    $region5: #{tpu_custom_call.1} parent=1 // pred_fallthru
      _
    // Predicated region
    $region6: #{tpu_custom_call.1} parent=1 // pred_check
      _
    $region7: #{tpu_custom_call.1} parent=1 // pred_check_branch
      %40 = sbr.rel (0) target = $region9
    $region8: #{tpu_custom_call.1} parent=1 // pred_region
      _
    $region9: #{tpu_custom_call.1} parent=1 // pred_fallthru
      _
    // Predicated region
    $region10: #{tpu_custom_call.1} parent=1 // pred_check
      _
    $region11: #{tpu_custom_call.1} parent=1 // pred_check_branch
      %42 = sbr.rel (0) target = $region13
    $region12: #{tpu_custom_call.1} parent=1 // pred_region
      %s44 = ssub.s32 16, 16
      %45 = vsyncadd [#allocation3], %s44
      %s47 = sshll.u32 [#allocation2], 4
      %s48 = int_to_ptr.vmem [resolvable:$true] %s47
      %50 = dma.hbm_to_vmem [thread:$0]  %s2, 16, %s48, [#allocation3]
    $region13: #{tpu_custom_call.1} parent=1 // pred_fallthru
      _
    // Predicated region
    $region14: #{tpu_custom_call.1} parent=1 // pred_check
      _
    $region15: #{tpu_custom_call.1} parent=1 // pred_check_branch
      %52 = sbr.rel (0) target = $region17
    $region16: #{tpu_custom_call.1} parent=1 // pred_region
      %s54 = ssub.s32 32, 32
      %55 = vsyncadd [#allocation6], %s54
      %s57 = sshll.u32 [#allocation5], 4
      %s58 = int_to_ptr.vmem [resolvable:$true] %s57
      %60 = dma.hbm_to_vmem [thread:$0]  %s3, 32, %s58, [#allocation6]
    $region17: #{tpu_custom_call.1} parent=1 // pred_fallthru
      _
    // Predicated region
    $region18: #{tpu_custom_call.1} parent=1 // pred_check
      _
    $region19: #{tpu_custom_call.1} parent=1 // pred_check_branch
      %62 = sbr.rel (0) target = $region21
    $region20: #{tpu_custom_call.1} parent=1 // pred_region
      %s64 = ssub.s32 16, 16
      %65 = vsyncadd [#allocation6], %s64
      %s67 = sshll.u32 [#allocation7], 4
      %s68 = int_to_ptr.vmem [resolvable:$true] %s67
      %70 = dma.hbm_to_vmem [thread:$0]  %s4, 16, %s68, [#allocation6]
    $region21: #{tpu_custom_call.1} parent=1 // pred_fallthru
      _
    // Predicated region
    $region22: #{tpu_custom_call.1} parent=1 // pred_check
      _
    $region23: #{tpu_custom_call.1} parent=1 // pred_check_branch
      %72 = sbr.rel (0) target = $region25
    $region24: #{tpu_custom_call.1} parent=1 // pred_region
      _
    $region25: #{tpu_custom_call.1} parent=1 // pred_fallthru
      _
    // Predicated region
    $region26: #{tpu_custom_call.1} parent=1 // pred_check
      _
    $region27: #{tpu_custom_call.1} parent=1 // pred_check_branch
      %74 = sbr.rel (0) target = $region29
    $region28: #{tpu_custom_call.1} parent=1 // pred_region
      %s76 = ssub.s32 16, 16
      %77 = vsyncadd [#allocation9], %s76
      %s79 = sshll.u32 [#allocation8], 4
      %s80 = int_to_ptr.vmem [resolvable:$true] %s79
      %82 = dma.hbm_to_vmem [thread:$0]  %s6, 16, %s80, [#allocation9]
    $region29: #{tpu_custom_call.1} parent=1 // pred_fallthru
      _
    // Predicated region
    $region30: #{tpu_custom_call.1} parent=1 // pred_check
      _
    $region31: #{tpu_custom_call.1} parent=1 // pred_check_branch
      %84 = sbr.rel (0) target = $region33
    $region32: #{tpu_custom_call.1} parent=1 // pred_region
      %s86 = ssub.s32 16, 16
      %87 = vsyncadd [#allocation9], %s86
      %s89 = sshll.u32 [#allocation10], 4
      %s90 = int_to_ptr.vmem [resolvable:$true] %s89
      %92 = dma.hbm_to_vmem [thread:$0]  %s7, 16, %s90, [#allocation9]
    $region33: #{tpu_custom_call.1} parent=1 // pred_fallthru
      _
    // Predicated region
    $region34: #{tpu_custom_call.1} parent=1 // pred_check
      _
    $region35: #{tpu_custom_call.1} parent=1 // pred_check_branch
      %94 = sbr.rel (0) target = $region37
    $region36: #{tpu_custom_call.1} parent=1 // pred_region
      %s96 = ssub.s32 16, 16
      %97 = vsyncadd [#allocation12], %s96
      %s99 = sshll.u32 [#allocation11], 4
      %s100 = int_to_ptr.vmem [resolvable:$true] %s99
      %102 = dma.hbm_to_vmem [thread:$0]  %s8, 16, %s100, [#allocation12]
    $region37: #{tpu_custom_call.1} parent=1 // pred_fallthru
      _
    // Predicated region
    $region38: #{tpu_custom_call.1} parent=1 // pred_check
      _
    $region39: #{tpu_custom_call.1} parent=1 // pred_check_branch
      %104 = sbr.rel (0) target = $region41
    $region40: #{tpu_custom_call.1} parent=1 // pred_region
      %s106 = ssub.s32 128, 128
      %107 = vsyncadd [#allocation12], %s106
      %s109 = sshll.u32 [#allocation13], 4
      %s110 = int_to_ptr.vmem [resolvable:$true] %s109
      %112 = dma.hbm_to_vmem [thread:$0]  %s9, 128, %s110, [#allocation12]
    $region41: #{tpu_custom_call.1} parent=1 // pred_fallthru
      _
    // Predicated region
    $region42: #{tpu_custom_call.1} parent=1 // pred_check
      _
    $region43: #{tpu_custom_call.1} parent=1 // pred_check_branch
      %114 = sbr.rel (0) target = $region45
    $region44: #{tpu_custom_call.1} parent=1 // pred_region
      _
    $region45: #{tpu_custom_call.1} parent=1 // pred_fallthru
      _
    // Predicated region
    $region46: #{tpu_custom_call.1} parent=1 // pred_check
      _
    $region47: #{tpu_custom_call.1} parent=1 // pred_check_branch
      %116 = sbr.rel (0) target = $region49
    $region48: #{tpu_custom_call.1} parent=1 // pred_region
      %s118 = ssub.s32 32, 32
      %119 = vsyncadd [#allocation15], %s118
      %s120 = sshll.u32 [#allocation14], 4
      %s121 = int_to_ptr.vmem [resolvable:$true] %s120
      %126 = dma.hbm_to_vmem [thread:$0]  %s11, 32, %s121, [#allocation15], 16, 16, 1
    $region49: #{tpu_custom_call.1} parent=1 // pred_fallthru
      _
    // Predicated region
    $region50: #{tpu_custom_call.1} parent=1 // pred_check
      _
    $region51: #{tpu_custom_call.1} parent=1 // pred_check_branch
      %128 = sbr.rel (0) target = $region53
    $region52: #{tpu_custom_call.1} parent=1 // pred_region
      _
    $region53: #{tpu_custom_call.1} parent=1 // pred_fallthru
      _
    // Predicated region
    $region54: #{tpu_custom_call.1} parent=1 // pred_check
      _
    $region55: #{tpu_custom_call.1} parent=1 // pred_check_branch
      %130 = sbr.rel (0) target = $region57
    $region56: #{tpu_custom_call.1} parent=1 // pred_region
      _
    $region57: #{tpu_custom_call.1} parent=1 // pred_fallthru
      _
    // Predicated region
    $region58: #{tpu_custom_call.1} parent=1 // pred_check
      _
    $region59: #{tpu_custom_call.1} parent=1 // pred_check_branch
      %132 = sbr.rel (0) target = $region61
    $region60: #{tpu_custom_call.1} parent=1 // pred_region
      _
    $region61: #{tpu_custom_call.1} parent=1 // pred_fallthru
      _
    // Predicated region
    $region62: #{tpu_custom_call.1} parent=1 // pred_check
      _
    $region63: #{tpu_custom_call.1} parent=1 // pred_check_branch
      %134 = sbr.rel (0) target = $region65
    $region64: #{tpu_custom_call.1} parent=1 // pred_region
      _
    $region65: #{tpu_custom_call.1} parent=1 // pred_fallthru
      _
    // Predicated region
    $region66: #{tpu_custom_call.1} parent=1 // pred_check
      _
    $region67: #{tpu_custom_call.1} parent=1 // pred_check_branch
      %136 = sbr.rel (0) target = $region69
    $region68: #{tpu_custom_call.1} parent=1 // pred_region
      _
    $region69: #{tpu_custom_call.1} parent=1 // pred_fallthru
      _
    // Predicated region
    $region70: #{tpu_custom_call.1} parent=1 // pred_check
      _
    $region71: #{tpu_custom_call.1} parent=1 // pred_check_branch
      %138 = sbr.rel (0) target = $region73
    $region72: #{tpu_custom_call.1} parent=1 // pred_region
      _
    $region73: #{tpu_custom_call.1} parent=1 // pred_fallthru
      _
    // Predicated region
    $region74: #{tpu_custom_call.1} parent=1 // pred_check
      _
    $region75: #{tpu_custom_call.1} parent=1 // pred_check_branch
      %140 = sbr.rel (0) target = $region77
    $region76: #{tpu_custom_call.1} parent=1 // pred_region
      _
    $region77: #{tpu_custom_call.1} parent=1 // pred_fallthru
      _
    // Predicated region
    $region78: #{tpu_custom_call.1} parent=1 // pred_check
      _
    $region79: #{tpu_custom_call.1} parent=1 // pred_check_branch
      %142 = sbr.rel (0) target = $region81
    $region80: #{tpu_custom_call.1} parent=1 // pred_region
      _
    $region81: #{tpu_custom_call.1} parent=1 // pred_fallthru
      _
    // Predicated region
    $region82: #{tpu_custom_call.1} parent=1 // pred_check
      _
    $region83: #{tpu_custom_call.1} parent=1 // pred_check_branch
      %144 = sbr.rel (0) target = $region85
    $region84: #{tpu_custom_call.1} parent=1 // pred_region
      _
    $region85: #{tpu_custom_call.1} parent=1 // pred_fallthru
      _
    // Predicated region
    $region86: #{tpu_custom_call.1} parent=1 // pred_check
      _
    $region87: #{tpu_custom_call.1} parent=1 // pred_check_branch
      %146 = sbr.rel (0) target = $region89
    $region88: #{tpu_custom_call.1} parent=1 // pred_region
      _
    $region89: #{tpu_custom_call.1} parent=1 // pred_fallthru
      _
    // Predicated region
    $region90: #{tpu_custom_call.1} parent=1 // pred_check
      _
    $region91: #{tpu_custom_call.1} parent=1 // pred_check_branch
      %148 = sbr.rel (0) target = $region93
    $region92: #{tpu_custom_call.1} parent=1 // pred_region
      _
    $region93: #{tpu_custom_call.1} parent=1 // pred_fallthru
      _
    // Predicated region
    $region94: #{tpu_custom_call.1} parent=1 // pred_check
      _
    $region95: #{tpu_custom_call.1} parent=1 // pred_check_branch
      %150 = sbr.rel (0) target = $region97
    $region96: #{tpu_custom_call.1} parent=1 // pred_region
      _
    $region97: #{tpu_custom_call.1} parent=1 // pred_fallthru
      _
    // Predicated region
    $region98: #{tpu_custom_call.1} parent=1 // pred_check
      _
    $region99: #{tpu_custom_call.1} parent=1 // pred_check_branch
      %152 = sbr.rel (0) target = $region101
    $region100: #{tpu_custom_call.1} parent=1 // pred_region
      _
    $region101: #{tpu_custom_call.1} parent=1 // pred_fallthru
      _
    // Predicated region
    $region102: #{tpu_custom_call.1} parent=1 // pred_check
      _
    $region103: #{tpu_custom_call.1} parent=1 // pred_check_branch
      %154 = sbr.rel (0) target = $region105
    $region104: #{tpu_custom_call.1} parent=1 // pred_region
      _
    $region105: #{tpu_custom_call.1} parent=1 // pred_fallthru
      _
    // Predicated region
    $region106: #{tpu_custom_call.1} parent=1 // pred_check
      _
    $region107: #{tpu_custom_call.1} parent=1 // pred_check_branch
      %156 = sbr.rel (0) target = $region109
    $region108: #{tpu_custom_call.1} parent=1 // pred_region
      %157 = dma.done [#allocation3], 16
    $region109: #{tpu_custom_call.1} parent=1 // pred_fallthru
      _
    // Predicated region
    $region110: #{tpu_custom_call.1} parent=1 // pred_check
      _
    $region111: #{tpu_custom_call.1} parent=1 // pred_check_branch
      %159 = sbr.rel (0) target = $region113
    $region112: #{tpu_custom_call.1} parent=1 // pred_region
      %160 = dma.done [#allocation6], 32
    $region113: #{tpu_custom_call.1} parent=1 // pred_fallthru
      _
    // Predicated region
    $region114: #{tpu_custom_call.1} parent=1 // pred_check
      _
    $region115: #{tpu_custom_call.1} parent=1 // pred_check_branch
      %162 = sbr.rel (0) target = $region117
    $region116: #{tpu_custom_call.1} parent=1 // pred_region
      %163 = dma.done [#allocation6], 16
    $region117: #{tpu_custom_call.1} parent=1 // pred_fallthru
      _
    // Predicated region
    $region118: #{tpu_custom_call.1} parent=1 // pred_check
      _
    $region119: #{tpu_custom_call.1} parent=1 // pred_check_branch
      %165 = sbr.rel (0) target = $region121
    $region120: #{tpu_custom_call.1} parent=1 // pred_region
      %166 = dma.done [#allocation9], 16
    $region121: #{tpu_custom_call.1} parent=1 // pred_fallthru
      _
    // Predicated region
    $region122: #{tpu_custom_call.1} parent=1 // pred_check
      _
    $region123: #{tpu_custom_call.1} parent=1 // pred_check_branch
      %168 = sbr.rel (0) target = $region125
    $region124: #{tpu_custom_call.1} parent=1 // pred_region
      %169 = dma.done [#allocation9], 16
    $region125: #{tpu_custom_call.1} parent=1 // pred_fallthru
      _
    // Predicated region
    $region126: #{tpu_custom_call.1} parent=1 // pred_check
      _
    $region127: #{tpu_custom_call.1} parent=1 // pred_check_branch
      %171 = sbr.rel (0) target = $region129
    $region128: #{tpu_custom_call.1} parent=1 // pred_region
      %172 = dma.done [#allocation12], 16
    $region129: #{tpu_custom_call.1} parent=1 // pred_fallthru
      _
    // Predicated region
    $region130: #{tpu_custom_call.1} parent=1 // pred_check
      _
    $region131: #{tpu_custom_call.1} parent=1 // pred_check_branch
      %174 = sbr.rel (0) target = $region133
    $region132: #{tpu_custom_call.1} parent=1 // pred_region
      %175 = dma.done [#allocation12], 128
    $region133: #{tpu_custom_call.1} parent=1 // pred_fallthru
      _
    // Predicated region
    $region134: #{tpu_custom_call.1} parent=1 // pred_check
      _
    $region135: #{tpu_custom_call.1} parent=1 // pred_check_branch
      %177 = sbr.rel (0) target = $region137
    $region136: #{tpu_custom_call.1} parent=1 // pred_region
      %178 = dma.done [#allocation15], 32
    $region137: #{tpu_custom_call.1} parent=1 // pred_fallthru
      _
    %v180 = vld [vmem:[%s0] sm:$0xff]
    %v181 = vld [vmem:[%s0 + $0x8] sm:$0xff]
    %v182 = vld [vmem:[%s1] sm:$0x1]
    %v183 = vld [vmem:[#allocation2] sm:$0x1]
    %vm184 = vcmask 31744
    %v185 = vsel %vm184, %v180, 0.0
    %186 = vadd.xlane.f32.xlu0 %v185
    %v187 = vpop.xlane.xlu0 %186
    %v188 = vsel %vm184, %v181, 0.0
    %189 = vadd.xlane.f32.xlu0 %v188
    %v190 = vpop.xlane.xlu0 %189
    %v191 = vrcp.pop 4.0
    %v192 = vmul.f32 %v187, %v191
    %v193 = vmul.f32 %v190, %v191
    %v194 = vsub.f32 %v180, %v192
    %v195 = vsub.f32 %v181, %v193
    %v196 = vmul.f32 %v194, %v194
    %v197 = vmul.f32 %v195, %v195
    %v198 = vsel %vm184, %v196, 0.0
    %199 = vadd.xlane.f32.xlu0 %v198
    %v200 = vpop.xlane.xlu0 %199
    %v201 = vsel %vm184, %v197, 0.0
    %202 = vadd.xlane.f32.xlu0 %v201
    %v203 = vpop.xlane.xlu0 %202
    %v204 = vmul.f32 %v200, %v191
    %v205 = vmul.f32 %v203, %v191
    %v206 = vadd.f32 %v204, 1e-05
    %v207 = vadd.f32 %v205, 1e-05
    %v208 = vrsqrt.pop %v206
    %v209 = vrsqrt.pop %v207
    %v210 = vmul.f32 %v194, %v208
    %v211 = vmul.f32 %v195, %v209
    %v213 = vlaneseq
    %v214 = vshrl.u32 %v213, 7
    %v215 = vsub.s32 0, %v214
    %v216 = vrot.slane %v182, %v215
    %v218 = vmul.f32 %v210, %v216
    %v219 = vmul.f32 %v211, %v216
    %v221 = vlaneseq
    %v222 = vshrl.u32 %v221, 7
    %v223 = vsub.s32 0, %v222
    %v224 = vrot.slane %v183, %v223
    %v226 = vadd.f32 %v218, %v224
    %v227 = vadd.f32 %v219, %v224
    %v228 = vpack.c.bf16 %v227, %v226
    %v229 = vld [vmem:[#allocation5] sm:$0x3]
    %v230 = vld [vmem:[#allocation7] sm:$0x1]
    %v232 = vlaneseq
    %v233 = vshrl.u32 %v232, 7
    %v234 = vsub.s32 0, %v233
    %v235 = vrot.slane %v230, %v234
    %v238 = vsel %vm184, %v228, 0
    %vm240 = vcmask 1041408
    %v242 = vsel %vm240, %v229, 0
    %244 = vmatprep.subr.bf16.mxu0 0
    %245 = vmatpush1.bf16.msra.mxu0 %v242
    %246 = vmatprep.subr.bf16.mxu0 0
    %247 = vmatpush1.bf16.msra.mxu0 0
    %248 = vmatprep.subr.bf16.mxu0 0
    %249 = vmatpush1.bf16.msra.mxu0 0
    %250 = vmatprep.subr.bf16.mxu0 0
    %251 = vmatpush1.bf16.msra.mxu0 0
    %252 = vmatprep.subr.bf16.mxu0 0
    %253 = vmatpush1.bf16.msra.mxu0 0
    %254 = vmatprep.subr.bf16.mxu0 0
    %255 = vmatpush1.bf16.msra.mxu0 0
    %256 = vmatprep.subr.bf16.mxu0 0
    %257 = vmatpush1.bf16.msra.mxu0 0
    %258 = vmatprep.subr.bf16.mxu0 0
    %259 = vmatpush1.bf16.msra.mxu0 0
    %260 = vmatprep.subr.bf16.mxu0 0
    %261 = vmatpush1.bf16.msra.mxu0 0
    %262 = vmatprep.subr.bf16.mxu0 0
    %263 = vmatpush1.bf16.msra.mxu0 0
    %264 = vmatprep.subr.bf16.mxu0 0
    %265 = vmatpush1.bf16.msra.mxu0 0
    %266 = vmatprep.subr.bf16.mxu0 0
    %267 = vmatpush1.bf16.msra.mxu0 0
    %268 = vmatprep.subr.bf16.mxu0 0
    %269 = vmatpush1.bf16.msra.mxu0 0
    %270 = vmatprep.subr.bf16.mxu0 0
    %271 = vmatpush1.bf16.msra.mxu0 0
    %272 = vmatprep.subr.bf16.mxu0 0
    %273 = vmatpush1.bf16.msra.mxu0 0
    %274 = vmatprep.subr.bf16.mxu0 0
    %275 = vmatpush1.bf16.msra.mxu0 0
    %276 = vmatprep.mubr.bf16.mxu0 0
    %277 = vmatmul.mubr.bf16.gmra.mrb[0].mxu0 %v238
    %v278 = vpop.f32.mrb[0].mxu0
    %v279 = vadd.f32 %v235, %v278
    %v280 = vpop.f32.mrb[0].mxu0
    %v281 = vpop.f32.mrb[0].mxu0
    %v282 = vadd.f32 %v235, %v281
    %v283 = vpop.f32.mrb[0].mxu0
    %284 = vdwg.mxu0
    %v285 = vmax.f32 %v279, 0.0
    %v286 = vmax.f32 %v282, 0.0
    %v287 = vpack.c.bf16 %v286, %v285
    %v288 = vld [vmem:[%s5] sm:$0xf]
    %v289 = vld [vmem:[%s5 + $0x4] sm:$0xf]
    %v290 = vld [vmem:[%s5 + $0x8] sm:$0xf]
    %v291 = vld [vmem:[%s5 + $0xc] sm:$0xf]
    %v292 = vld [vmem:[#allocation8] sm:$0x1]
    %v294 = vlaneseq
    %v295 = vshrl.u32 %v294, 7
    %v296 = vsub.s32 0, %v295
    %v297 = vrot.slane %v292, %v296
    %v303 = vunpack.c.l.b16 %v288
    %v304 = vunpack.c.l.b16 %v289
    %v305 = vunpack.c.l.b16 %v290
    %v306 = vunpack.c.l.b16 %v291
    %v307 = vpack.c.b16 %v304, %v303
    %v308 = vpack.c.b16 %v306, %v305
    %vm311 = vcmask 261120
    %v313 = vsel %vm311, %v287, 0
    %315 = vmatprep.subr.bf16.mxu0 0
    %316 = vmatpush1.bf16.msra.mxu0 %v307
    %317 = vmatprep.subr.bf16.mxu0 0
    %318 = vmatpush1.bf16.msra.mxu0 %v308
    %319 = vmatprep.subr.bf16.mxu0 0
    %320 = vmatpush1.bf16.msra.mxu0 0
    %321 = vmatprep.subr.bf16.mxu0 0
    %322 = vmatpush1.bf16.msra.mxu0 0
    %323 = vmatprep.subr.bf16.mxu0 0
    %324 = vmatpush1.bf16.msra.mxu0 0
    %325 = vmatprep.subr.bf16.mxu0 0
    %326 = vmatpush1.bf16.msra.mxu0 0
    %327 = vmatprep.subr.bf16.mxu0 0
    %328 = vmatpush1.bf16.msra.mxu0 0
    %329 = vmatprep.subr.bf16.mxu0 0
    %330 = vmatpush1.bf16.msra.mxu0 0
    %331 = vmatprep.subr.bf16.mxu0 0
    %332 = vmatpush1.bf16.msra.mxu0 0
    %333 = vmatprep.subr.bf16.mxu0 0
    %334 = vmatpush1.bf16.msra.mxu0 0
    %335 = vmatprep.subr.bf16.mxu0 0
    %336 = vmatpush1.bf16.msra.mxu0 0
    %337 = vmatprep.subr.bf16.mxu0 0
    %338 = vmatpush1.bf16.msra.mxu0 0
    %339 = vmatprep.subr.bf16.mxu0 0
    %340 = vmatpush1.bf16.msra.mxu0 0
    %341 = vmatprep.subr.bf16.mxu0 0
    %342 = vmatpush1.bf16.msra.mxu0 0
    %343 = vmatprep.subr.bf16.mxu0 0
    %344 = vmatpush1.bf16.msra.mxu0 0
    %345 = vmatprep.subr.bf16.mxu0 0
    %346 = vmatpush1.bf16.msra.mxu0 0
    %347 = vmatprep.mubr.bf16.mxu0 0
    %348 = vmatmul.mubr.bf16.gmra.mrb[0].mxu0 %v313
    %v349 = vpop.f32.mrb[0].mxu0
    %v350 = vadd.f32 %v297, %v349
    %v351 = vpop.f32.mrb[0].mxu0
    %v352 = vpop.f32.mrb[0].mxu0
    %v353 = vadd.f32 %v297, %v352
    %v354 = vpop.f32.mrb[0].mxu0
    %355 = vdwg.mxu0
    %v356 = vmax.f32 %v350, 0.0
    %v357 = vmax.f32 %v353, 0.0
    %v358 = vld [vmem:[#allocation10] sm:$0x1]
    %v359 = vld [vmem:[#allocation11] sm:$0x1]
    %v360 = vsel %vm311, %v356, 0.0
    %361 = vadd.xlane.f32.xlu0 %v360
    %v362 = vpop.xlane.xlu0 %361
    %v363 = vsel %vm311, %v357, 0.0
    %364 = vadd.xlane.f32.xlu0 %v363
    %v365 = vpop.xlane.xlu0 %364
    %v366 = vrcp.pop 32.0
    %v367 = vmul.f32 %v362, %v366
    %v368 = vmul.f32 %v365, %v366
    %v369 = vsub.f32 %v356, %v367
    %v370 = vsub.f32 %v357, %v368
    %v371 = vmul.f32 %v369, %v369
    %v372 = vmul.f32 %v370, %v370
    %v373 = vsel %vm311, %v371, 0.0
    %374 = vadd.xlane.f32.xlu0 %v373
    %v375 = vpop.xlane.xlu0 %374
    %v376 = vsel %vm311, %v372, 0.0
    %377 = vadd.xlane.f32.xlu0 %v376
    %v378 = vpop.xlane.xlu0 %377
    %v379 = vmul.f32 %v375, %v366
    %v380 = vmul.f32 %v378, %v366
    %v381 = vadd.f32 %v379, 1e-05
    %v382 = vadd.f32 %v380, 1e-05
    %v383 = vrsqrt.pop %v381
    %v384 = vrsqrt.pop %v382
    %v385 = vmul.f32 %v369, %v383
    %v386 = vmul.f32 %v370, %v384
    %v388 = vlaneseq
    %v389 = vshrl.u32 %v388, 7
    %v390 = vsub.s32 0, %v389
    %v391 = vrot.slane %v358, %v390
    %v393 = vmul.f32 %v385, %v391
    %v394 = vmul.f32 %v386, %v391
    %v396 = vlaneseq
    %v397 = vshrl.u32 %v396, 7
    %v398 = vsub.s32 0, %v397
    %v399 = vrot.slane %v359, %v398
    %v401 = vadd.f32 %v393, %v399
    %v402 = vadd.f32 %v394, %v399
    %v403 = vld [vmem:[#allocation13] sm:$0xff]
    %v404 = vadd.f32 %v401, %v403
    %v405 = vadd.f32 %v402, %v403
    %v406 = vpack.c.bf16 %v405, %v404
    %v407 = vld [vmem:[%s10] sm:$0xf]
    %v408 = vld [vmem:[%s10 + $0x4] sm:$0xf]
    %v409 = vld [vmem:[%s10 + $0x8] sm:$0xf]
    %v410 = vld [vmem:[%s10 + $0xc] sm:$0xf]
    %v411 = vld [vmem:[#allocation14] sm:$0x1]
    %v413 = vlaneseq
    %v414 = vshrl.u32 %v413, 7
    %v415 = vsub.s32 0, %v414
    %v416 = vrot.slane %v411, %v415
    %v422 = vunpack.c.l.b16 %v407
    %v423 = vunpack.c.l.b16 %v408
    %v424 = vunpack.c.l.b16 %v409
    %v425 = vunpack.c.l.b16 %v410
    %v426 = vpack.c.b16 %v423, %v422
    %v427 = vpack.c.b16 %v425, %v424
    %v431 = vsel %vm311, %v406, 0
    %433 = vmatprep.subr.bf16.mxu0 0
    %434 = vmatpush1.bf16.msra.mxu0 %v426
    %435 = vmatprep.subr.bf16.mxu0 0
    %436 = vmatpush1.bf16.msra.mxu0 %v427
    %437 = vmatprep.subr.bf16.mxu0 0
    %438 = vmatpush1.bf16.msra.mxu0 0
    %439 = vmatprep.subr.bf16.mxu0 0
    %440 = vmatpush1.bf16.msra.mxu0 0
    %441 = vmatprep.subr.bf16.mxu0 0
    %442 = vmatpush1.bf16.msra.mxu0 0
    %443 = vmatprep.subr.bf16.mxu0 0
    %444 = vmatpush1.bf16.msra.mxu0 0
    %445 = vmatprep.subr.bf16.mxu0 0
    %446 = vmatpush1.bf16.msra.mxu0 0
    %447 = vmatprep.subr.bf16.mxu0 0
    %448 = vmatpush1.bf16.msra.mxu0 0
    %449 = vmatprep.subr.bf16.mxu0 0
    %450 = vmatpush1.bf16.msra.mxu0 0
    %451 = vmatprep.subr.bf16.mxu0 0
    %452 = vmatpush1.bf16.msra.mxu0 0
    %453 = vmatprep.subr.bf16.mxu0 0
    %454 = vmatpush1.bf16.msra.mxu0 0
    %455 = vmatprep.subr.bf16.mxu0 0
    %456 = vmatpush1.bf16.msra.mxu0 0
    %457 = vmatprep.subr.bf16.mxu0 0
    %458 = vmatpush1.bf16.msra.mxu0 0
    %459 = vmatprep.subr.bf16.mxu0 0
    %460 = vmatpush1.bf16.msra.mxu0 0
    %461 = vmatprep.subr.bf16.mxu0 0
    %462 = vmatpush1.bf16.msra.mxu0 0
    %463 = vmatprep.subr.bf16.mxu0 0
    %464 = vmatpush1.bf16.msra.mxu0 0
    %465 = vmatprep.mubr.bf16.mxu0 0
    %466 = vmatmul.mubr.bf16.gmra.mrb[0].mxu0 %v431
    %v467 = vpop.f32.mrb[0].mxu0
    %v468 = vadd.f32 %v416, %v467
    %v469 = vpop.f32.mrb[0].mxu0
    %v470 = vpop.f32.mrb[0].mxu0
    %v471 = vadd.f32 %v416, %v470
    %v472 = vpop.f32.mrb[0].mxu0
    %473 = vdwg.mxu0
    %v474 = vpack.c.bf16 %v468, %v468
    %v475 = vpack.c.bf16 %v471, %v471
    %477 = vrot.lane.b32.xlu0 %v474, 96
    %v478 = vpop.permute.xlu0 %477
    %vm479 = vcmask 130048
    %v481 = vsel %vm479, %v474, 0
    %v484 = vsel %vm479, %v478, 0
    %486 = vmatprep.subr.bf16.mxu0 0
    %487 = vmatpush1.bf16.xpose.msra.mxu0 %v484
    %488 = vmatprep.subr.bf16.mxu0 0
    %489 = vmatpush1.bf16.xpose.msra.mxu0 0
    %490 = vmatprep.subr.bf16.mxu0 0
    %491 = vmatpush1.bf16.xpose.msra.mxu0 0
    %492 = vmatprep.subr.bf16.mxu0 0
    %493 = vmatpush1.bf16.xpose.msra.mxu0 0
    %494 = vmatprep.subr.bf16.mxu0 0
    %495 = vmatpush1.bf16.xpose.msra.mxu0 0
    %496 = vmatprep.subr.bf16.mxu0 0
    %497 = vmatpush1.bf16.xpose.msra.mxu0 0
    %498 = vmatprep.subr.bf16.mxu0 0
    %499 = vmatpush1.bf16.xpose.msra.mxu0 0
    %500 = vmatprep.subr.bf16.mxu0 0
    %501 = vmatpush1.bf16.xpose.msra.mxu0 0
    %502 = vmatprep.subr.bf16.mxu0 0
    %503 = vmatpush1.bf16.xpose.msra.mxu0 0
    %504 = vmatprep.subr.bf16.mxu0 0
    %505 = vmatpush1.bf16.xpose.msra.mxu0 0
    %506 = vmatprep.subr.bf16.mxu0 0
    %507 = vmatpush1.bf16.xpose.msra.mxu0 0
    %508 = vmatprep.subr.bf16.mxu0 0
    %509 = vmatpush1.bf16.xpose.msra.mxu0 0
    %510 = vmatprep.subr.bf16.mxu0 0
    %511 = vmatpush1.bf16.xpose.msra.mxu0 0
    %512 = vmatprep.subr.bf16.mxu0 0
    %513 = vmatpush1.bf16.xpose.msra.mxu0 0
    %514 = vmatprep.subr.bf16.mxu0 0
    %515 = vmatpush1.bf16.xpose.msra.mxu0 0
    %516 = vmatprep.subr.bf16.mxu0 0
    %517 = vmatpush1.bf16.xpose.msra.mxu0 0
    %518 = vmatprep.mubr.bf16.mxu0 0
    %519 = vmatmul.mubr.bf16.gmra.mrb[0].mxu0 %v481
    %v520 = vpop.f32.mrb[0].mxu0
    %v521 = vadd.f32 0.0, %v520
    %v522 = vpop.f32.mrb[0].mxu0
    %v523 = vpop.f32.mrb[0].mxu0
    %v524 = vpop.f32.mrb[0].mxu0
    %525 = vdwg.mxu0
    %527 = vrot.lane.b32.xlu0 %v475, 96
    %v528 = vpop.permute.xlu0 %527
    %v530 = vsel %vm479, %v475, 0
    %v533 = vsel %vm479, %v528, 0
    %535 = vmatprep.subr.bf16.mxu0 0
    %536 = vmatpush1.bf16.xpose.msra.mxu0 %v533
    %537 = vmatprep.subr.bf16.mxu0 0
    %538 = vmatpush1.bf16.xpose.msra.mxu0 0
    %539 = vmatprep.subr.bf16.mxu0 0
    %540 = vmatpush1.bf16.xpose.msra.mxu0 0
    %541 = vmatprep.subr.bf16.mxu0 0
    %542 = vmatpush1.bf16.xpose.msra.mxu0 0
    %543 = vmatprep.subr.bf16.mxu0 0
    %544 = vmatpush1.bf16.xpose.msra.mxu0 0
    %545 = vmatprep.subr.bf16.mxu0 0
    %546 = vmatpush1.bf16.xpose.msra.mxu0 0
    %547 = vmatprep.subr.bf16.mxu0 0
    %548 = vmatpush1.bf16.xpose.msra.mxu0 0
    %549 = vmatprep.subr.bf16.mxu0 0
    %550 = vmatpush1.bf16.xpose.msra.mxu0 0
    %551 = vmatprep.subr.bf16.mxu0 0
    %552 = vmatpush1.bf16.xpose.msra.mxu0 0
    %553 = vmatprep.subr.bf16.mxu0 0
    %554 = vmatpush1.bf16.xpose.msra.mxu0 0
    %555 = vmatprep.subr.bf16.mxu0 0
    %556 = vmatpush1.bf16.xpose.msra.mxu0 0
    %557 = vmatprep.subr.bf16.mxu0 0
    %558 = vmatpush1.bf16.xpose.msra.mxu0 0
    %559 = vmatprep.subr.bf16.mxu0 0
    %560 = vmatpush1.bf16.xpose.msra.mxu0 0
    %561 = vmatprep.subr.bf16.mxu0 0
    %562 = vmatpush1.bf16.xpose.msra.mxu0 0
    %563 = vmatprep.subr.bf16.mxu0 0
    %564 = vmatpush1.bf16.xpose.msra.mxu0 0
    %565 = vmatprep.subr.bf16.mxu0 0
    %566 = vmatpush1.bf16.xpose.msra.mxu0 0
    %567 = vmatprep.mubr.bf16.mxu0 0
    %568 = vmatmul.mubr.bf16.gmra.mrb[0].mxu0 %v530
    %v569 = vpop.f32.mrb[0].mxu0
    %v570 = vadd.f32 0.0, %v569
    %v571 = vpop.f32.mrb[0].mxu0
    %v572 = vpop.f32.mrb[0].mxu0
    %v573 = vpop.f32.mrb[0].mxu0
    %574 = vdwg.mxu0
    %v575 = vmul.f32 %v521, 0.25
    %v576 = vmul.f32 %v570, 0.25
    %vm577 = vcmask 64512
    %v578 = vsel %vm577, %v575, -inf
    %579 = vmax.xlane.f32.xlu0 %v578
    %v580 = vpop.xlane.xlu0 %579
    %v581 = vsel %vm577, %v576, -inf
    %582 = vmax.xlane.f32.xlu0 %v581
    %v583 = vpop.xlane.xlu0 %582
    %v584 = vsub.f32 %v575, %v580
    %v585 = vsub.f32 %v576, %v583
    %v586 = vmul.f32 %v584, 1.442695
    %v587 = vpow.pop %v586
    %v588 = vmul.f32 %v585, 1.442695
    %v589 = vpow.pop %v588
    %v590 = vsel %vm577, %v587, 0.0
    %591 = vadd.xlane.f32.xlu0 %v590
    %v592 = vpop.xlane.xlu0 %591
    %v593 = vsel %vm577, %v589, 0.0
    %594 = vadd.xlane.f32.xlu0 %v593
    %v595 = vpop.xlane.xlu0 %594
    %v596 = vrcp.pop %v592
    %v597 = vrcp.pop %v595
    %v598 = vmul.f32 %v587, %v596
    %v599 = vmul.f32 %v589, %v597
    %v600 = vpack.c.bf16 %v598, %v598
    %v601 = vpack.c.bf16 %v599, %v599
    %602 = vrot.lane.b32.xlu0 %v474, 64
    %v603 = vpop.permute.xlu0 %602
    %v605 = vsel %vm577, %v600, 0
    %vm607 = vcmask 1043456
    %v609 = vsel %vm607, %v603, 0
    %611 = vmatprep.subr.bf16.mxu0 0
    %612 = vmatpush1.bf16.msra.mxu0 %v609
    %613 = vmatprep.subr.bf16.mxu0 0
    %614 = vmatpush1.bf16.msra.mxu0 0
    %615 = vmatprep.subr.bf16.mxu0 0
    %616 = vmatpush1.bf16.msra.mxu0 0
    %617 = vmatprep.subr.bf16.mxu0 0
    %618 = vmatpush1.bf16.msra.mxu0 0
    %619 = vmatprep.subr.bf16.mxu0 0
    %620 = vmatpush1.bf16.msra.mxu0 0
    %621 = vmatprep.subr.bf16.mxu0 0
    %622 = vmatpush1.bf16.msra.mxu0 0
    %623 = vmatprep.subr.bf16.mxu0 0
    %624 = vmatpush1.bf16.msra.mxu0 0
    %625 = vmatprep.subr.bf16.mxu0 0
    %626 = vmatpush1.bf16.msra.mxu0 0
    %627 = vmatprep.subr.bf16.mxu0 0
    %628 = vmatpush1.bf16.msra.mxu0 0
    %629 = vmatprep.subr.bf16.mxu0 0
    %630 = vmatpush1.bf16.msra.mxu0 0
    %631 = vmatprep.subr.bf16.mxu0 0
    %632 = vmatpush1.bf16.msra.mxu0 0
    %633 = vmatprep.subr.bf16.mxu0 0
    %634 = vmatpush1.bf16.msra.mxu0 0
    %635 = vmatprep.subr.bf16.mxu0 0
    %636 = vmatpush1.bf16.msra.mxu0 0
    %637 = vmatprep.subr.bf16.mxu0 0
    %638 = vmatpush1.bf16.msra.mxu0 0
    %639 = vmatprep.subr.bf16.mxu0 0
    %640 = vmatpush1.bf16.msra.mxu0 0
    %641 = vmatprep.subr.bf16.mxu0 0
    %642 = vmatpush1.bf16.msra.mxu0 0
    %643 = vmatprep.mubr.bf16.mxu0 0
    %644 = vmatmul.mubr.bf16.gmra.mrb[0].mxu0 %v605
    %v645 = vpop.f32.mrb[0].mxu0
    %v646 = vadd.f32 0.0, %v645
    %v647 = vpop.f32.mrb[0].mxu0
    %v648 = vpop.f32.mrb[0].mxu0
    %v649 = vpop.f32.mrb[0].mxu0
    %650 = vdwg.mxu0
    %651 = vrot.lane.b32.xlu0 %v475, 64
    %v652 = vpop.permute.xlu0 %651
    %v654 = vsel %vm577, %v601, 0
    %v657 = vsel %vm607, %v652, 0
    %659 = vmatprep.subr.bf16.mxu0 0
    %660 = vmatpush1.bf16.msra.mxu0 %v657
    %661 = vmatprep.subr.bf16.mxu0 0
    %662 = vmatpush1.bf16.msra.mxu0 0
    %663 = vmatprep.subr.bf16.mxu0 0
    %664 = vmatpush1.bf16.msra.mxu0 0
    %665 = vmatprep.subr.bf16.mxu0 0
    %666 = vmatpush1.bf16.msra.mxu0 0
    %667 = vmatprep.subr.bf16.mxu0 0
    %668 = vmatpush1.bf16.msra.mxu0 0
    %669 = vmatprep.subr.bf16.mxu0 0
    %670 = vmatpush1.bf16.msra.mxu0 0
    %671 = vmatprep.subr.bf16.mxu0 0
    %672 = vmatpush1.bf16.msra.mxu0 0
    %673 = vmatprep.subr.bf16.mxu0 0
    %674 = vmatpush1.bf16.msra.mxu0 0
    %675 = vmatprep.subr.bf16.mxu0 0
    %676 = vmatpush1.bf16.msra.mxu0 0
    %677 = vmatprep.subr.bf16.mxu0 0
    %678 = vmatpush1.bf16.msra.mxu0 0
    %679 = vmatprep.subr.bf16.mxu0 0
    %680 = vmatpush1.bf16.msra.mxu0 0
    %681 = vmatprep.subr.bf16.mxu0 0
    %682 = vmatpush1.bf16.msra.mxu0 0
    %683 = vmatprep.subr.bf16.mxu0 0
    %684 = vmatpush1.bf16.msra.mxu0 0
    %685 = vmatprep.subr.bf16.mxu0 0
    %686 = vmatpush1.bf16.msra.mxu0 0
    %687 = vmatprep.subr.bf16.mxu0 0
    %688 = vmatpush1.bf16.msra.mxu0 0
    %689 = vmatprep.subr.bf16.mxu0 0
    %690 = vmatpush1.bf16.msra.mxu0 0
    %691 = vmatprep.mubr.bf16.mxu0 0
    %692 = vmatmul.mubr.bf16.gmra.mrb[0].mxu0 %v654
    %v693 = vpop.f32.mrb[0].mxu0
    %v694 = vadd.f32 0.0, %v693
    %v695 = vpop.f32.mrb[0].mxu0
    %v696 = vpop.f32.mrb[0].mxu0
    %v697 = vpop.f32.mrb[0].mxu0
    %698 = vdwg.mxu0
    %699 = vrot.lane.b32.xlu0 %v474, 112
    %v700 = vpop.permute.xlu0 %699
    %701 = vrot.lane.b32.xlu0 %v474, 80
    %v702 = vpop.permute.xlu0 %701
    %v704 = vsel %vm479, %v700, 0
    %v707 = vsel %vm479, %v702, 0
    %709 = vmatprep.subr.bf16.mxu0 0
    %710 = vmatpush1.bf16.xpose.msra.mxu0 %v707
    %711 = vmatprep.subr.bf16.mxu0 0
    %712 = vmatpush1.bf16.xpose.msra.mxu0 0
    %713 = vmatprep.subr.bf16.mxu0 0
    %714 = vmatpush1.bf16.xpose.msra.mxu0 0
    %715 = vmatprep.subr.bf16.mxu0 0
    %716 = vmatpush1.bf16.xpose.msra.mxu0 0
    %717 = vmatprep.subr.bf16.mxu0 0
    %718 = vmatpush1.bf16.xpose.msra.mxu0 0
    %719 = vmatprep.subr.bf16.mxu0 0
    %720 = vmatpush1.bf16.xpose.msra.mxu0 0
    %721 = vmatprep.subr.bf16.mxu0 0
    %722 = vmatpush1.bf16.xpose.msra.mxu0 0
    %723 = vmatprep.subr.bf16.mxu0 0
    %724 = vmatpush1.bf16.xpose.msra.mxu0 0
    %725 = vmatprep.subr.bf16.mxu0 0
    %726 = vmatpush1.bf16.xpose.msra.mxu0 0
    %727 = vmatprep.subr.bf16.mxu0 0
    %728 = vmatpush1.bf16.xpose.msra.mxu0 0
    %729 = vmatprep.subr.bf16.mxu0 0
    %730 = vmatpush1.bf16.xpose.msra.mxu0 0
    %731 = vmatprep.subr.bf16.mxu0 0
    %732 = vmatpush1.bf16.xpose.msra.mxu0 0
    %733 = vmatprep.subr.bf16.mxu0 0
    %734 = vmatpush1.bf16.xpose.msra.mxu0 0
    %735 = vmatprep.subr.bf16.mxu0 0
    %736 = vmatpush1.bf16.xpose.msra.mxu0 0
    %737 = vmatprep.subr.bf16.mxu0 0
    %738 = vmatpush1.bf16.xpose.msra.mxu0 0
    %739 = vmatprep.subr.bf16.mxu0 0
    %740 = vmatpush1.bf16.xpose.msra.mxu0 0
    %741 = vmatprep.mubr.bf16.mxu0 0
    %742 = vmatmul.mubr.bf16.gmra.mrb[0].mxu0 %v704
    %v743 = vpop.f32.mrb[0].mxu0
    %v744 = vadd.f32 0.0, %v743
    %v745 = vpop.f32.mrb[0].mxu0
    %v746 = vpop.f32.mrb[0].mxu0
    %v747 = vpop.f32.mrb[0].mxu0
    %748 = vdwg.mxu0
    %749 = vrot.lane.b32.xlu0 %v475, 112
    %v750 = vpop.permute.xlu0 %749
    %751 = vrot.lane.b32.xlu0 %v475, 80
    %v752 = vpop.permute.xlu0 %751
    %v754 = vsel %vm479, %v750, 0
    %v757 = vsel %vm479, %v752, 0
    %759 = vmatprep.subr.bf16.mxu0 0
    %760 = vmatpush1.bf16.xpose.msra.mxu0 %v757
    %761 = vmatprep.subr.bf16.mxu0 0
    %762 = vmatpush1.bf16.xpose.msra.mxu0 0
    %763 = vmatprep.subr.bf16.mxu0 0
    %764 = vmatpush1.bf16.xpose.msra.mxu0 0
    %765 = vmatprep.subr.bf16.mxu0 0
    %766 = vmatpush1.bf16.xpose.msra.mxu0 0
    %767 = vmatprep.subr.bf16.mxu0 0
    %768 = vmatpush1.bf16.xpose.msra.mxu0 0
    %769 = vmatprep.subr.bf16.mxu0 0
    %770 = vmatpush1.bf16.xpose.msra.mxu0 0
    %771 = vmatprep.subr.bf16.mxu0 0
    %772 = vmatpush1.bf16.xpose.msra.mxu0 0
    %773 = vmatprep.subr.bf16.mxu0 0
    %774 = vmatpush1.bf16.xpose.msra.mxu0 0
    %775 = vmatprep.subr.bf16.mxu0 0
    %776 = vmatpush1.bf16.xpose.msra.mxu0 0
    %777 = vmatprep.subr.bf16.mxu0 0
    %778 = vmatpush1.bf16.xpose.msra.mxu0 0
    %779 = vmatprep.subr.bf16.mxu0 0
    %780 = vmatpush1.bf16.xpose.msra.mxu0 0
    %781 = vmatprep.subr.bf16.mxu0 0
    %782 = vmatpush1.bf16.xpose.msra.mxu0 0
    %783 = vmatprep.subr.bf16.mxu0 0
    %784 = vmatpush1.bf16.xpose.msra.mxu0 0
    %785 = vmatprep.subr.bf16.mxu0 0
    %786 = vmatpush1.bf16.xpose.msra.mxu0 0
    %787 = vmatprep.subr.bf16.mxu0 0
    %788 = vmatpush1.bf16.xpose.msra.mxu0 0
    %789 = vmatprep.subr.bf16.mxu0 0
    %790 = vmatpush1.bf16.xpose.msra.mxu0 0
    %791 = vmatprep.mubr.bf16.mxu0 0
    %792 = vmatmul.mubr.bf16.gmra.mrb[0].mxu0 %v754
    %v793 = vpop.f32.mrb[0].mxu0
    %v794 = vadd.f32 0.0, %v793
    %v795 = vpop.f32.mrb[0].mxu0
    %v796 = vpop.f32.mrb[0].mxu0
    %v797 = vpop.f32.mrb[0].mxu0
    %798 = vdwg.mxu0
    %v799 = vmul.f32 %v744, 0.25
    %v800 = vmul.f32 %v794, 0.25
    %v801 = vsel %vm577, %v799, -inf
    %802 = vmax.xlane.f32.xlu0 %v801
    %v803 = vpop.xlane.xlu0 %802
    %v804 = vsel %vm577, %v800, -inf
    %805 = vmax.xlane.f32.xlu0 %v804
    %v806 = vpop.xlane.xlu0 %805
    %v807 = vsub.f32 %v799, %v803
    %v808 = vsub.f32 %v800, %v806
    %v809 = vmul.f32 %v807, 1.442695
    %v810 = vpow.pop %v809
    %v811 = vmul.f32 %v808, 1.442695
    %v812 = vpow.pop %v811
    %v813 = vsel %vm577, %v810, 0.0
    %814 = vadd.xlane.f32.xlu0 %v813
    %v815 = vpop.xlane.xlu0 %814
    %v816 = vsel %vm577, %v812, 0.0
    %817 = vadd.xlane.f32.xlu0 %v816
    %v818 = vpop.xlane.xlu0 %817
    %v819 = vrcp.pop %v815
    %v820 = vrcp.pop %v818
    %v821 = vmul.f32 %v810, %v819
    %v822 = vmul.f32 %v812, %v820
    %v823 = vpack.c.bf16 %v821, %v821
    %v824 = vpack.c.bf16 %v822, %v822
    %825 = vrot.lane.b32.xlu0 %v474, 48
    %v826 = vpop.permute.xlu0 %825
    %v828 = vsel %vm577, %v823, 0
    %v831 = vsel %vm607, %v826, 0
    %833 = vmatprep.subr.bf16.mxu0 0
    %834 = vmatpush1.bf16.msra.mxu0 %v831
    %835 = vmatprep.subr.bf16.mxu0 0
    %836 = vmatpush1.bf16.msra.mxu0 0
    %837 = vmatprep.subr.bf16.mxu0 0
    %838 = vmatpush1.bf16.msra.mxu0 0
    %839 = vmatprep.subr.bf16.mxu0 0
    %840 = vmatpush1.bf16.msra.mxu0 0
    %841 = vmatprep.subr.bf16.mxu0 0
    %842 = vmatpush1.bf16.msra.mxu0 0
    %843 = vmatprep.subr.bf16.mxu0 0
    %844 = vmatpush1.bf16.msra.mxu0 0
    %845 = vmatprep.subr.bf16.mxu0 0
    %846 = vmatpush1.bf16.msra.mxu0 0
    %847 = vmatprep.subr.bf16.mxu0 0
    %848 = vmatpush1.bf16.msra.mxu0 0
    %849 = vmatprep.subr.bf16.mxu0 0
    %850 = vmatpush1.bf16.msra.mxu0 0
    %851 = vmatprep.subr.bf16.mxu0 0
    %852 = vmatpush1.bf16.msra.mxu0 0
    %853 = vmatprep.subr.bf16.mxu0 0
    %854 = vmatpush1.bf16.msra.mxu0 0
    %855 = vmatprep.subr.bf16.mxu0 0
    %856 = vmatpush1.bf16.msra.mxu0 0
    %857 = vmatprep.subr.bf16.mxu0 0
    %858 = vmatpush1.bf16.msra.mxu0 0
    %859 = vmatprep.subr.bf16.mxu0 0
    %860 = vmatpush1.bf16.msra.mxu0 0
    %861 = vmatprep.subr.bf16.mxu0 0
    %862 = vmatpush1.bf16.msra.mxu0 0
    %863 = vmatprep.subr.bf16.mxu0 0
    %864 = vmatpush1.bf16.msra.mxu0 0
    %865 = vmatprep.mubr.bf16.mxu0 0
    %866 = vmatmul.mubr.bf16.gmra.mrb[0].mxu0 %v828
    %v867 = vpop.f32.mrb[0].mxu0
    %v868 = vadd.f32 0.0, %v867
    %v869 = vpop.f32.mrb[0].mxu0
    %v870 = vpop.f32.mrb[0].mxu0
    %v871 = vpop.f32.mrb[0].mxu0
    %872 = vdwg.mxu0
    %873 = vrot.lane.b32.xlu0 %v475, 48
    %v874 = vpop.permute.xlu0 %873
    %v876 = vsel %vm577, %v824, 0
    %v879 = vsel %vm607, %v874, 0
    %881 = vmatprep.subr.bf16.mxu0 0
    %882 = vmatpush1.bf16.msra.mxu0 %v879
    %883 = vmatprep.subr.bf16.mxu0 0
    %884 = vmatpush1.bf16.msra.mxu0 0
    %885 = vmatprep.subr.bf16.mxu0 0
    %886 = vmatpush1.bf16.msra.mxu0 0
    %887 = vmatprep.subr.bf16.mxu0 0
    %888 = vmatpush1.bf16.msra.mxu0 0
    %889 = vmatprep.subr.bf16.mxu0 0
    %890 = vmatpush1.bf16.msra.mxu0 0
    %891 = vmatprep.subr.bf16.mxu0 0
    %892 = vmatpush1.bf16.msra.mxu0 0
    %893 = vmatprep.subr.bf16.mxu0 0
    %894 = vmatpush1.bf16.msra.mxu0 0
    %895 = vmatprep.subr.bf16.mxu0 0
    %896 = vmatpush1.bf16.msra.mxu0 0
    %897 = vmatprep.subr.bf16.mxu0 0
    %898 = vmatpush1.bf16.msra.mxu0 0
    %899 = vmatprep.subr.bf16.mxu0 0
    %900 = vmatpush1.bf16.msra.mxu0 0
    %901 = vmatprep.subr.bf16.mxu0 0
    %902 = vmatpush1.bf16.msra.mxu0 0
    %903 = vmatprep.subr.bf16.mxu0 0
    %904 = vmatpush1.bf16.msra.mxu0 0
    %905 = vmatprep.subr.bf16.mxu0 0
    %906 = vmatpush1.bf16.msra.mxu0 0
    %907 = vmatprep.subr.bf16.mxu0 0
    %908 = vmatpush1.bf16.msra.mxu0 0
    %909 = vmatprep.subr.bf16.mxu0 0
    %910 = vmatpush1.bf16.msra.mxu0 0
    %911 = vmatprep.subr.bf16.mxu0 0
    %912 = vmatpush1.bf16.msra.mxu0 0
    %913 = vmatprep.mubr.bf16.mxu0 0
    %914 = vmatmul.mubr.bf16.gmra.mrb[0].mxu0 %v876
    %v915 = vpop.f32.mrb[0].mxu0
    %v916 = vadd.f32 0.0, %v915
    %v917 = vpop.f32.mrb[0].mxu0
    %v918 = vpop.f32.mrb[0].mxu0
    %v919 = vpop.f32.mrb[0].mxu0
    %920 = vdwg.mxu0
    %923 = vrot.lane.b32.xlu0 %v868, 16
    %v924 = vpop.permute.xlu0 %923
    %925 = vrot.lane.b32.xlu0 %v916, 16
    %v926 = vpop.permute.xlu0 %925
    %v929 = vsel %vm479, %v646, %v924
    %v930 = vsel %vm479, %v694, %v926
    %v931 = vpack.c.bf16 %v930, %v929
    %v932 = vld [vmem:[%s12] sm:$0xf]
    %v933 = vld [vmem:[%s12 + $0x4] sm:$0xf]
    %v934 = vld [vmem:[%s12 + $0x8] sm:$0xf]
    %v935 = vld [vmem:[%s12 + $0xc] sm:$0xf]
    %v936 = vld [vmem:[%s13] sm:$0x1]
    %v938 = vlaneseq
    %v939 = vshrl.u32 %v938, 7
    %v940 = vsub.s32 0, %v939
    %v941 = vrot.slane %v936, %v940
    %v947 = vunpack.c.l.b16 %v932
    %v948 = vunpack.c.l.b16 %v933
    %v949 = vunpack.c.l.b16 %v934
    %v950 = vunpack.c.l.b16 %v935
    %v951 = vpack.c.b16 %v948, %v947
    %v952 = vpack.c.b16 %v950, %v949
    %v956 = vsel %vm311, %v931, 0
    %958 = vmatprep.subr.bf16.mxu0 0
    %959 = vmatpush1.bf16.msra.mxu0 %v951
    %960 = vmatprep.subr.bf16.mxu0 0
    %961 = vmatpush1.bf16.msra.mxu0 %v952
    %962 = vmatprep.subr.bf16.mxu0 0
    %963 = vmatpush1.bf16.msra.mxu0 0
    %964 = vmatprep.subr.bf16.mxu0 0
    %965 = vmatpush1.bf16.msra.mxu0 0
    %966 = vmatprep.subr.bf16.mxu0 0
    %967 = vmatpush1.bf16.msra.mxu0 0
    %968 = vmatprep.subr.bf16.mxu0 0
    %969 = vmatpush1.bf16.msra.mxu0 0
    %970 = vmatprep.subr.bf16.mxu0 0
    %971 = vmatpush1.bf16.msra.mxu0 0
    %972 = vmatprep.subr.bf16.mxu0 0
    %973 = vmatpush1.bf16.msra.mxu0 0
    %974 = vmatprep.subr.bf16.mxu0 0
    %975 = vmatpush1.bf16.msra.mxu0 0
    %976 = vmatprep.subr.bf16.mxu0 0
    %977 = vmatpush1.bf16.msra.mxu0 0
    %978 = vmatprep.subr.bf16.mxu0 0
    %979 = vmatpush1.bf16.msra.mxu0 0
    %980 = vmatprep.subr.bf16.mxu0 0
    %981 = vmatpush1.bf16.msra.mxu0 0
    %982 = vmatprep.subr.bf16.mxu0 0
    %983 = vmatpush1.bf16.msra.mxu0 0
    %984 = vmatprep.subr.bf16.mxu0 0
    %985 = vmatpush1.bf16.msra.mxu0 0
    %986 = vmatprep.subr.bf16.mxu0 0
    %987 = vmatpush1.bf16.msra.mxu0 0
    %988 = vmatprep.subr.bf16.mxu0 0
    %989 = vmatpush1.bf16.msra.mxu0 0
    %990 = vmatprep.mubr.bf16.mxu0 0
    %991 = vmatmul.mubr.bf16.gmra.mrb[0].mxu0 %v956
    %v992 = vpop.f32.mrb[0].mxu0
    %v993 = vadd.f32 %v941, %v992
    %v994 = vpop.f32.mrb[0].mxu0
    %v995 = vpop.f32.mrb[0].mxu0
    %v996 = vadd.f32 %v941, %v995
    %v997 = vpop.f32.mrb[0].mxu0
    %998 = vdwg.mxu0
    %v999 = vadd.f32 %v404, %v993
    %v1000 = vadd.f32 %v405, %v996
    %v1001 = vld [vmem:[%s14] sm:$0x1]
    %v1002 = vld [vmem:[%s15] sm:$0x1]
    %v1003 = vsel %vm311, %v999, 0.0
    %1004 = vadd.xlane.f32.xlu0 %v1003
    %v1005 = vpop.xlane.xlu0 %1004
    %v1006 = vsel %vm311, %v1000, 0.0
    %1007 = vadd.xlane.f32.xlu0 %v1006
    %v1008 = vpop.xlane.xlu0 %1007
    %v1009 = vmul.f32 %v1005, %v366
    %v1010 = vmul.f32 %v1008, %v366
    %v1011 = vsub.f32 %v999, %v1009
    %v1012 = vsub.f32 %v1000, %v1010
    %v1013 = vmul.f32 %v1011, %v1011
    %v1014 = vmul.f32 %v1012, %v1012
    %v1015 = vsel %vm311, %v1013, 0.0
    %1016 = vadd.xlane.f32.xlu0 %v1015
    %v1017 = vpop.xlane.xlu0 %1016
    %v1018 = vsel %vm311, %v1014, 0.0
    %1019 = vadd.xlane.f32.xlu0 %v1018
    %v1020 = vpop.xlane.xlu0 %1019
    %v1021 = vmul.f32 %v1017, %v366
    %v1022 = vmul.f32 %v1020, %v366
    %v1023 = vadd.f32 %v1021, 1e-05
    %v1024 = vadd.f32 %v1022, 1e-05
    %v1025 = vrsqrt.pop %v1023
    %v1026 = vrsqrt.pop %v1024
    %v1027 = vmul.f32 %v1011, %v1025
    %v1028 = vmul.f32 %v1012, %v1026
    %v1030 = vlaneseq
    %v1031 = vshrl.u32 %v1030, 7
    %v1032 = vsub.s32 0, %v1031
    %v1033 = vrot.slane %v1001, %v1032
    %v1035 = vmul.f32 %v1027, %v1033
    %v1036 = vmul.f32 %v1028, %v1033
    %v1038 = vlaneseq
    %v1039 = vshrl.u32 %v1038, 7
    %v1040 = vsub.s32 0, %v1039
    %v1041 = vrot.slane %v1002, %v1040
    %v1043 = vadd.f32 %v1035, %v1041
    %v1044 = vadd.f32 %v1036, %v1041
    %v1045 = vpack.c.bf16 %v1044, %v1043
    %v1046 = vld [vmem:[%s16] sm:$0xf]
    %v1047 = vld [vmem:[%s16 + $0x4] sm:$0xf]
    %v1048 = vld [vmem:[%s16 + $0x8] sm:$0xf]
    %v1049 = vld [vmem:[%s16 + $0xc] sm:$0xf]
    %v1050 = vld [vmem:[%s17] sm:$0x1]
    %v1052 = vlaneseq
    %v1053 = vshrl.u32 %v1052, 7
    %v1054 = vsub.s32 0, %v1053
    %v1055 = vrot.slane %v1050, %v1054
    %v1061 = vunpack.c.l.b16 %v1046
    %v1062 = vunpack.c.l.b16 %v1047
    %v1063 = vunpack.c.l.b16 %v1048
    %v1064 = vunpack.c.l.b16 %v1049
    %v1065 = vpack.c.b16 %v1062, %v1061
    %v1066 = vpack.c.b16 %v1064, %v1063
    %v1070 = vsel %vm311, %v1045, 0
    %1072 = vmatprep.subr.bf16.mxu0 0
    %1073 = vmatpush1.bf16.msra.mxu0 %v1065
    %1074 = vmatprep.subr.bf16.mxu0 0
    %1075 = vmatpush1.bf16.msra.mxu0 %v1066
    %1076 = vmatprep.subr.bf16.mxu0 0
    %1077 = vmatpush1.bf16.msra.mxu0 0
    %1078 = vmatprep.subr.bf16.mxu0 0
    %1079 = vmatpush1.bf16.msra.mxu0 0
    %1080 = vmatprep.subr.bf16.mxu0 0
    %1081 = vmatpush1.bf16.msra.mxu0 0
    %1082 = vmatprep.subr.bf16.mxu0 0
    %1083 = vmatpush1.bf16.msra.mxu0 0
    %1084 = vmatprep.subr.bf16.mxu0 0
    %1085 = vmatpush1.bf16.msra.mxu0 0
    %1086 = vmatprep.subr.bf16.mxu0 0
    %1087 = vmatpush1.bf16.msra.mxu0 0
    %1088 = vmatprep.subr.bf16.mxu0 0
    %1089 = vmatpush1.bf16.msra.mxu0 0
    %1090 = vmatprep.subr.bf16.mxu0 0
    %1091 = vmatpush1.bf16.msra.mxu0 0
    %1092 = vmatprep.subr.bf16.mxu0 0
    %1093 = vmatpush1.bf16.msra.mxu0 0
    %1094 = vmatprep.subr.bf16.mxu0 0
    %1095 = vmatpush1.bf16.msra.mxu0 0
    %1096 = vmatprep.subr.bf16.mxu0 0
    %1097 = vmatpush1.bf16.msra.mxu0 0
    %1098 = vmatprep.subr.bf16.mxu0 0
    %1099 = vmatpush1.bf16.msra.mxu0 0
    %1100 = vmatprep.subr.bf16.mxu0 0
    %1101 = vmatpush1.bf16.msra.mxu0 0
    %1102 = vmatprep.subr.bf16.mxu0 0
    %1103 = vmatpush1.bf16.msra.mxu0 0
    %1104 = vmatprep.mubr.bf16.mxu0 0
    %1105 = vmatmul.mubr.bf16.gmra.mrb[0].mxu0 %v1070
    %v1106 = vpop.f32.mrb[0].mxu0
    %v1107 = vadd.f32 %v1055, %v1106
    %v1108 = vpop.f32.mrb[0].mxu0
    %v1109 = vpop.f32.mrb[0].mxu0
    %v1110 = vadd.f32 %v1055, %v1109
    %v1111 = vpop.f32.mrb[0].mxu0
    %1112 = vdwg.mxu0
    %v1113 = vmax.f32 %v1107, 0.0
    %v1114 = vmax.f32 %v1110, 0.0
    %v1115 = vpack.c.bf16 %v1114, %v1113
    %v1116 = vld [vmem:[%s18] sm:$0xf]
    %v1117 = vld [vmem:[%s18 + $0x4] sm:$0xf]
    %v1118 = vld [vmem:[%s18 + $0x8] sm:$0xf]
    %v1119 = vld [vmem:[%s18 + $0xc] sm:$0xf]
    %v1120 = vld [vmem:[%s18 + $0x10] sm:$0xf]
    %v1121 = vld [vmem:[%s18 + $0x14] sm:$0xf]
    %v1122 = vld [vmem:[%s18 + $0x18] sm:$0xf]
    %v1123 = vld [vmem:[%s18 + $0x1c] sm:$0xf]
    %v1124 = vld [vmem:[%s19] sm:$0x1]
    %v1126 = vlaneseq
    %v1127 = vshrl.u32 %v1126, 7
    %v1128 = vsub.s32 0, %v1127
    %v1129 = vrot.slane %v1124, %v1128
    %v1139 = vunpack.c.l.b16 %v1116
    %v1140 = vunpack.c.l.b16 %v1117
    %v1141 = vunpack.c.l.b16 %v1118
    %v1142 = vunpack.c.l.b16 %v1119
    %v1143 = vunpack.c.l.b16 %v1120
    %v1144 = vunpack.c.l.b16 %v1121
    %v1145 = vunpack.c.l.b16 %v1122
    %v1146 = vunpack.c.l.b16 %v1123
    %v1147 = vpack.c.b16 %v1140, %v1139
    %v1148 = vpack.c.b16 %v1142, %v1141
    %v1149 = vpack.c.b16 %v1144, %v1143
    %v1150 = vpack.c.b16 %v1146, %v1145
    %vm1155 = vcmask 523264
    %v1157 = vsel %vm1155, %v1115, 0
    %1159 = vmatprep.subr.bf16.mxu0 0
    %1160 = vmatpush1.bf16.msra.mxu0 %v1147
    %1161 = vmatprep.subr.bf16.mxu0 0
    %1162 = vmatpush1.bf16.msra.mxu0 %v1148
    %1163 = vmatprep.subr.bf16.mxu0 0
    %1164 = vmatpush1.bf16.msra.mxu0 %v1149
    %1165 = vmatprep.subr.bf16.mxu0 0
    %1166 = vmatpush1.bf16.msra.mxu0 %v1150
    %1167 = vmatprep.subr.bf16.mxu0 0
    %1168 = vmatpush1.bf16.msra.mxu0 0
    %1169 = vmatprep.subr.bf16.mxu0 0
    %1170 = vmatpush1.bf16.msra.mxu0 0
    %1171 = vmatprep.subr.bf16.mxu0 0
    %1172 = vmatpush1.bf16.msra.mxu0 0
    %1173 = vmatprep.subr.bf16.mxu0 0
    %1174 = vmatpush1.bf16.msra.mxu0 0
    %1175 = vmatprep.subr.bf16.mxu0 0
    %1176 = vmatpush1.bf16.msra.mxu0 0
    %1177 = vmatprep.subr.bf16.mxu0 0
    %1178 = vmatpush1.bf16.msra.mxu0 0
    %1179 = vmatprep.subr.bf16.mxu0 0
    %1180 = vmatpush1.bf16.msra.mxu0 0
    %1181 = vmatprep.subr.bf16.mxu0 0
    %1182 = vmatpush1.bf16.msra.mxu0 0
    %1183 = vmatprep.subr.bf16.mxu0 0
    %1184 = vmatpush1.bf16.msra.mxu0 0
    %1185 = vmatprep.subr.bf16.mxu0 0
    %1186 = vmatpush1.bf16.msra.mxu0 0
    %1187 = vmatprep.subr.bf16.mxu0 0
    %1188 = vmatpush1.bf16.msra.mxu0 0
    %1189 = vmatprep.subr.bf16.mxu0 0
    %1190 = vmatpush1.bf16.msra.mxu0 0
    %1191 = vmatprep.mubr.bf16.mxu0 0
    %1192 = vmatmul.mubr.bf16.gmra.mrb[0].mxu0 %v1157
    %v1193 = vpop.f32.mrb[0].mxu0
    %v1194 = vadd.f32 %v1129, %v1193
    %v1195 = vpop.f32.mrb[0].mxu0
    %v1196 = vpop.f32.mrb[0].mxu0
    %v1197 = vadd.f32 %v1129, %v1196
    %v1198 = vpop.f32.mrb[0].mxu0
    %1199 = vdwg.mxu0
    %v1200 = vadd.f32 %v1043, %v1194
    %v1201 = vadd.f32 %v1044, %v1197
    %v1202 = vld [vmem:[%s20] sm:$0x1]
    %v1203 = vld [vmem:[%s21] sm:$0x1]
    %v1204 = vsel %vm311, %v1200, 0.0
    %1205 = vadd.xlane.f32.xlu0 %v1204
    %v1206 = vpop.xlane.xlu0 %1205
    %v1207 = vsel %vm311, %v1201, 0.0
    %1208 = vadd.xlane.f32.xlu0 %v1207
    %v1209 = vpop.xlane.xlu0 %1208
    %v1210 = vmul.f32 %v1206, %v366
    %v1211 = vmul.f32 %v1209, %v366
    %v1212 = vsub.f32 %v1200, %v1210
    %v1213 = vsub.f32 %v1201, %v1211
    %v1214 = vmul.f32 %v1212, %v1212
    %v1215 = vmul.f32 %v1213, %v1213
    %v1216 = vsel %vm311, %v1214, 0.0
    %1217 = vadd.xlane.f32.xlu0 %v1216
    %v1218 = vpop.xlane.xlu0 %1217
    %v1219 = vsel %vm311, %v1215, 0.0
    %1220 = vadd.xlane.f32.xlu0 %v1219
    %v1221 = vpop.xlane.xlu0 %1220
    %v1222 = vmul.f32 %v1218, %v366
    %v1223 = vmul.f32 %v1221, %v366
    %v1224 = vadd.f32 %v1222, 1e-05
    %v1225 = vadd.f32 %v1223, 1e-05
    %v1226 = vrsqrt.pop %v1224
    %v1227 = vrsqrt.pop %v1225
    %v1228 = vmul.f32 %v1212, %v1226
    %v1229 = vmul.f32 %v1213, %v1227
    %v1231 = vlaneseq
    %v1232 = vshrl.u32 %v1231, 7
    %v1233 = vsub.s32 0, %v1232
    %v1234 = vrot.slane %v1202, %v1233
    %v1236 = vmul.f32 %v1228, %v1234
    %v1237 = vmul.f32 %v1229, %v1234
    %v1239 = vlaneseq
    %v1240 = vshrl.u32 %v1239, 7
    %v1241 = vsub.s32 0, %v1240
    %v1242 = vrot.slane %v1203, %v1241
    %v1244 = vadd.f32 %v1236, %v1242
    %v1245 = vadd.f32 %v1237, %v1242
    %v1246 = vpack.c.bf16 %v1245, %v1244
    %s1247 = scalar_lea.vmem %s10, 16
    %v1248 = vld [vmem:[%s1247] sm:$0xf]
    %v1249 = vld [vmem:[%s1247 + $0x4] sm:$0xf]
    %v1250 = vld [vmem:[%s1247 + $0x8] sm:$0xf]
    %v1251 = vld [vmem:[%s1247 + $0xc] sm:$0xf]
    %s1252 = scalar_lea.vmem [#allocation14], 1
    %v1253 = vld [vmem:[%s1252] sm:$0x1]
    %v1255 = vlaneseq
    %v1256 = vshrl.u32 %v1255, 7
    %v1257 = vsub.s32 0, %v1256
    %v1258 = vrot.slane %v1253, %v1257
    %v1264 = vunpack.c.l.b16 %v1248
    %v1265 = vunpack.c.l.b16 %v1249
    %v1266 = vunpack.c.l.b16 %v1250
    %v1267 = vunpack.c.l.b16 %v1251
    %v1268 = vpack.c.b16 %v1265, %v1264
    %v1269 = vpack.c.b16 %v1267, %v1266
    %v1273 = vsel %vm311, %v1246, 0
    %1275 = vmatprep.subr.bf16.mxu0 0
    %1276 = vmatpush1.bf16.msra.mxu0 %v1268
    %1277 = vmatprep.subr.bf16.mxu0 0
    %1278 = vmatpush1.bf16.msra.mxu0 %v1269
    %1279 = vmatprep.subr.bf16.mxu0 0
    %1280 = vmatpush1.bf16.msra.mxu0 0
    %1281 = vmatprep.subr.bf16.mxu0 0
    %1282 = vmatpush1.bf16.msra.mxu0 0
    %1283 = vmatprep.subr.bf16.mxu0 0
    %1284 = vmatpush1.bf16.msra.mxu0 0
    %1285 = vmatprep.subr.bf16.mxu0 0
    %1286 = vmatpush1.bf16.msra.mxu0 0
    %1287 = vmatprep.subr.bf16.mxu0 0
    %1288 = vmatpush1.bf16.msra.mxu0 0
    %1289 = vmatprep.subr.bf16.mxu0 0
    %1290 = vmatpush1.bf16.msra.mxu0 0
    %1291 = vmatprep.subr.bf16.mxu0 0
    %1292 = vmatpush1.bf16.msra.mxu0 0
    %1293 = vmatprep.subr.bf16.mxu0 0
    %1294 = vmatpush1.bf16.msra.mxu0 0
    %1295 = vmatprep.subr.bf16.mxu0 0
    %1296 = vmatpush1.bf16.msra.mxu0 0
    %1297 = vmatprep.subr.bf16.mxu0 0
    %1298 = vmatpush1.bf16.msra.mxu0 0
    %1299 = vmatprep.subr.bf16.mxu0 0
    %1300 = vmatpush1.bf16.msra.mxu0 0
    %1301 = vmatprep.subr.bf16.mxu0 0
    %1302 = vmatpush1.bf16.msra.mxu0 0
    %1303 = vmatprep.subr.bf16.mxu0 0
    %1304 = vmatpush1.bf16.msra.mxu0 0
    %1305 = vmatprep.subr.bf16.mxu0 0
    %1306 = vmatpush1.bf16.msra.mxu0 0
    %1307 = vmatprep.mubr.bf16.mxu0 0
    %1308 = vmatmul.mubr.bf16.gmra.mrb[0].mxu0 %v1273
    %v1309 = vpop.f32.mrb[0].mxu0
    %v1310 = vadd.f32 %v1258, %v1309
    %v1311 = vpop.f32.mrb[0].mxu0
    %v1312 = vpop.f32.mrb[0].mxu0
    %v1313 = vadd.f32 %v1258, %v1312
    %v1314 = vpop.f32.mrb[0].mxu0
    %1315 = vdwg.mxu0
    %v1316 = vpack.c.bf16 %v1310, %v1310
    %v1317 = vpack.c.bf16 %v1313, %v1313
    %1319 = vrot.lane.b32.xlu0 %v1316, 96
    %v1320 = vpop.permute.xlu0 %1319
    %v1322 = vsel %vm479, %v1316, 0
    %v1325 = vsel %vm479, %v1320, 0
    %1327 = vmatprep.subr.bf16.mxu0 0
    %1328 = vmatpush1.bf16.xpose.msra.mxu0 %v1325
    %1329 = vmatprep.subr.bf16.mxu0 0
    %1330 = vmatpush1.bf16.xpose.msra.mxu0 0
    %1331 = vmatprep.subr.bf16.mxu0 0
    %1332 = vmatpush1.bf16.xpose.msra.mxu0 0
    %1333 = vmatprep.subr.bf16.mxu0 0
    %1334 = vmatpush1.bf16.xpose.msra.mxu0 0
    %1335 = vmatprep.subr.bf16.mxu0 0
    %1336 = vmatpush1.bf16.xpose.msra.mxu0 0
    %1337 = vmatprep.subr.bf16.mxu0 0
    %1338 = vmatpush1.bf16.xpose.msra.mxu0 0
    %1339 = vmatprep.subr.bf16.mxu0 0
    %1340 = vmatpush1.bf16.xpose.msra.mxu0 0
    %1341 = vmatprep.subr.bf16.mxu0 0
    %1342 = vmatpush1.bf16.xpose.msra.mxu0 0
    %1343 = vmatprep.subr.bf16.mxu0 0
    %1344 = vmatpush1.bf16.xpose.msra.mxu0 0
    %1345 = vmatprep.subr.bf16.mxu0 0
    %1346 = vmatpush1.bf16.xpose.msra.mxu0 0
    %1347 = vmatprep.subr.bf16.mxu0 0
    %1348 = vmatpush1.bf16.xpose.msra.mxu0 0
    %1349 = vmatprep.subr.bf16.mxu0 0
    %1350 = vmatpush1.bf16.xpose.msra.mxu0 0
    %1351 = vmatprep.subr.bf16.mxu0 0
    %1352 = vmatpush1.bf16.xpose.msra.mxu0 0
    %1353 = vmatprep.subr.bf16.mxu0 0
    %1354 = vmatpush1.bf16.xpose.msra.mxu0 0
    %1355 = vmatprep.subr.bf16.mxu0 0
    %1356 = vmatpush1.bf16.xpose.msra.mxu0 0
    %1357 = vmatprep.subr.bf16.mxu0 0
    %1358 = vmatpush1.bf16.xpose.msra.mxu0 0
    %1359 = vmatprep.mubr.bf16.mxu0 0
    %1360 = vmatmul.mubr.bf16.gmra.mrb[0].mxu0 %v1322
    %v1361 = vpop.f32.mrb[0].mxu0
    %v1362 = vadd.f32 0.0, %v1361
    %v1363 = vpop.f32.mrb[0].mxu0
    %v1364 = vpop.f32.mrb[0].mxu0
    %v1365 = vpop.f32.mrb[0].mxu0
    %1366 = vdwg.mxu0
    %1368 = vrot.lane.b32.xlu0 %v1317, 96
    %v1369 = vpop.permute.xlu0 %1368
    %v1371 = vsel %vm479, %v1317, 0
    %v1374 = vsel %vm479, %v1369, 0
    %1376 = vmatprep.subr.bf16.mxu0 0
    %1377 = vmatpush1.bf16.xpose.msra.mxu0 %v1374
    %1378 = vmatprep.subr.bf16.mxu0 0
    %1379 = vmatpush1.bf16.xpose.msra.mxu0 0
    %1380 = vmatprep.subr.bf16.mxu0 0
    %1381 = vmatpush1.bf16.xpose.msra.mxu0 0
    %1382 = vmatprep.subr.bf16.mxu0 0
    %1383 = vmatpush1.bf16.xpose.msra.mxu0 0
    %1384 = vmatprep.subr.bf16.mxu0 0
    %1385 = vmatpush1.bf16.xpose.msra.mxu0 0
    %1386 = vmatprep.subr.bf16.mxu0 0
    %1387 = vmatpush1.bf16.xpose.msra.mxu0 0
    %1388 = vmatprep.subr.bf16.mxu0 0
    %1389 = vmatpush1.bf16.xpose.msra.mxu0 0
    %1390 = vmatprep.subr.bf16.mxu0 0
    %1391 = vmatpush1.bf16.xpose.msra.mxu0 0
    %1392 = vmatprep.subr.bf16.mxu0 0
    %1393 = vmatpush1.bf16.xpose.msra.mxu0 0
    %1394 = vmatprep.subr.bf16.mxu0 0
    %1395 = vmatpush1.bf16.xpose.msra.mxu0 0
    %1396 = vmatprep.subr.bf16.mxu0 0
    %1397 = vmatpush1.bf16.xpose.msra.mxu0 0
    %1398 = vmatprep.subr.bf16.mxu0 0
    %1399 = vmatpush1.bf16.xpose.msra.mxu0 0
    %1400 = vmatprep.subr.bf16.mxu0 0
    %1401 = vmatpush1.bf16.xpose.msra.mxu0 0
    %1402 = vmatprep.subr.bf16.mxu0 0
    %1403 = vmatpush1.bf16.xpose.msra.mxu0 0
    %1404 = vmatprep.subr.bf16.mxu0 0
    %1405 = vmatpush1.bf16.xpose.msra.mxu0 0
    %1406 = vmatprep.subr.bf16.mxu0 0
    %1407 = vmatpush1.bf16.xpose.msra.mxu0 0
    %1408 = vmatprep.mubr.bf16.mxu0 0
    %1409 = vmatmul.mubr.bf16.gmra.mrb[0].mxu0 %v1371
    %v1410 = vpop.f32.mrb[0].mxu0
    %v1411 = vadd.f32 0.0, %v1410
    %v1412 = vpop.f32.mrb[0].mxu0
    %v1413 = vpop.f32.mrb[0].mxu0
    %v1414 = vpop.f32.mrb[0].mxu0
    %1415 = vdwg.mxu0
    %v1416 = vmul.f32 %v1362, 0.25
    %v1417 = vmul.f32 %v1411, 0.25
    %v1418 = vsel %vm577, %v1416, -inf
    %1419 = vmax.xlane.f32.xlu0 %v1418
    %v1420 = vpop.xlane.xlu0 %1419
    %v1421 = vsel %vm577, %v1417, -inf
    %1422 = vmax.xlane.f32.xlu0 %v1421
    %v1423 = vpop.xlane.xlu0 %1422
    %v1424 = vsub.f32 %v1416, %v1420
    %v1425 = vsub.f32 %v1417, %v1423
    %v1426 = vmul.f32 %v1424, 1.442695
    %v1427 = vpow.pop %v1426
    %v1428 = vmul.f32 %v1425, 1.442695
    %v1429 = vpow.pop %v1428
    %v1430 = vsel %vm577, %v1427, 0.0
    %1431 = vadd.xlane.f32.xlu0 %v1430
    %v1432 = vpop.xlane.xlu0 %1431
    %v1433 = vsel %vm577, %v1429, 0.0
    %1434 = vadd.xlane.f32.xlu0 %v1433
    %v1435 = vpop.xlane.xlu0 %1434
    %v1436 = vrcp.pop %v1432
    %v1437 = vrcp.pop %v1435
    %v1438 = vmul.f32 %v1427, %v1436
    %v1439 = vmul.f32 %v1429, %v1437
    %v1440 = vpack.c.bf16 %v1438, %v1438
    %v1441 = vpack.c.bf16 %v1439, %v1439
    %1442 = vrot.lane.b32.xlu0 %v1316, 64
    %v1443 = vpop.permute.xlu0 %1442
    %v1445 = vsel %vm577, %v1440, 0
    %v1448 = vsel %vm607, %v1443, 0
    %1450 = vmatprep.subr.bf16.mxu0 0
    %1451 = vmatpush1.bf16.msra.mxu0 %v1448
    %1452 = vmatprep.subr.bf16.mxu0 0
    %1453 = vmatpush1.bf16.msra.mxu0 0
    %1454 = vmatprep.subr.bf16.mxu0 0
    %1455 = vmatpush1.bf16.msra.mxu0 0
    %1456 = vmatprep.subr.bf16.mxu0 0
    %1457 = vmatpush1.bf16.msra.mxu0 0
    %1458 = vmatprep.subr.bf16.mxu0 0
    %1459 = vmatpush1.bf16.msra.mxu0 0
    %1460 = vmatprep.subr.bf16.mxu0 0
    %1461 = vmatpush1.bf16.msra.mxu0 0
    %1462 = vmatprep.subr.bf16.mxu0 0
    %1463 = vmatpush1.bf16.msra.mxu0 0
    %1464 = vmatprep.subr.bf16.mxu0 0
    %1465 = vmatpush1.bf16.msra.mxu0 0
    %1466 = vmatprep.subr.bf16.mxu0 0
    %1467 = vmatpush1.bf16.msra.mxu0 0
    %1468 = vmatprep.subr.bf16.mxu0 0
    %1469 = vmatpush1.bf16.msra.mxu0 0
    %1470 = vmatprep.subr.bf16.mxu0 0
    %1471 = vmatpush1.bf16.msra.mxu0 0
    %1472 = vmatprep.subr.bf16.mxu0 0
    %1473 = vmatpush1.bf16.msra.mxu0 0
    %1474 = vmatprep.subr.bf16.mxu0 0
    %1475 = vmatpush1.bf16.msra.mxu0 0
    %1476 = vmatprep.subr.bf16.mxu0 0
    %1477 = vmatpush1.bf16.msra.mxu0 0
    %1478 = vmatprep.subr.bf16.mxu0 0
    %1479 = vmatpush1.bf16.msra.mxu0 0
    %1480 = vmatprep.subr.bf16.mxu0 0
    %1481 = vmatpush1.bf16.msra.mxu0 0
    %1482 = vmatprep.mubr.bf16.mxu0 0
    %1483 = vmatmul.mubr.bf16.gmra.mrb[0].mxu0 %v1445
    %v1484 = vpop.f32.mrb[0].mxu0
    %v1485 = vadd.f32 0.0, %v1484
    %v1486 = vpop.f32.mrb[0].mxu0
    %v1487 = vpop.f32.mrb[0].mxu0
    %v1488 = vpop.f32.mrb[0].mxu0
    %1489 = vdwg.mxu0
    %1490 = vrot.lane.b32.xlu0 %v1317, 64
    %v1491 = vpop.permute.xlu0 %1490
    %v1493 = vsel %vm577, %v1441, 0
    %v1496 = vsel %vm607, %v1491, 0
    %1498 = vmatprep.subr.bf16.mxu0 0
    %1499 = vmatpush1.bf16.msra.mxu0 %v1496
    %1500 = vmatprep.subr.bf16.mxu0 0
    %1501 = vmatpush1.bf16.msra.mxu0 0
    %1502 = vmatprep.subr.bf16.mxu0 0
    %1503 = vmatpush1.bf16.msra.mxu0 0
    %1504 = vmatprep.subr.bf16.mxu0 0
    %1505 = vmatpush1.bf16.msra.mxu0 0
    %1506 = vmatprep.subr.bf16.mxu0 0
    %1507 = vmatpush1.bf16.msra.mxu0 0
    %1508 = vmatprep.subr.bf16.mxu0 0
    %1509 = vmatpush1.bf16.msra.mxu0 0
    %1510 = vmatprep.subr.bf16.mxu0 0
    %1511 = vmatpush1.bf16.msra.mxu0 0
    %1512 = vmatprep.subr.bf16.mxu0 0
    %1513 = vmatpush1.bf16.msra.mxu0 0
    %1514 = vmatprep.subr.bf16.mxu0 0
    %1515 = vmatpush1.bf16.msra.mxu0 0
    %1516 = vmatprep.subr.bf16.mxu0 0
    %1517 = vmatpush1.bf16.msra.mxu0 0
    %1518 = vmatprep.subr.bf16.mxu0 0
    %1519 = vmatpush1.bf16.msra.mxu0 0
    %1520 = vmatprep.subr.bf16.mxu0 0
    %1521 = vmatpush1.bf16.msra.mxu0 0
    %1522 = vmatprep.subr.bf16.mxu0 0
    %1523 = vmatpush1.bf16.msra.mxu0 0
    %1524 = vmatprep.subr.bf16.mxu0 0
    %1525 = vmatpush1.bf16.msra.mxu0 0
    %1526 = vmatprep.subr.bf16.mxu0 0
    %1527 = vmatpush1.bf16.msra.mxu0 0
    %1528 = vmatprep.subr.bf16.mxu0 0
    %1529 = vmatpush1.bf16.msra.mxu0 0
    %1530 = vmatprep.mubr.bf16.mxu0 0
    %1531 = vmatmul.mubr.bf16.gmra.mrb[0].mxu0 %v1493
    %v1532 = vpop.f32.mrb[0].mxu0
    %v1533 = vadd.f32 0.0, %v1532
    %v1534 = vpop.f32.mrb[0].mxu0
    %v1535 = vpop.f32.mrb[0].mxu0
    %v1536 = vpop.f32.mrb[0].mxu0
    %1537 = vdwg.mxu0
    %1538 = vrot.lane.b32.xlu0 %v1316, 112
    %v1539 = vpop.permute.xlu0 %1538
    %1540 = vrot.lane.b32.xlu0 %v1316, 80
    %v1541 = vpop.permute.xlu0 %1540
    %v1543 = vsel %vm479, %v1539, 0
    %v1546 = vsel %vm479, %v1541, 0
    %1548 = vmatprep.subr.bf16.mxu0 0
    %1549 = vmatpush1.bf16.xpose.msra.mxu0 %v1546
    %1550 = vmatprep.subr.bf16.mxu0 0
    %1551 = vmatpush1.bf16.xpose.msra.mxu0 0
    %1552 = vmatprep.subr.bf16.mxu0 0
    %1553 = vmatpush1.bf16.xpose.msra.mxu0 0
    %1554 = vmatprep.subr.bf16.mxu0 0
    %1555 = vmatpush1.bf16.xpose.msra.mxu0 0
    %1556 = vmatprep.subr.bf16.mxu0 0
    %1557 = vmatpush1.bf16.xpose.msra.mxu0 0
    %1558 = vmatprep.subr.bf16.mxu0 0
    %1559 = vmatpush1.bf16.xpose.msra.mxu0 0
    %1560 = vmatprep.subr.bf16.mxu0 0
    %1561 = vmatpush1.bf16.xpose.msra.mxu0 0
    %1562 = vmatprep.subr.bf16.mxu0 0
    %1563 = vmatpush1.bf16.xpose.msra.mxu0 0
    %1564 = vmatprep.subr.bf16.mxu0 0
    %1565 = vmatpush1.bf16.xpose.msra.mxu0 0
    %1566 = vmatprep.subr.bf16.mxu0 0
    %1567 = vmatpush1.bf16.xpose.msra.mxu0 0
    %1568 = vmatprep.subr.bf16.mxu0 0
    %1569 = vmatpush1.bf16.xpose.msra.mxu0 0
    %1570 = vmatprep.subr.bf16.mxu0 0
    %1571 = vmatpush1.bf16.xpose.msra.mxu0 0
    %1572 = vmatprep.subr.bf16.mxu0 0
    %1573 = vmatpush1.bf16.xpose.msra.mxu0 0
    %1574 = vmatprep.subr.bf16.mxu0 0
    %1575 = vmatpush1.bf16.xpose.msra.mxu0 0
    %1576 = vmatprep.subr.bf16.mxu0 0
    %1577 = vmatpush1.bf16.xpose.msra.mxu0 0
    %1578 = vmatprep.subr.bf16.mxu0 0
    %1579 = vmatpush1.bf16.xpose.msra.mxu0 0
    %1580 = vmatprep.mubr.bf16.mxu0 0
    %1581 = vmatmul.mubr.bf16.gmra.mrb[0].mxu0 %v1543
    %v1582 = vpop.f32.mrb[0].mxu0
    %v1583 = vadd.f32 0.0, %v1582
    %v1584 = vpop.f32.mrb[0].mxu0
    %v1585 = vpop.f32.mrb[0].mxu0
    %v1586 = vpop.f32.mrb[0].mxu0
    %1587 = vdwg.mxu0
    %1588 = vrot.lane.b32.xlu0 %v1317, 112
    %v1589 = vpop.permute.xlu0 %1588
    %1590 = vrot.lane.b32.xlu0 %v1317, 80
    %v1591 = vpop.permute.xlu0 %1590
    %v1593 = vsel %vm479, %v1589, 0
    %v1596 = vsel %vm479, %v1591, 0
    %1598 = vmatprep.subr.bf16.mxu0 0
    %1599 = vmatpush1.bf16.xpose.msra.mxu0 %v1596
    %1600 = vmatprep.subr.bf16.mxu0 0
    %1601 = vmatpush1.bf16.xpose.msra.mxu0 0
    %1602 = vmatprep.subr.bf16.mxu0 0
    %1603 = vmatpush1.bf16.xpose.msra.mxu0 0
    %1604 = vmatprep.subr.bf16.mxu0 0
    %1605 = vmatpush1.bf16.xpose.msra.mxu0 0
    %1606 = vmatprep.subr.bf16.mxu0 0
    %1607 = vmatpush1.bf16.xpose.msra.mxu0 0
    %1608 = vmatprep.subr.bf16.mxu0 0
    %1609 = vmatpush1.bf16.xpose.msra.mxu0 0
    %1610 = vmatprep.subr.bf16.mxu0 0
    %1611 = vmatpush1.bf16.xpose.msra.mxu0 0
    %1612 = vmatprep.subr.bf16.mxu0 0
    %1613 = vmatpush1.bf16.xpose.msra.mxu0 0
    %1614 = vmatprep.subr.bf16.mxu0 0
    %1615 = vmatpush1.bf16.xpose.msra.mxu0 0
    %1616 = vmatprep.subr.bf16.mxu0 0
    %1617 = vmatpush1.bf16.xpose.msra.mxu0 0
    %1618 = vmatprep.subr.bf16.mxu0 0
    %1619 = vmatpush1.bf16.xpose.msra.mxu0 0
    %1620 = vmatprep.subr.bf16.mxu0 0
    %1621 = vmatpush1.bf16.xpose.msra.mxu0 0
    %1622 = vmatprep.subr.bf16.mxu0 0
    %1623 = vmatpush1.bf16.xpose.msra.mxu0 0
    %1624 = vmatprep.subr.bf16.mxu0 0
    %1625 = vmatpush1.bf16.xpose.msra.mxu0 0
    %1626 = vmatprep.subr.bf16.mxu0 0
    %1627 = vmatpush1.bf16.xpose.msra.mxu0 0
    %1628 = vmatprep.subr.bf16.mxu0 0
    %1629 = vmatpush1.bf16.xpose.msra.mxu0 0
    %1630 = vmatprep.mubr.bf16.mxu0 0
    %1631 = vmatmul.mubr.bf16.gmra.mrb[0].mxu0 %v1593
    %v1632 = vpop.f32.mrb[0].mxu0
    %v1633 = vadd.f32 0.0, %v1632
    %v1634 = vpop.f32.mrb[0].mxu0
    %v1635 = vpop.f32.mrb[0].mxu0
    %v1636 = vpop.f32.mrb[0].mxu0
    %1637 = vdwg.mxu0
    %v1638 = vmul.f32 %v1583, 0.25
    %v1639 = vmul.f32 %v1633, 0.25
    %v1640 = vsel %vm577, %v1638, -inf
    %1641 = vmax.xlane.f32.xlu0 %v1640
    %v1642 = vpop.xlane.xlu0 %1641
    %v1643 = vsel %vm577, %v1639, -inf
    %1644 = vmax.xlane.f32.xlu0 %v1643
    %v1645 = vpop.xlane.xlu0 %1644
    %v1646 = vsub.f32 %v1638, %v1642
    %v1647 = vsub.f32 %v1639, %v1645
    %v1648 = vmul.f32 %v1646, 1.442695
    %v1649 = vpow.pop %v1648
    %v1650 = vmul.f32 %v1647, 1.442695
    %v1651 = vpow.pop %v1650
    %v1652 = vsel %vm577, %v1649, 0.0
    %1653 = vadd.xlane.f32.xlu0 %v1652
    %v1654 = vpop.xlane.xlu0 %1653
    %v1655 = vsel %vm577, %v1651, 0.0
    %1656 = vadd.xlane.f32.xlu0 %v1655
    %v1657 = vpop.xlane.xlu0 %1656
    %v1658 = vrcp.pop %v1654
    %v1659 = vrcp.pop %v1657
    %v1660 = vmul.f32 %v1649, %v1658
    %v1661 = vmul.f32 %v1651, %v1659
    %v1662 = vpack.c.bf16 %v1660, %v1660
    %v1663 = vpack.c.bf16 %v1661, %v1661
    %1664 = vrot.lane.b32.xlu0 %v1316, 48
    %v1665 = vpop.permute.xlu0 %1664
    %v1667 = vsel %vm577, %v1662, 0
    %v1670 = vsel %vm607, %v1665, 0
    %1672 = vmatprep.subr.bf16.mxu0 0
    %1673 = vmatpush1.bf16.msra.mxu0 %v1670
    %1674 = vmatprep.subr.bf16.mxu0 0
    %1675 = vmatpush1.bf16.msra.mxu0 0
    %1676 = vmatprep.subr.bf16.mxu0 0
    %1677 = vmatpush1.bf16.msra.mxu0 0
    %1678 = vmatprep.subr.bf16.mxu0 0
    %1679 = vmatpush1.bf16.msra.mxu0 0
    %1680 = vmatprep.subr.bf16.mxu0 0
    %1681 = vmatpush1.bf16.msra.mxu0 0
    %1682 = vmatprep.subr.bf16.mxu0 0
    %1683 = vmatpush1.bf16.msra.mxu0 0
    %1684 = vmatprep.subr.bf16.mxu0 0
    %1685 = vmatpush1.bf16.msra.mxu0 0
    %1686 = vmatprep.subr.bf16.mxu0 0
    %1687 = vmatpush1.bf16.msra.mxu0 0
    %1688 = vmatprep.subr.bf16.mxu0 0
    %1689 = vmatpush1.bf16.msra.mxu0 0
    %1690 = vmatprep.subr.bf16.mxu0 0
    %1691 = vmatpush1.bf16.msra.mxu0 0
    %1692 = vmatprep.subr.bf16.mxu0 0
    %1693 = vmatpush1.bf16.msra.mxu0 0
    %1694 = vmatprep.subr.bf16.mxu0 0
    %1695 = vmatpush1.bf16.msra.mxu0 0
    %1696 = vmatprep.subr.bf16.mxu0 0
    %1697 = vmatpush1.bf16.msra.mxu0 0
    %1698 = vmatprep.subr.bf16.mxu0 0
    %1699 = vmatpush1.bf16.msra.mxu0 0
    %1700 = vmatprep.subr.bf16.mxu0 0
    %1701 = vmatpush1.bf16.msra.mxu0 0
    %1702 = vmatprep.subr.bf16.mxu0 0
    %1703 = vmatpush1.bf16.msra.mxu0 0
    %1704 = vmatprep.mubr.bf16.mxu0 0
    %1705 = vmatmul.mubr.bf16.gmra.mrb[0].mxu0 %v1667
    %v1706 = vpop.f32.mrb[0].mxu0
    %v1707 = vadd.f32 0.0, %v1706
    %v1708 = vpop.f32.mrb[0].mxu0
    %v1709 = vpop.f32.mrb[0].mxu0
    %v1710 = vpop.f32.mrb[0].mxu0
    %1711 = vdwg.mxu0
    %1712 = vrot.lane.b32.xlu0 %v1317, 48
    %v1713 = vpop.permute.xlu0 %1712
    %v1715 = vsel %vm577, %v1663, 0
    %v1718 = vsel %vm607, %v1713, 0
    %1720 = vmatprep.subr.bf16.mxu0 0
    %1721 = vmatpush1.bf16.msra.mxu0 %v1718
    %1722 = vmatprep.subr.bf16.mxu0 0
    %1723 = vmatpush1.bf16.msra.mxu0 0
    %1724 = vmatprep.subr.bf16.mxu0 0
    %1725 = vmatpush1.bf16.msra.mxu0 0
    %1726 = vmatprep.subr.bf16.mxu0 0
    %1727 = vmatpush1.bf16.msra.mxu0 0
    %1728 = vmatprep.subr.bf16.mxu0 0
    %1729 = vmatpush1.bf16.msra.mxu0 0
    %1730 = vmatprep.subr.bf16.mxu0 0
    %1731 = vmatpush1.bf16.msra.mxu0 0
    %1732 = vmatprep.subr.bf16.mxu0 0
    %1733 = vmatpush1.bf16.msra.mxu0 0
    %1734 = vmatprep.subr.bf16.mxu0 0
    %1735 = vmatpush1.bf16.msra.mxu0 0
    %1736 = vmatprep.subr.bf16.mxu0 0
    %1737 = vmatpush1.bf16.msra.mxu0 0
    %1738 = vmatprep.subr.bf16.mxu0 0
    %1739 = vmatpush1.bf16.msra.mxu0 0
    %1740 = vmatprep.subr.bf16.mxu0 0
    %1741 = vmatpush1.bf16.msra.mxu0 0
    %1742 = vmatprep.subr.bf16.mxu0 0
    %1743 = vmatpush1.bf16.msra.mxu0 0
    %1744 = vmatprep.subr.bf16.mxu0 0
    %1745 = vmatpush1.bf16.msra.mxu0 0
    %1746 = vmatprep.subr.bf16.mxu0 0
    %1747 = vmatpush1.bf16.msra.mxu0 0
    %1748 = vmatprep.subr.bf16.mxu0 0
    %1749 = vmatpush1.bf16.msra.mxu0 0
    %1750 = vmatprep.subr.bf16.mxu0 0
    %1751 = vmatpush1.bf16.msra.mxu0 0
    %1752 = vmatprep.mubr.bf16.mxu0 0
    %1753 = vmatmul.mubr.bf16.gmra.mrb[0].mxu0 %v1715
    %v1754 = vpop.f32.mrb[0].mxu0
    %v1755 = vadd.f32 0.0, %v1754
    %v1756 = vpop.f32.mrb[0].mxu0
    %v1757 = vpop.f32.mrb[0].mxu0
    %v1758 = vpop.f32.mrb[0].mxu0
    %1759 = vdwg.mxu0
    %1762 = vrot.lane.b32.xlu0 %v1707, 16
    %v1763 = vpop.permute.xlu0 %1762
    %1764 = vrot.lane.b32.xlu0 %v1755, 16
    %v1765 = vpop.permute.xlu0 %1764
    %v1768 = vsel %vm479, %v1485, %v1763
    %v1769 = vsel %vm479, %v1533, %v1765
    %v1770 = vpack.c.bf16 %v1769, %v1768
    %s1771 = scalar_lea.vmem %s12, 16
    %v1772 = vld [vmem:[%s1771] sm:$0xf]
    %v1773 = vld [vmem:[%s1771 + $0x4] sm:$0xf]
    %v1774 = vld [vmem:[%s1771 + $0x8] sm:$0xf]
    %v1775 = vld [vmem:[%s1771 + $0xc] sm:$0xf]
    %s1776 = scalar_lea.vmem %s13, 1
    %v1777 = vld [vmem:[%s1776] sm:$0x1]
    %v1779 = vlaneseq
    %v1780 = vshrl.u32 %v1779, 7
    %v1781 = vsub.s32 0, %v1780
    %v1782 = vrot.slane %v1777, %v1781
    %v1788 = vunpack.c.l.b16 %v1772
    %v1789 = vunpack.c.l.b16 %v1773
    %v1790 = vunpack.c.l.b16 %v1774
    %v1791 = vunpack.c.l.b16 %v1775
    %v1792 = vpack.c.b16 %v1789, %v1788
    %v1793 = vpack.c.b16 %v1791, %v1790
    %v1797 = vsel %vm311, %v1770, 0
    %1799 = vmatprep.subr.bf16.mxu0 0
    %1800 = vmatpush1.bf16.msra.mxu0 %v1792
    %1801 = vmatprep.subr.bf16.mxu0 0
    %1802 = vmatpush1.bf16.msra.mxu0 %v1793
    %1803 = vmatprep.subr.bf16.mxu0 0
    %1804 = vmatpush1.bf16.msra.mxu0 0
    %1805 = vmatprep.subr.bf16.mxu0 0
    %1806 = vmatpush1.bf16.msra.mxu0 0
    %1807 = vmatprep.subr.bf16.mxu0 0
    %1808 = vmatpush1.bf16.msra.mxu0 0
    %1809 = vmatprep.subr.bf16.mxu0 0
    %1810 = vmatpush1.bf16.msra.mxu0 0
    %1811 = vmatprep.subr.bf16.mxu0 0
    %1812 = vmatpush1.bf16.msra.mxu0 0
    %1813 = vmatprep.subr.bf16.mxu0 0
    %1814 = vmatpush1.bf16.msra.mxu0 0
    %1815 = vmatprep.subr.bf16.mxu0 0
    %1816 = vmatpush1.bf16.msra.mxu0 0
    %1817 = vmatprep.subr.bf16.mxu0 0
    %1818 = vmatpush1.bf16.msra.mxu0 0
    %1819 = vmatprep.subr.bf16.mxu0 0
    %1820 = vmatpush1.bf16.msra.mxu0 0
    %1821 = vmatprep.subr.bf16.mxu0 0
    %1822 = vmatpush1.bf16.msra.mxu0 0
    %1823 = vmatprep.subr.bf16.mxu0 0
    %1824 = vmatpush1.bf16.msra.mxu0 0
    %1825 = vmatprep.subr.bf16.mxu0 0
    %1826 = vmatpush1.bf16.msra.mxu0 0
    %1827 = vmatprep.subr.bf16.mxu0 0
    %1828 = vmatpush1.bf16.msra.mxu0 0
    %1829 = vmatprep.subr.bf16.mxu0 0
    %1830 = vmatpush1.bf16.msra.mxu0 0
    %1831 = vmatprep.mubr.bf16.mxu0 0
    %1832 = vmatmul.mubr.bf16.gmra.mrb[0].mxu0 %v1797
    %v1833 = vpop.f32.mrb[0].mxu0
    %v1834 = vadd.f32 %v1782, %v1833
    %v1835 = vpop.f32.mrb[0].mxu0
    %v1836 = vpop.f32.mrb[0].mxu0
    %v1837 = vadd.f32 %v1782, %v1836
    %v1838 = vpop.f32.mrb[0].mxu0
    %1839 = vdwg.mxu0
    %v1840 = vadd.f32 %v1244, %v1834
    %v1841 = vadd.f32 %v1245, %v1837
    %s1842 = scalar_lea.vmem %s14, 1
    %v1843 = vld [vmem:[%s1842] sm:$0x1]
    %s1844 = scalar_lea.vmem %s15, 1
    %v1845 = vld [vmem:[%s1844] sm:$0x1]
    %v1846 = vsel %vm311, %v1840, 0.0
    %1847 = vadd.xlane.f32.xlu0 %v1846
    %v1848 = vpop.xlane.xlu0 %1847
    %v1849 = vsel %vm311, %v1841, 0.0
    %1850 = vadd.xlane.f32.xlu0 %v1849
    %v1851 = vpop.xlane.xlu0 %1850
    %v1852 = vmul.f32 %v1848, %v366
    %v1853 = vmul.f32 %v1851, %v366
    %v1854 = vsub.f32 %v1840, %v1852
    %v1855 = vsub.f32 %v1841, %v1853
    %v1856 = vmul.f32 %v1854, %v1854
    %v1857 = vmul.f32 %v1855, %v1855
    %v1858 = vsel %vm311, %v1856, 0.0
    %1859 = vadd.xlane.f32.xlu0 %v1858
    %v1860 = vpop.xlane.xlu0 %1859
    %v1861 = vsel %vm311, %v1857, 0.0
    %1862 = vadd.xlane.f32.xlu0 %v1861
    %v1863 = vpop.xlane.xlu0 %1862
    %v1864 = vmul.f32 %v1860, %v366
    %v1865 = vmul.f32 %v1863, %v366
    %v1866 = vadd.f32 %v1864, 1e-05
    %v1867 = vadd.f32 %v1865, 1e-05
    %v1868 = vrsqrt.pop %v1866
    %v1869 = vrsqrt.pop %v1867
    %v1870 = vmul.f32 %v1854, %v1868
    %v1871 = vmul.f32 %v1855, %v1869
    %v1873 = vlaneseq
    %v1874 = vshrl.u32 %v1873, 7
    %v1875 = vsub.s32 0, %v1874
    %v1876 = vrot.slane %v1843, %v1875
    %v1878 = vmul.f32 %v1870, %v1876
    %v1879 = vmul.f32 %v1871, %v1876
    %v1881 = vlaneseq
    %v1882 = vshrl.u32 %v1881, 7
    %v1883 = vsub.s32 0, %v1882
    %v1884 = vrot.slane %v1845, %v1883
    %v1886 = vadd.f32 %v1878, %v1884
    %v1887 = vadd.f32 %v1879, %v1884
    %v1888 = vpack.c.bf16 %v1887, %v1886
    %s1889 = scalar_lea.vmem %s16, 16
    %v1890 = vld [vmem:[%s1889] sm:$0xf]
    %v1891 = vld [vmem:[%s1889 + $0x4] sm:$0xf]
    %v1892 = vld [vmem:[%s1889 + $0x8] sm:$0xf]
    %v1893 = vld [vmem:[%s1889 + $0xc] sm:$0xf]
    %s1894 = scalar_lea.vmem %s17, 1
    %v1895 = vld [vmem:[%s1894] sm:$0x1]
    %v1897 = vlaneseq
    %v1898 = vshrl.u32 %v1897, 7
    %v1899 = vsub.s32 0, %v1898
    %v1900 = vrot.slane %v1895, %v1899
    %v1906 = vunpack.c.l.b16 %v1890
    %v1907 = vunpack.c.l.b16 %v1891
    %v1908 = vunpack.c.l.b16 %v1892
    %v1909 = vunpack.c.l.b16 %v1893
    %v1910 = vpack.c.b16 %v1907, %v1906
    %v1911 = vpack.c.b16 %v1909, %v1908
    %v1915 = vsel %vm311, %v1888, 0
    %1917 = vmatprep.subr.bf16.mxu0 0
    %1918 = vmatpush1.bf16.msra.mxu0 %v1910
    %1919 = vmatprep.subr.bf16.mxu0 0
    %1920 = vmatpush1.bf16.msra.mxu0 %v1911
    %1921 = vmatprep.subr.bf16.mxu0 0
    %1922 = vmatpush1.bf16.msra.mxu0 0
    %1923 = vmatprep.subr.bf16.mxu0 0
    %1924 = vmatpush1.bf16.msra.mxu0 0
    %1925 = vmatprep.subr.bf16.mxu0 0
    %1926 = vmatpush1.bf16.msra.mxu0 0
    %1927 = vmatprep.subr.bf16.mxu0 0
    %1928 = vmatpush1.bf16.msra.mxu0 0
    %1929 = vmatprep.subr.bf16.mxu0 0
    %1930 = vmatpush1.bf16.msra.mxu0 0
    %1931 = vmatprep.subr.bf16.mxu0 0
    %1932 = vmatpush1.bf16.msra.mxu0 0
    %1933 = vmatprep.subr.bf16.mxu0 0
    %1934 = vmatpush1.bf16.msra.mxu0 0
    %1935 = vmatprep.subr.bf16.mxu0 0
    %1936 = vmatpush1.bf16.msra.mxu0 0
    %1937 = vmatprep.subr.bf16.mxu0 0
    %1938 = vmatpush1.bf16.msra.mxu0 0
    %1939 = vmatprep.subr.bf16.mxu0 0
    %1940 = vmatpush1.bf16.msra.mxu0 0
    %1941 = vmatprep.subr.bf16.mxu0 0
    %1942 = vmatpush1.bf16.msra.mxu0 0
    %1943 = vmatprep.subr.bf16.mxu0 0
    %1944 = vmatpush1.bf16.msra.mxu0 0
    %1945 = vmatprep.subr.bf16.mxu0 0
    %1946 = vmatpush1.bf16.msra.mxu0 0
    %1947 = vmatprep.subr.bf16.mxu0 0
    %1948 = vmatpush1.bf16.msra.mxu0 0
    %1949 = vmatprep.mubr.bf16.mxu0 0
    %1950 = vmatmul.mubr.bf16.gmra.mrb[0].mxu0 %v1915
    %v1951 = vpop.f32.mrb[0].mxu0
    %v1952 = vadd.f32 %v1900, %v1951
    %v1953 = vpop.f32.mrb[0].mxu0
    %v1954 = vpop.f32.mrb[0].mxu0
    %v1955 = vadd.f32 %v1900, %v1954
    %v1956 = vpop.f32.mrb[0].mxu0
    %1957 = vdwg.mxu0
    %v1958 = vmax.f32 %v1952, 0.0
    %v1959 = vmax.f32 %v1955, 0.0
    %v1960 = vpack.c.bf16 %v1959, %v1958
    %s1961 = scalar_lea.vmem %s18, 32
    %v1962 = vld [vmem:[%s1961] sm:$0xf]
    %v1963 = vld [vmem:[%s1961 + $0x4] sm:$0xf]
    %v1964 = vld [vmem:[%s1961 + $0x8] sm:$0xf]
    %v1965 = vld [vmem:[%s1961 + $0xc] sm:$0xf]
    %v1966 = vld [vmem:[%s1961 + $0x10] sm:$0xf]
    %v1967 = vld [vmem:[%s1961 + $0x14] sm:$0xf]
    %v1968 = vld [vmem:[%s1961 + $0x18] sm:$0xf]
    %v1969 = vld [vmem:[%s1961 + $0x1c] sm:$0xf]
    %s1970 = scalar_lea.vmem %s19, 1
    %v1971 = vld [vmem:[%s1970] sm:$0x1]
    %v1973 = vlaneseq
    %v1974 = vshrl.u32 %v1973, 7
    %v1975 = vsub.s32 0, %v1974
    %v1976 = vrot.slane %v1971, %v1975
    %v1986 = vunpack.c.l.b16 %v1962
    %v1987 = vunpack.c.l.b16 %v1963
    %v1988 = vunpack.c.l.b16 %v1964
    %v1989 = vunpack.c.l.b16 %v1965
    %v1990 = vunpack.c.l.b16 %v1966
    %v1991 = vunpack.c.l.b16 %v1967
    %v1992 = vunpack.c.l.b16 %v1968
    %v1993 = vunpack.c.l.b16 %v1969
    %v1994 = vpack.c.b16 %v1987, %v1986
    %v1995 = vpack.c.b16 %v1989, %v1988
    %v1996 = vpack.c.b16 %v1991, %v1990
    %v1997 = vpack.c.b16 %v1993, %v1992
    %v2003 = vsel %vm1155, %v1960, 0
    %2005 = vmatprep.subr.bf16.mxu0 0
    %2006 = vmatpush1.bf16.msra.mxu0 %v1994
    %2007 = vmatprep.subr.bf16.mxu0 0
    %2008 = vmatpush1.bf16.msra.mxu0 %v1995
    %2009 = vmatprep.subr.bf16.mxu0 0
    %2010 = vmatpush1.bf16.msra.mxu0 %v1996
    %2011 = vmatprep.subr.bf16.mxu0 0
    %2012 = vmatpush1.bf16.msra.mxu0 %v1997
    %2013 = vmatprep.subr.bf16.mxu0 0
    %2014 = vmatpush1.bf16.msra.mxu0 0
    %2015 = vmatprep.subr.bf16.mxu0 0
    %2016 = vmatpush1.bf16.msra.mxu0 0
    %2017 = vmatprep.subr.bf16.mxu0 0
    %2018 = vmatpush1.bf16.msra.mxu0 0
    %2019 = vmatprep.subr.bf16.mxu0 0
    %2020 = vmatpush1.bf16.msra.mxu0 0
    %2021 = vmatprep.subr.bf16.mxu0 0
    %2022 = vmatpush1.bf16.msra.mxu0 0
    %2023 = vmatprep.subr.bf16.mxu0 0
    %2024 = vmatpush1.bf16.msra.mxu0 0
    %2025 = vmatprep.subr.bf16.mxu0 0
    %2026 = vmatpush1.bf16.msra.mxu0 0
    %2027 = vmatprep.subr.bf16.mxu0 0
    %2028 = vmatpush1.bf16.msra.mxu0 0
    %2029 = vmatprep.subr.bf16.mxu0 0
    %2030 = vmatpush1.bf16.msra.mxu0 0
    %2031 = vmatprep.subr.bf16.mxu0 0
    %2032 = vmatpush1.bf16.msra.mxu0 0
    %2033 = vmatprep.subr.bf16.mxu0 0
    %2034 = vmatpush1.bf16.msra.mxu0 0
    %2035 = vmatprep.subr.bf16.mxu0 0
    %2036 = vmatpush1.bf16.msra.mxu0 0
    %2037 = vmatprep.mubr.bf16.mxu0 0
    %2038 = vmatmul.mubr.bf16.gmra.mrb[0].mxu0 %v2003
    %v2039 = vpop.f32.mrb[0].mxu0
    %v2040 = vadd.f32 %v1976, %v2039
    %v2041 = vpop.f32.mrb[0].mxu0
    %v2042 = vpop.f32.mrb[0].mxu0
    %v2043 = vadd.f32 %v1976, %v2042
    %v2044 = vpop.f32.mrb[0].mxu0
    %2045 = vdwg.mxu0
    %v2046 = vadd.f32 %v1886, %v2040
    %v2047 = vadd.f32 %v1887, %v2043
    %s2048 = scalar_lea.vmem %s20, 1
    %v2049 = vld [vmem:[%s2048] sm:$0x1]
    %s2050 = scalar_lea.vmem %s21, 1
    %v2051 = vld [vmem:[%s2050] sm:$0x1]
    %v2052 = vsel %vm311, %v2046, 0.0
    %2053 = vadd.xlane.f32.xlu0 %v2052
    %v2054 = vpop.xlane.xlu0 %2053
    %v2055 = vsel %vm311, %v2047, 0.0
    %2056 = vadd.xlane.f32.xlu0 %v2055
    %v2057 = vpop.xlane.xlu0 %2056
    %v2058 = vmul.f32 %v2054, %v366
    %v2059 = vmul.f32 %v2057, %v366
    %v2060 = vsub.f32 %v2046, %v2058
    %v2061 = vsub.f32 %v2047, %v2059
    %v2062 = vmul.f32 %v2060, %v2060
    %v2063 = vmul.f32 %v2061, %v2061
    %v2064 = vsel %vm311, %v2062, 0.0
    %2065 = vadd.xlane.f32.xlu0 %v2064
    %v2066 = vpop.xlane.xlu0 %2065
    %v2067 = vsel %vm311, %v2063, 0.0
    %2068 = vadd.xlane.f32.xlu0 %v2067
    %v2069 = vpop.xlane.xlu0 %2068
    %v2070 = vmul.f32 %v2066, %v366
    %v2071 = vmul.f32 %v2069, %v366
    %v2072 = vadd.f32 %v2070, 1e-05
    %v2073 = vadd.f32 %v2071, 1e-05
    %v2074 = vrsqrt.pop %v2072
    %v2075 = vrsqrt.pop %v2073
    %v2076 = vmul.f32 %v2060, %v2074
    %v2077 = vmul.f32 %v2061, %v2075
    %v2079 = vlaneseq
    %v2080 = vshrl.u32 %v2079, 7
    %v2081 = vsub.s32 0, %v2080
    %v2082 = vrot.slane %v2049, %v2081
    %v2084 = vmul.f32 %v2076, %v2082
    %v2085 = vmul.f32 %v2077, %v2082
    %v2087 = vlaneseq
    %v2088 = vshrl.u32 %v2087, 7
    %v2089 = vsub.s32 0, %v2088
    %v2090 = vrot.slane %v2051, %v2089
    %v2092 = vadd.f32 %v2084, %v2090
    %v2093 = vadd.f32 %v2085, %v2090
    %v2094 = vld [vmem:[%s22] sm:$0x1]
    %v2095 = vld [vmem:[%s23] sm:$0x1]
    %v2096 = vsel %vm311, %v2092, 0.0
    %2097 = vadd.xlane.f32.xlu0 %v2096
    %v2098 = vpop.xlane.xlu0 %2097
    %v2099 = vsel %vm311, %v2093, 0.0
    %2100 = vadd.xlane.f32.xlu0 %v2099
    %v2101 = vpop.xlane.xlu0 %2100
    %v2102 = vmul.f32 %v2098, %v366
    %v2103 = vmul.f32 %v2101, %v366
    %v2104 = vsub.f32 %v2092, %v2102
    %v2105 = vsub.f32 %v2093, %v2103
    %v2106 = vmul.f32 %v2104, %v2104
    %v2107 = vmul.f32 %v2105, %v2105
    %v2108 = vsel %vm311, %v2106, 0.0
    %2109 = vadd.xlane.f32.xlu0 %v2108
    %v2110 = vpop.xlane.xlu0 %2109
    %v2111 = vsel %vm311, %v2107, 0.0
    %2112 = vadd.xlane.f32.xlu0 %v2111
    %v2113 = vpop.xlane.xlu0 %2112
    %v2114 = vmul.f32 %v2110, %v366
    %v2115 = vmul.f32 %v2113, %v366
    %v2116 = vadd.f32 %v2114, 1e-05
    %v2117 = vadd.f32 %v2115, 1e-05
    %v2118 = vrsqrt.pop %v2116
    %v2119 = vrsqrt.pop %v2117
    %v2120 = vmul.f32 %v2104, %v2118
    %v2121 = vmul.f32 %v2105, %v2119
    %v2123 = vlaneseq
    %v2124 = vshrl.u32 %v2123, 7
    %v2125 = vsub.s32 0, %v2124
    %v2126 = vrot.slane %v2094, %v2125
    %v2128 = vmul.f32 %v2120, %v2126
    %v2129 = vmul.f32 %v2121, %v2126
    %v2131 = vlaneseq
    %v2132 = vshrl.u32 %v2131, 7
    %v2133 = vsub.s32 0, %v2132
    %v2134 = vrot.slane %v2095, %v2133
    %v2136 = vadd.f32 %v2128, %v2134
    %v2137 = vadd.f32 %v2129, %v2134
    %v2138 = vsel %vm311, %v2136, -inf
    %v2139 = vrot.slane %v2138, 4
    %v2140 = vmax.f32 %v2138, %v2139
    %v2141 = vrot.slane %v2140, 2
    %v2142 = vmax.f32 %v2140, %v2141
    %v2143 = vrot.slane %v2142, 1
    %v2144 = vmax.f32 %v2142, %v2143
    %v2145 = vsel %vm311, %v2137, -inf
    %v2146 = vrot.slane %v2145, 4
    %v2147 = vmax.f32 %v2145, %v2146
    %v2148 = vrot.slane %v2147, 2
    %v2149 = vmax.f32 %v2147, %v2148
    %v2150 = vrot.slane %v2149, 1
    %v2151 = vmax.f32 %v2149, %v2150
    %v2152 = vpack.c.bf16 %v2144, %v2144
    %v2153 = vpack.c.bf16 %v2151, %v2151
    %v2154 = vld [vmem:[%s24] sm:$0xf]
    %v2155 = vld [vmem:[%s24 + $0x4] sm:$0xf]
    %v2156 = vld [vmem:[%s24 + $0x8] sm:$0xf]
    %v2157 = vld [vmem:[%s24 + $0xc] sm:$0xf]
    %v2158 = vld [vmem:[%s25] sm:$0x1]
    %v2160 = vlaneseq
    %v2161 = vshrl.u32 %v2160, 7
    %v2162 = vsub.s32 0, %v2161
    %v2163 = vrot.slane %v2158, %v2162
    %v2167 = vunpack.c.l.b16 %v2152
    %v2168 = vunpack.c.l.b16 %v2153
    %vm2169 = vcmask 1041409
    %v2170 = vsel %vm2169, %v2168, %v2167
    %v2171 = vpack.c.b16 %v2170, %v2170
    %v2176 = vunpack.c.l.b16 %v2154
    %v2177 = vunpack.c.l.b16 %v2155
    %v2178 = vunpack.c.l.b16 %v2156
    %v2179 = vunpack.c.l.b16 %v2157
    %v2180 = vpack.c.b16 %v2177, %v2176
    %v2181 = vpack.c.b16 %v2179, %v2178
    %v2185 = vsel %vm311, %v2171, 0
    %2187 = vmatprep.subr.bf16.mxu0 0
    %2188 = vmatpush1.bf16.msra.mxu0 %v2180
    %2189 = vmatprep.subr.bf16.mxu0 0
    %2190 = vmatpush1.bf16.msra.mxu0 %v2181
    %2191 = vmatprep.subr.bf16.mxu0 0
    %2192 = vmatpush1.bf16.msra.mxu0 0
    %2193 = vmatprep.subr.bf16.mxu0 0
    %2194 = vmatpush1.bf16.msra.mxu0 0
    %2195 = vmatprep.subr.bf16.mxu0 0
    %2196 = vmatpush1.bf16.msra.mxu0 0
    %2197 = vmatprep.subr.bf16.mxu0 0
    %2198 = vmatpush1.bf16.msra.mxu0 0
    %2199 = vmatprep.subr.bf16.mxu0 0
    %2200 = vmatpush1.bf16.msra.mxu0 0
    %2201 = vmatprep.subr.bf16.mxu0 0
    %2202 = vmatpush1.bf16.msra.mxu0 0
    %2203 = vmatprep.subr.bf16.mxu0 0
    %2204 = vmatpush1.bf16.msra.mxu0 0
    %2205 = vmatprep.subr.bf16.mxu0 0
    %2206 = vmatpush1.bf16.msra.mxu0 0
    %2207 = vmatprep.subr.bf16.mxu0 0
    %2208 = vmatpush1.bf16.msra.mxu0 0
    %2209 = vmatprep.subr.bf16.mxu0 0
    %2210 = vmatpush1.bf16.msra.mxu0 0
    %2211 = vmatprep.subr.bf16.mxu0 0
    %2212 = vmatpush1.bf16.msra.mxu0 0
    %2213 = vmatprep.subr.bf16.mxu0 0
    %2214 = vmatpush1.bf16.msra.mxu0 0
    %2215 = vmatprep.subr.bf16.mxu0 0
    %2216 = vmatpush1.bf16.msra.mxu0 0
    %2217 = vmatprep.subr.bf16.mxu0 0
    %2218 = vmatpush1.bf16.msra.mxu0 0
    %2219 = vmatprep.mubr.bf16.mxu0 0
    %2220 = vmatmul.mubr.bf16.gmra.mrb[0].mxu0 %v2185
    %v2221 = vpop.f32.mrb[0].mxu0
    %v2222 = vadd.f32 %v2163, %v2221
    %v2223 = vpop.f32.mrb[0].mxu0
    %v2224 = vpop.f32.mrb[0].mxu0
    %v2225 = vpop.f32.mrb[0].mxu0
    %2226 = vdwg.mxu0
    %2227 = vst [vmem:[#allocation16] sm:$0x3] %v2222
    // Predicated region
    $region138: #{tpu_custom_call.1} parent=1 // pred_check
      _
    $region139: #{tpu_custom_call.1} parent=1 // pred_check_branch
      %2229 = sbr.rel (0) target = $region141
    $region140: #{tpu_custom_call.1} parent=1 // pred_region
      %s2231 = ssub.s32 32, 32
      %2232 = vsyncadd [#allocation4], %s2231
      %s2234 = sshll.u32 [#allocation16], 4
      %s2235 = int_to_ptr.vmem [resolvable:$true] %s2234
      %2237 = dma.vmem_to_hbm [thread:$0]  %s2235, 32, %s26, [#allocation4]
    $region141: #{tpu_custom_call.1} parent=1 // pred_fallthru
      _
    // Predicated region
    $region142: #{tpu_custom_call.1} parent=1 // pred_check
      _
    $region143: #{tpu_custom_call.1} parent=1 // pred_check_branch
      %2239 = sbr.rel (0) target = $region145
    $region144: #{tpu_custom_call.1} parent=1 // pred_region
      %2240 = dma.done [#allocation4], 32
    $region145: #{tpu_custom_call.1} parent=1 // pred_fallthru
      _
    %2241 = vsyncpa [#allocation3], 1
    %2242 = vsyncpa [#allocation6], 1
    %2243 = vsyncpa [#allocation9], 1
    %2244 = vsyncpa [#allocation12], 1
    %2245 = vsyncpa [#allocation15], 1
    %2246 = vsyncpa [#allocation4], 1

</llo_original>
